<compile_context>
chip_gen: v6e
topology: v6e:2x2x1
jax: 0.10.0
libtpu: 0.0.40
codegen_flags: <defaults>
</compile_context>

<pallas_src>
import math

import jax
import jax.numpy as jnp
import numpy as np
from jax.experimental import pallas as pl
from jax.experimental.pallas import tpu as pltpu


# ----------------------------------------------------------------------------
# Small helpers
# ----------------------------------------------------------------------------
def _full_spec(a):
    return pl.BlockSpec(a.shape, lambda i: (0,) * a.ndim)


def _tensorcores_per_chip():
    """Rough generation check: 2 TCs on v7x (and v4 megacore), 1 on v5e/v6e."""
    try:
        kind = jax.devices()[0].device_kind.lower()
    except Exception:
        return 1
    return 2 if ("v7" in kind or "7x" in kind or "v4" in kind) else 1


# ----------------------------------------------------------------------------
# The single fused kernel
# ----------------------------------------------------------------------------
def _make_fused_kernel(cfg, BB):
    tlen = cfg["seq_len"]
    num_node = cfg["num_nodes"]
    mw = cfg["moving_window"]
    nw = tlen - mw + 1
    Nn = num_node * mw
    hid = cfg["hidden_dim"]
    TN = tlen * num_node
    Gb = BB * nw
    pool_mean = cfg["pool_choice"] == "mean"
    f32, bf16 = jnp.float32, jnp.bfloat16

    def kernel(x_ref, pe_ref,
               w1_ref, t1_ref, w2_ref, t2_ref, w3_ref, t3_ref, w4_ref, t4_ref,
               gw_ref, gb_ref, bns_ref, bnt_ref, dneg_ref, dmask_ref,
               tw_ref, tt_ref, hw1_ref, hb1_ref, hw2t_ref, hb2_ref,
               o_ref):
        # ---- stage 1: nonlin_map (3x Conv1d+bias+BN+ReLU as banded matmuls)
        #              + nonlin_map2 (Linear+BN) + positional encoding
        h = jnp.dot(x_ref[...].astype(bf16), w1_ref[...],
                    preferred_element_type=f32) + t1_ref[...]
        h = jnp.maximum(h, 0.0)
        h = jnp.dot(h.astype(bf16), w2_ref[...], preferred_element_type=f32) + t2_ref[...]
        h = jnp.maximum(h, 0.0)
        h = jnp.dot(h.astype(bf16), w3_ref[...], preferred_element_type=f32) + t3_ref[...]
        h = jnp.maximum(h, 0.0)
        feat = jnp.dot(h.astype(bf16), w4_ref[...], preferred_element_type=f32) + t4_ref[...]
        pe = pe_ref[...]                                   # (TN, D2), one row per (t, n)
        if BB > 1:
            pe = jnp.concatenate([pe] * BB, axis=0)
        feat = feat + pe                                   # (BB*TN, D2), rows (b, t, n)

        # ---- stage 2: moving windows = contiguous slices of the VMEM-resident features
        # node order inside a window = (in-window time, sensor), matching Conv_GraphST.
        parts = []
        for b in range(BB):
            for w in range(nw):
                s0 = b * TN + w * num_node
                parts.append(feat[s0:s0 + Nn, :])          # (Nn, D2)
        xg = jnp.concatenate(parts, axis=0)                # (Gb*Nn, D2)

        # ---- stage 3: GraphConvpoolMPNN_block_v6 core, batched over all windows
        D2 = xg.shape[1]
        xm = jnp.dot(xg.astype(bf16), gw_ref[...],
                     preferred_element_type=f32) + gb_ref[...]      # gmap Linear
        xbn = xg * bns_ref[...] + bnt_ref[...]                      # folded eval BN
        xm3 = xm.reshape(Gb, Nn, D2).astype(bf16)
        xbn3 = xbn.reshape(Gb, Nn, D2)

        s = jnp.einsum('gnd,gmd->gnm', xm3, xm3,
                       preferred_element_type=f32)                  # S = Xm Xm^T
        s = s + dneg_ref[...][None, :, :]                           # -1e8 on diagonal
        s = jnp.where(s > 0, s, 0.01 * s)                           # leaky_relu
        m = jnp.max(s, axis=-1, keepdims=True)
        e = jnp.exp(s - m)
        p = e * pl.reciprocal(jnp.sum(e, axis=-1, keepdims=True), approx=True)
        adj = p * dmask_ref[...][None, :, :]                        # decay mask
        # (P + I) * mask applied to X  ==  (P*mask) @ X + X  (mask diag == 1)
        ax = jnp.einsum('gnm,gmd->gnd', adj.astype(bf16), xbn3.astype(bf16),
                        preferred_element_type=f32) + xbn3

        hh = jnp.dot(ax.reshape(Gb * Nn, D2).astype(bf16), tw_ref[...],
                     preferred_element_type=f32) + tt_ref[...]      # theta + folded BN
        hh = jnp.where(hh > 0, hh, 0.01 * hh)                       # (Gb*Nn, hid)

        # ---- stage 4: temporal pooling over the in-window time axis
        h3 = hh.reshape(Gb, Nn, hid)
        pooled = h3[:, 0:num_node, :]
        for dt in range(1, mw):
            blk = h3[:, dt * num_node:(dt + 1) * num_node, :]
            if pool_mean:
                pooled = pooled + blk
            else:
                pooled = jnp.maximum(pooled, blk)
        if pool_mean:
            pooled = pooled * (1.0 / mw)                            # (Gb, num_node, hid)

        # ---- stage 5: all pred_len output heads; final (b, p, n) layout written directly
        zrows = []
        for b in range(BB):
            zrows.append(jnp.concatenate([pooled[b * nw + w] for w in range(nw)], axis=1))
        z = jnp.concatenate(zrows, axis=0)                          # (BB*num_node, nw*hid)
        hz = jnp.dot(z.astype(bf16), hw1_ref[...],
                     preferred_element_type=f32) + hb1_ref[...]
        hz = jnp.maximum(hz, 0.0)                                   # (BB*num_node, P*od)
        for b in range(BB):
            hb = hz[b * num_node:(b + 1) * num_node, :].astype(bf16)
            # (P, P*od) x (num_node, P*od)^T -> (P, num_node): no explicit transpose needed
            ob = jax.lax.dot_general(hw2t_ref[...], hb, (((1,), (1,)), ((), ())),
                                     preferred_element_type=f32)
            o_ref[b] = (ob + hb2_ref[...]).astype(o_ref.dtype)

    return kernel


# ----------------------------------------------------------------------------
# Parameter setup (PyTorch-equivalent random init, eval mode)
# ----------------------------------------------------------------------------
def init_params(key, cfg):
    keys = iter(jax.random.split(key, 128))

    def nrm(shape, s=0.1):
        return s * jax.random.normal(next(keys), shape, jnp.float32)

    def bn(n):  # eval-mode BatchNorm folded -> (scale, shift)
        gamma = 1.0 + 0.1 * jax.random.normal(next(keys), (n,), jnp.float32)
        beta = nrm((n,), 0.05)
        mean = nrm((n,), 0.05)
        var = 0.5 + jax.random.uniform(next(keys), (n,), jnp.float32)
        scale = gamma / jnp.sqrt(var + 1e-5)
        return scale, beta - mean * scale

    h1, co, k = cfg["cnn_hidden"], cfg["cnn_out"], cfg["conv_kernel"]
    hid = cfg["hidden_dim"]
    D2 = 2 * hid
    L3 = cfg["input_dim"] - k + 4                       # nonlin_map_conv_out
    nw = cfg["seq_len"] + 1 - cfg["moving_window"]      # history of output_layer

    p = {}
    p["conv1_w"], p["conv1_b"], p["bn1"] = nrm((h1, 1, k)), nrm((h1,), 0.05), bn(h1)
    p["conv2_w"], p["conv2_b"], p["bn2"] = nrm((2 * h1, h1, 3)), nrm((2 * h1,), 0.05), bn(2 * h1)
    p["conv3_w"], p["conv3_b"], p["bn3"] = nrm((co, 2 * h1, 2)), nrm((co,), 0.05), bn(co)
    p["fcmap_w"], p["fcmap_b"] = nrm((co * L3, D2)), nrm((D2,), 0.05)
    p["bnmap"] = bn(D2)
    p["gmap_w"], p["gmap_b"] = nrm((D2, D2)), nrm((D2,), 0.05)
    p["bnblk"] = bn(D2)
    p["theta_w"], p["theta_b"] = nrm((D2, hid)), nrm((hid,), 0.05)
    p["bnmpnn"] = bn(hid)
    p["out_fc1_w"] = [nrm((hid * nw, cfg["out_layer_dim"])) for _ in range(cfg["pred_len"])]
    p["out_fc1_b"] = [nrm((cfg["out_layer_dim"],), 0.05) for _ in range(cfg["pred_len"])]
    p["out_fc2_w"] = [nrm((cfg["out_layer_dim"], 1)) for _ in range(cfg["pred_len"])]
    p["out_fc2_b"] = [nrm((1,), 0.05) for _ in range(cfg["pred_len"])]
    return p


def _conv_as_matrix(w, pad, lin):
    """nn.Conv1d weight (cout, cin, k), stride 1 -> dense banded matrix acting on a
    channels-last flattened series: (lin*cin, lout*cout)."""
    w = np.asarray(jax.device_get(w), np.float32)
    cout, cin, k = w.shape
    lout = lin + 2 * pad - k + 1
    big = np.zeros((lin * cin, lout * cout), np.float32)
    for j in range(lout):
        for kk in range(k):
            l = j + kk - pad
            if 0 <= l < lin:
                big[l * cin:(l + 1) * cin, j * cout:(j + 1) * cout] = w[:, :, kk].T
    return big, lout


def positional_encoding_np(length, d_model):
    pos = np.arange(length, dtype=np.float32)[:, None]
    div = np.exp(np.arange(0, d_model, 2, dtype=np.float32)
                 * (-math.log(10000.0) / d_model))
    pe = np.zeros((length, d_model), np.float32)
    pe[:, 0::2] = np.sin(pos * div)
    pe[:, 1::2] = np.cos(pos * div)
    return pe


def fold_params(params, cfg):
    """Fold conv bias + eval BN into (bf16 W, f32 t) pairs, pad intermediate widths to
    lane multiples, precompute decay/self-loop masks and head weights."""
    co = cfg["cnn_out"]
    hid = cfg["hidden_dim"]
    D2 = 2 * hid
    num_node = cfg["num_nodes"]
    mw = cfg["moving_window"]
    Nn = num_node * mw
    f = {}

    def g(a):
        return np.asarray(jax.device_get(a), np.float32)

    def fold_conv(wname, bname, bn, pad, lin, rows_to):
        big, lout = _conv_as_matrix(params[wname], pad, lin)
        s, t = g(bn[0]), g(bn[1])
        b = g(params[bname])
        wf = big * np.tile(s, lout)[None, :]
        tf = np.tile(b * s + t, lout)
        if rows_to > wf.shape[0]:                     # zero rows for padded input lanes
            wf = np.pad(wf, ((0, rows_to - wf.shape[0]), (0, 0)))
        real = wf.shape[1]
        padded = -(-real // 128) * 128                # lane-multiple output width
        if padded > real:
            wf = np.pad(wf, ((0, 0), (0, padded - real)))
            tf = np.pad(tf, (0, padded - real))
        return (jnp.asarray(wf, jnp.bfloat16),
                jnp.asarray(tf[None, :], jnp.float32), lout, padded)

    f["w1"], f["t1"], l1, p1 = fold_conv("conv1_w", "conv1_b", params["bn1"], 0,
                                         cfg["input_dim"], cfg["input_dim"])
    f["w2"], f["t2"], l2, p2 = fold_conv("conv2_w", "conv2_b", params["bn2"], 2, l1, p1)
    f["w3"], f["t3"], l3, p3 = fold_conv("conv3_w", "conv3_b", params["bn3"], 1, l2, p2)

    # nonlin_map2: permute Linear rows from the NCL (channel-major) flatten to our
    # length-major conv layout, fold bias + BN, pad rows to the padded conv3 width.
    w4 = g(params["fcmap_w"])
    perm = np.array([c * l3 + l for l in range(l3) for c in range(co)])
    w4 = w4[perm]
    s4, sh4 = g(params["bnmap"][0]), g(params["bnmap"][1])
    b4 = g(params["fcmap_b"])
    w4 = w4 * s4[None, :]
    if p3 > w4.shape[0]:
        w4 = np.pad(w4, ((0, p3 - w4.shape[0]), (0, 0)))
    f["w4"] = jnp.asarray(w4, jnp.bfloat16)
    f["t4"] = jnp.asarray((b4 * s4 + sh4)[None, :], jnp.float32)

    # positional encoding expanded to one row per (t, n) feature row (per batch element)
    pe = positional_encoding_np(cfg["seq_len"], D2)
    f["pe"] = jnp.asarray(np.repeat(pe, num_node, axis=0), jnp.float32)   # (tlen*N, D2)

    # graph block constants: decay mask + (-1e8 I) self-loop mask, node order (time, sensor)
    dt = np.arange(Nn) // num_node
    f["decay_mask"] = jnp.asarray(
        cfg["decay"] ** np.abs(dt[:, None] - dt[None, :]).astype(np.float32), jnp.float32)
    f["diag_neg"] = jnp.asarray(-1e8 * np.eye(Nn, dtype=np.float32), jnp.float32)
    f["gmap_w"] = params["gmap_w"].astype(jnp.bfloat16)
    f["gmap_b"] = params["gmap_b"].reshape(1, D2).astype(jnp.float32)
    f["bnblk_s"] = params["bnblk"][0].reshape(1, D2).astype(jnp.float32)
    f["bnblk_t"] = params["bnblk"][1].reshape(1, D2).astype(jnp.float32)
    st, tt = params["bnmpnn"]
    f["theta_w"] = (params["theta_w"] * st[None, :]).astype(jnp.bfloat16)
    f["theta_t"] = (params["theta_b"] * st + tt).reshape(1, hid).astype(jnp.float32)

    # output heads: fc1 concatenated along N (lane-dense), fc2 block-diagonal (transposed)
    od, P = cfg["out_layer_dim"], cfg["pred_len"]
    f["head_w1"] = jnp.concatenate(params["out_fc1_w"], axis=1).astype(jnp.bfloat16)
    f["head_b1"] = jnp.concatenate(params["out_fc1_b"], axis=0).reshape(1, -1).astype(jnp.float32)
    w2bd = np.zeros((P * od, P), np.float32)
    for t_ in range(P):
        w2bd[t_ * od:(t_ + 1) * od, t_] = g(params["out_fc2_w"][t_])[:, 0]
    f["head_w2t"] = jnp.asarray(w2bd.T, jnp.bfloat16)                      # (P, P*od)
    f["head_b2"] = jnp.asarray(
        np.concatenate([g(b) for b in params["out_fc2_b"]])[:, None], jnp.float32)  # (P, 1)
    return f


# ----------------------------------------------------------------------------
# Forward builder (mirrors Model.forward, eval mode) — one pallas_call
# ----------------------------------------------------------------------------
def make_fcstgnn_forward(folded, cfg, bs):
    tlen, num_node, dim = cfg["seq_len"], cfg["num_nodes"], cfg["input_dim"]
    P = cfg["pred_len"]
    TN = tlen * num_node

    # Generation-aware grid: 2-way batch split only on multi-TensorCore chips.
    nsteps = 1
    if (_tensorcores_per_chip() >= 2 and bs >= 2 and bs % 2 == 0
            and ((bs // 2) * TN) % 8 == 0):
        nsteps = 2
    BB = bs // nsteps

    kernel = _make_fused_kernel(cfg, BB)

    wkeys = ["pe", "w1", "t1", "w2", "t2", "w3", "t3", "w4", "t4",
             "gmap_w", "gmap_b", "bnblk_s", "bnblk_t", "diag_neg", "decay_mask",
             "theta_w", "theta_t", "head_w1", "head_b1", "head_w2t", "head_b2"]
    weights = [folded[k] for k in wkeys]

    call = pl.pallas_call(
        kernel,
        out_shape=jax.ShapeDtypeStruct((bs, P, num_node), jnp.float32),
        grid=(nsteps,),
        in_specs=[pl.BlockSpec((BB * TN, dim), lambda i: (i, 0))]
                 + [_full_spec(w) for w in weights],
        out_specs=pl.BlockSpec((BB, P, num_node), lambda i: (i, 0, 0)),
        compiler_params=pltpu.CompilerParams(dimension_semantics=("parallel",)),
    )

    def forward(X):
        x2d = X.reshape(bs * TN, dim).astype(jnp.float32)   # rows ordered (b, t, n)
        o = call(x2d, *weights)                             # (bs, pred_len, num_node)
        return o.reshape(bs, P, num_node, 1)

    return jax.jit(forward)


if __name__ == "__main__":
    cfg = dict(
        pred_len=4, seq_len=8, num_nodes=4, input_dim=16,
        conv_kernel=3, cnn_hidden=8, cnn_out=8,
        hidden_dim=16, moving_window=4, decay=0.7,
        pool_choice="mean", out_layer_dim=32,
    )
    bs = 2
    params = init_params(jax.random.PRNGKey(42), cfg)
    folded = fold_params(params, cfg)
    X = jax.random.normal(jax.random.PRNGKey(0),
                          (bs, cfg["seq_len"], cfg["num_nodes"], cfg["input_dim"]),
                          jnp.float32)
    # x_mark_enc / x_dec / x_mark_dec are unused by the PyTorch forward pass.

    fwd = make_fcstgnn_forward(folded, cfg, bs)
    out = jax.block_until_ready(fwd(X))
    assert out.shape == (bs, cfg["pred_len"], cfg["num_nodes"], 1), out.shape
    assert bool(jnp.all(jnp.isfinite(out)))
    print("KERNEL_OK")
</pallas_src>

<mosaic_0001>
module attributes {stable_mosaic.version = 11 : i64} {
  func.func @kernel(%arg0: i32, %arg1: memref<64x16xf32, #tpu.memory_space<vmem>>, %arg2: memref<32x32xf32, #tpu.memory_space<vmem>>, %arg3: memref<16x128xbf16, #tpu.memory_space<vmem>>, %arg4: memref<1x128xf32, #tpu.memory_space<vmem>>, %arg5: memref<128x256xbf16, #tpu.memory_space<vmem>>, %arg6: memref<1x256xf32, #tpu.memory_space<vmem>>, %arg7: memref<256x256xbf16, #tpu.memory_space<vmem>>, %arg8: memref<1x256xf32, #tpu.memory_space<vmem>>, %arg9: memref<256x32xbf16, #tpu.memory_space<vmem>>, %arg10: memref<1x32xf32, #tpu.memory_space<vmem>>, %arg11: memref<32x32xbf16, #tpu.memory_space<vmem>>, %arg12: memref<1x32xf32, #tpu.memory_space<vmem>>, %arg13: memref<1x32xf32, #tpu.memory_space<vmem>>, %arg14: memref<1x32xf32, #tpu.memory_space<vmem>>, %arg15: memref<16x16xf32, #tpu.memory_space<vmem>>, %arg16: memref<16x16xf32, #tpu.memory_space<vmem>>, %arg17: memref<32x16xbf16, #tpu.memory_space<vmem>>, %arg18: memref<1x16xf32, #tpu.memory_space<vmem>>, %arg19: memref<80x128xbf16, #tpu.memory_space<vmem>>, %arg20: memref<1x128xf32, #tpu.memory_space<vmem>>, %arg21: memref<4x128xbf16, #tpu.memory_space<vmem>>, %arg22: memref<4x1xf32, #tpu.memory_space<vmem>>, %arg23: memref<2x4x4xf32, #tpu.memory_space<vmem>>) attributes {dimension_semantics = [#tpu.dimension_semantics<parallel>], iteration_bounds = array<i64: 1>, scalar_prefetch = 0 : i64, scratch_operands = 0 : i64, tpu.core_type = #tpu.core_type<tc>, window_params = [{transform_indices = @transform_0, window_bounds = array<i64: 64, 16>}, {pipeline_mode = #tpu.pipeline_mode<synchronous>, transform_indices = @transform_1, window_bounds = array<i64: 32, 32>}, {pipeline_mode = #tpu.pipeline_mode<synchronous>, transform_indices = @transform_2, window_bounds = array<i64: 16, 128>}, {pipeline_mode = #tpu.pipeline_mode<synchronous>, transform_indices = @transform_3, window_bounds = array<i64: 1, 128>}, {pipeline_mode = #tpu.pipeline_mode<synchronous>, transform_indices = @transform_4, window_bounds = array<i64: 128, 256>}, {pipeline_mode = #tpu.pipeline_mode<synchronous>, transform_indices = @transform_5, window_bounds = array<i64: 1, 256>}, {pipeline_mode = #tpu.pipeline_mode<synchronous>, transform_indices = @transform_6, window_bounds = array<i64: 256, 256>}, {pipeline_mode = #tpu.pipeline_mode<synchronous>, transform_indices = @transform_7, window_bounds = array<i64: 1, 256>}, {pipeline_mode = #tpu.pipeline_mode<synchronous>, transform_indices = @transform_8, window_bounds = array<i64: 256, 32>}, {pipeline_mode = #tpu.pipeline_mode<synchronous>, transform_indices = @transform_9, window_bounds = array<i64: 1, 32>}, {pipeline_mode = #tpu.pipeline_mode<synchronous>, transform_indices = @transform_10, window_bounds = array<i64: 32, 32>}, {pipeline_mode = #tpu.pipeline_mode<synchronous>, transform_indices = @transform_11, window_bounds = array<i64: 1, 32>}, {pipeline_mode = #tpu.pipeline_mode<synchronous>, transform_indices = @transform_12, window_bounds = array<i64: 1, 32>}, {pipeline_mode = #tpu.pipeline_mode<synchronous>, transform_indices = @transform_13, window_bounds = array<i64: 1, 32>}, {pipeline_mode = #tpu.pipeline_mode<synchronous>, transform_indices = @transform_14, window_bounds = array<i64: 16, 16>}, {pipeline_mode = #tpu.pipeline_mode<synchronous>, transform_indices = @transform_15, window_bounds = array<i64: 16, 16>}, {pipeline_mode = #tpu.pipeline_mode<synchronous>, transform_indices = @transform_16, window_bounds = array<i64: 32, 16>}, {pipeline_mode = #tpu.pipeline_mode<synchronous>, transform_indices = @transform_17, window_bounds = array<i64: 1, 16>}, {pipeline_mode = #tpu.pipeline_mode<synchronous>, transform_indices = @transform_18, window_bounds = array<i64: 80, 128>}, {pipeline_mode = #tpu.pipeline_mode<synchronous>, transform_indices = @transform_19, window_bounds = array<i64: 1, 128>}, {pipeline_mode = #tpu.pipeline_mode<synchronous>, transform_indices = @transform_20, window_bounds = array<i64: 4, 128>}, {pipeline_mode = #tpu.pipeline_mode<synchronous>, transform_indices = @transform_21, window_bounds = array<i64: 4, 1>}, {transform_indices = @transform_22, window_bounds = array<i64: 2, 4, 4>}]} {
    %c0 = arith.constant 0 : index
    %c0_0 = arith.constant 0 : index
    %0 = vector.load %arg1[%c0, %c0_0] : memref<64x16xf32, #tpu.memory_space<vmem>>, vector<64x16xf32>
    %1 = arith.truncf %0 : vector<64x16xf32> to vector<64x16xbf16>
    %c0_1 = arith.constant 0 : index
    %c0_2 = arith.constant 0 : index
    %2 = vector.load %arg3[%c0_1, %c0_2] : memref<16x128xbf16, #tpu.memory_space<vmem>>, vector<16x128xbf16>
    %cst = arith.constant dense<0.000000e+00> : vector<64x128xf32>
    %3 = tpu.matmul %1, %2, %cst {dimension_numbers = #tpu.dot_dimension_numbers<[1], [0], [0], [1], [0, 0, 1, 1], [], []>} : vector<64x16xbf16>, vector<16x128xbf16>, vector<64x128xf32> -> vector<64x128xf32>
    %c0_3 = arith.constant 0 : index
    %c0_4 = arith.constant 0 : index
    %4 = vector.load %arg4[%c0_3, %c0_4] : memref<1x128xf32, #tpu.memory_space<vmem>>, vector<1x128xf32>
    %5 = vector.broadcast %4 : vector<1x128xf32> to vector<64x128xf32>
    %6 = arith.addf %3, %5 : vector<64x128xf32>
    %cst_5 = arith.constant 0.000000e+00 : f32
    %7 = vector.broadcast %cst_5 : f32 to vector<64x128xf32>
    %8 = arith.maximumf %6, %7 : vector<64x128xf32>
    %9 = arith.truncf %8 : vector<64x128xf32> to vector<64x128xbf16>
    %c0_6 = arith.constant 0 : index
    %c0_7 = arith.constant 0 : index
    %10 = vector.load %arg5[%c0_6, %c0_7] : memref<128x256xbf16, #tpu.memory_space<vmem>>, vector<128x256xbf16>
    %cst_8 = arith.constant dense<0.000000e+00> : vector<64x256xf32>
    %11 = tpu.matmul %9, %10, %cst_8 {dimension_numbers = #tpu.dot_dimension_numbers<[1], [0], [0], [1], [0, 0, 1, 1], [], []>} : vector<64x128xbf16>, vector<128x256xbf16>, vector<64x256xf32> -> vector<64x256xf32>
    %c0_9 = arith.constant 0 : index
    %c0_10 = arith.constant 0 : index
    %12 = vector.load %arg6[%c0_9, %c0_10] : memref<1x256xf32, #tpu.memory_space<vmem>>, vector<1x256xf32>
    %13 = vector.broadcast %12 : vector<1x256xf32> to vector<64x256xf32>
    %14 = arith.addf %11, %13 : vector<64x256xf32>
    %cst_11 = arith.constant 0.000000e+00 : f32
    %15 = vector.broadcast %cst_11 : f32 to vector<64x256xf32>
    %16 = arith.maximumf %14, %15 : vector<64x256xf32>
    %17 = arith.truncf %16 : vector<64x256xf32> to vector<64x256xbf16>
    %c0_12 = arith.constant 0 : index
    %c0_13 = arith.constant 0 : index
    %18 = vector.load %arg7[%c0_12, %c0_13] : memref<256x256xbf16, #tpu.memory_space<vmem>>, vector<256x256xbf16>
    %cst_14 = arith.constant dense<0.000000e+00> : vector<64x256xf32>
    %19 = tpu.matmul %17, %18, %cst_14 {dimension_numbers = #tpu.dot_dimension_numbers<[1], [0], [0], [1], [0, 0, 1, 1], [], []>} : vector<64x256xbf16>, vector<256x256xbf16>, vector<64x256xf32> -> vector<64x256xf32>
    %c0_15 = arith.constant 0 : index
    %c0_16 = arith.constant 0 : index
    %20 = vector.load %arg8[%c0_15, %c0_16] : memref<1x256xf32, #tpu.memory_space<vmem>>, vector<1x256xf32>
    %21 = vector.broadcast %20 : vector<1x256xf32> to vector<64x256xf32>
    %22 = arith.addf %19, %21 : vector<64x256xf32>
    %cst_17 = arith.constant 0.000000e+00 : f32
    %23 = vector.broadcast %cst_17 : f32 to vector<64x256xf32>
    %24 = arith.maximumf %22, %23 : vector<64x256xf32>
    %25 = arith.truncf %24 : vector<64x256xf32> to vector<64x256xbf16>
    %c0_18 = arith.constant 0 : index
    %c0_19 = arith.constant 0 : index
    %26 = vector.load %arg9[%c0_18, %c0_19] : memref<256x32xbf16, #tpu.memory_space<vmem>>, vector<256x32xbf16>
    %cst_20 = arith.constant dense<0.000000e+00> : vector<64x32xf32>
    %27 = tpu.matmul %25, %26, %cst_20 {dimension_numbers = #tpu.dot_dimension_numbers<[1], [0], [0], [1], [0, 0, 1, 1], [], []>} : vector<64x256xbf16>, vector<256x32xbf16>, vector<64x32xf32> -> vector<64x32xf32>
    %c0_21 = arith.constant 0 : index
    %c0_22 = arith.constant 0 : index
    %28 = vector.load %arg10[%c0_21, %c0_22] : memref<1x32xf32, #tpu.memory_space<vmem>>, vector<1x32xf32>
    %29 = vector.broadcast %28 : vector<1x32xf32> to vector<64x32xf32>
    %30 = arith.addf %27, %29 : vector<64x32xf32>
    %c0_23 = arith.constant 0 : index
    %c0_24 = arith.constant 0 : index
    %31 = vector.load %arg2[%c0_23, %c0_24] : memref<32x32xf32, #tpu.memory_space<vmem>>, vector<32x32xf32>
    %32 = tpu.concatenate %31, %31 in 0 : vector<32x32xf32>, vector<32x32xf32> -> vector<64x32xf32>
    %33 = arith.addf %30, %32 : vector<64x32xf32>
    %34 = vector.extract_strided_slice %33 {offsets = [0, 0], sizes = [16, 32], strides = [1, 1]} : vector<64x32xf32> to vector<16x32xf32>
    %35 = vector.extract_strided_slice %33 {offsets = [4, 0], sizes = [16, 32], strides = [1, 1]} : vector<64x32xf32> to vector<16x32xf32>
    %36 = vector.extract_strided_slice %33 {offsets = [8, 0], sizes = [16, 32], strides = [1, 1]} : vector<64x32xf32> to vector<16x32xf32>
    %37 = vector.extract_strided_slice %33 {offsets = [12, 0], sizes = [16, 32], strides = [1, 1]} : vector<64x32xf32> to vector<16x32xf32>
    %38 = vector.extract_strided_slice %33 {offsets = [16, 0], sizes = [16, 32], strides = [1, 1]} : vector<64x32xf32> to vector<16x32xf32>
    %39 = vector.extract_strided_slice %33 {offsets = [32, 0], sizes = [16, 32], strides = [1, 1]} : vector<64x32xf32> to vector<16x32xf32>
    %40 = vector.extract_strided_slice %33 {offsets = [36, 0], sizes = [16, 32], strides = [1, 1]} : vector<64x32xf32> to vector<16x32xf32>
    %41 = vector.extract_strided_slice %33 {offsets = [40, 0], sizes = [16, 32], strides = [1, 1]} : vector<64x32xf32> to vector<16x32xf32>
    %42 = vector.extract_strided_slice %33 {offsets = [44, 0], sizes = [16, 32], strides = [1, 1]} : vector<64x32xf32> to vector<16x32xf32>
    %43 = vector.extract_strided_slice %33 {offsets = [48, 0], sizes = [16, 32], strides = [1, 1]} : vector<64x32xf32> to vector<16x32xf32>
    %44 = tpu.concatenate %34, %35, %36, %37, %38, %39, %40, %41, %42, %43 in 0 : vector<16x32xf32>, vector<16x32xf32>, vector<16x32xf32>, vector<16x32xf32>, vector<16x32xf32>, vector<16x32xf32>, vector<16x32xf32>, vector<16x32xf32>, vector<16x32xf32>, vector<16x32xf32> -> vector<160x32xf32>
    %45 = arith.truncf %44 : vector<160x32xf32> to vector<160x32xbf16>
    %c0_25 = arith.constant 0 : index
    %c0_26 = arith.constant 0 : index
    %46 = vector.load %arg11[%c0_25, %c0_26] : memref<32x32xbf16, #tpu.memory_space<vmem>>, vector<32x32xbf16>
    %cst_27 = arith.constant dense<0.000000e+00> : vector<160x32xf32>
    %47 = tpu.matmul %45, %46, %cst_27 {dimension_numbers = #tpu.dot_dimension_numbers<[1], [0], [0], [1], [0, 0, 1, 1], [], []>} : vector<160x32xbf16>, vector<32x32xbf16>, vector<160x32xf32> -> vector<160x32xf32>
    %c0_28 = arith.constant 0 : index
    %c0_29 = arith.constant 0 : index
    %48 = vector.load %arg12[%c0_28, %c0_29] : memref<1x32xf32, #tpu.memory_space<vmem>>, vector<1x32xf32>
    %49 = vector.broadcast %48 : vector<1x32xf32> to vector<160x32xf32>
    %50 = arith.addf %47, %49 : vector<160x32xf32>
    %c0_30 = arith.constant 0 : index
    %c0_31 = arith.constant 0 : index
    %51 = vector.load %arg13[%c0_30, %c0_31] : memref<1x32xf32, #tpu.memory_space<vmem>>, vector<1x32xf32>
    %52 = vector.broadcast %51 : vector<1x32xf32> to vector<160x32xf32>
    %53 = arith.mulf %44, %52 : vector<160x32xf32>
    %c0_32 = arith.constant 0 : index
    %c0_33 = arith.constant 0 : index
    %54 = vector.load %arg14[%c0_32, %c0_33] : memref<1x32xf32, #tpu.memory_space<vmem>>, vector<1x32xf32>
    %55 = vector.broadcast %54 : vector<1x32xf32> to vector<160x32xf32>
    %56 = arith.addf %53, %55 : vector<160x32xf32>
    %57 = vector.shape_cast %50 : vector<160x32xf32> to vector<10x16x32xf32>
    %58 = arith.truncf %57 : vector<10x16x32xf32> to vector<10x16x32xbf16>
    %59 = vector.shape_cast %56 : vector<160x32xf32> to vector<10x16x32xf32>
    "tpu.trace_start"() <{level = 10 : i32, message = "gnd,gmd->gnm"}> : () -> ()
    %cst_34 = arith.constant dense<0.000000e+00> : vector<10x16x16xf32>
    %60 = tpu.matmul %58, %58, %cst_34 {dimension_numbers = #tpu.dot_dimension_numbers<[2], [2], [1], [1], [0, 0, 0, 1, 1, 1], [0], [0]>} : vector<10x16x32xbf16>, vector<10x16x32xbf16>, vector<10x16x16xf32> -> vector<10x16x16xf32>
    "tpu.trace_stop"() : () -> ()
    %c0_35 = arith.constant 0 : index
    %c0_36 = arith.constant 0 : index
    %61 = vector.load %arg15[%c0_35, %c0_36] : memref<16x16xf32, #tpu.memory_space<vmem>>, vector<16x16xf32>
    %62 = vector.shape_cast %61 : vector<16x16xf32> to vector<1x16x16xf32>
    %63 = vector.broadcast %62 : vector<1x16x16xf32> to vector<10x16x16xf32>
    %64 = arith.addf %60, %63 : vector<10x16x16xf32>
    %cst_37 = arith.constant 0.000000e+00 : f32
    %65 = vector.broadcast %cst_37 : f32 to vector<10x16x16xf32>
    %66 = arith.cmpf ogt, %64, %65 : vector<10x16x16xf32>
    %cst_38 = arith.constant 0.00999999977 : f32
    %67 = vector.broadcast %cst_38 : f32 to vector<10x16x16xf32>
    %68 = arith.mulf %67, %64 : vector<10x16x16xf32>
    %69 = arith.select %66, %64, %68 : vector<10x16x16xi1>, vector<10x16x16xf32>
    %cst_39 = arith.constant dense<0xFF800000> : vector<10x16xf32>
    %70 = vector.multi_reduction <maximumf>, %69, %cst_39 [2] : vector<10x16x16xf32> to vector<10x16xf32>
    %71 = vector.shape_cast %70 : vector<10x16xf32> to vector<10x16x1xf32>
    %72 = vector.broadcast %71 : vector<10x16x1xf32> to vector<10x16x16xf32>
    %73 = arith.subf %69, %72 : vector<10x16x16xf32>
    %74 = math.exp %73 : vector<10x16x16xf32>
    %cst_40 = arith.constant dense<0.000000e+00> : vector<10x16xf32>
    %75 = vector.multi_reduction <add>, %74, %cst_40 [2] : vector<10x16x16xf32> to vector<10x16xf32>
    %76 = vector.shape_cast %75 : vector<10x16xf32> to vector<10x16x1xf32>
    %77 = tpu.reciprocal %76 {approx = true} : vector<10x16x1xf32> -> vector<10x16x1xf32>
    %78 = vector.broadcast %77 : vector<10x16x1xf32> to vector<10x16x16xf32>
    %79 = arith.mulf %74, %78 : vector<10x16x16xf32>
    %c0_41 = arith.constant 0 : index
    %c0_42 = arith.constant 0 : index
    %80 = vector.load %arg16[%c0_41, %c0_42] : memref<16x16xf32, #tpu.memory_space<vmem>>, vector<16x16xf32>
    %81 = vector.shape_cast %80 : vector<16x16xf32> to vector<1x16x16xf32>
    %82 = vector.broadcast %81 : vector<1x16x16xf32> to vector<10x16x16xf32>
    %83 = arith.mulf %79, %82 : vector<10x16x16xf32>
    %84 = arith.truncf %83 : vector<10x16x16xf32> to vector<10x16x16xbf16>
    %85 = arith.truncf %59 : vector<10x16x32xf32> to vector<10x16x32xbf16>
    "tpu.trace_start"() <{level = 10 : i32, message = "gnm,gmd->gnd"}> : () -> ()
    %cst_43 = arith.constant dense<0.000000e+00> : vector<10x16x32xf32>
    %86 = tpu.matmul %84, %85, %cst_43 {dimension_numbers = #tpu.dot_dimension_numbers<[2], [1], [1], [2], [0, 0, 0, 1, 1, 2], [0], [0]>} : vector<10x16x16xbf16>, vector<10x16x32xbf16>, vector<10x16x32xf32> -> vector<10x16x32xf32>
    "tpu.trace_stop"() : () -> ()
    %87 = arith.addf %86, %59 : vector<10x16x32xf32>
    %88 = vector.shape_cast %87 : vector<10x16x32xf32> to vector<160x32xf32>
    %89 = arith.truncf %88 : vector<160x32xf32> to vector<160x32xbf16>
    %c0_44 = arith.constant 0 : index
    %c0_45 = arith.constant 0 : index
    %90 = vector.load %arg17[%c0_44, %c0_45] : memref<32x16xbf16, #tpu.memory_space<vmem>>, vector<32x16xbf16>
    %cst_46 = arith.constant dense<0.000000e+00> : vector<160x16xf32>
    %91 = tpu.matmul %89, %90, %cst_46 {dimension_numbers = #tpu.dot_dimension_numbers<[1], [0], [0], [1], [0, 0, 1, 1], [], []>} : vector<160x32xbf16>, vector<32x16xbf16>, vector<160x16xf32> -> vector<160x16xf32>
    %c0_47 = arith.constant 0 : index
    %c0_48 = arith.constant 0 : index
    %92 = vector.load %arg18[%c0_47, %c0_48] : memref<1x16xf32, #tpu.memory_space<vmem>>, vector<1x16xf32>
    %93 = vector.broadcast %92 : vector<1x16xf32> to vector<160x16xf32>
    %94 = arith.addf %91, %93 : vector<160x16xf32>
    %cst_49 = arith.constant 0.000000e+00 : f32
    %95 = vector.broadcast %cst_49 : f32 to vector<160x16xf32>
    %96 = arith.cmpf ogt, %94, %95 : vector<160x16xf32>
    %cst_50 = arith.constant 0.00999999977 : f32
    %97 = vector.broadcast %cst_50 : f32 to vector<160x16xf32>
    %98 = arith.mulf %97, %94 : vector<160x16xf32>
    %99 = arith.select %96, %94, %98 : vector<160x16xi1>, vector<160x16xf32>
    %100 = vector.shape_cast %99 : vector<160x16xf32> to vector<10x16x16xf32>
    %101 = vector.extract_strided_slice %100 {offsets = [0, 0, 0], sizes = [10, 4, 16], strides = [1, 1, 1]} : vector<10x16x16xf32> to vector<10x4x16xf32>
    %102 = vector.extract_strided_slice %100 {offsets = [0, 4, 0], sizes = [10, 4, 16], strides = [1, 1, 1]} : vector<10x16x16xf32> to vector<10x4x16xf32>
    %103 = arith.addf %101, %102 : vector<10x4x16xf32>
    %104 = vector.extract_strided_slice %100 {offsets = [0, 8, 0], sizes = [10, 4, 16], strides = [1, 1, 1]} : vector<10x16x16xf32> to vector<10x4x16xf32>
    %105 = arith.addf %103, %104 : vector<10x4x16xf32>
    %106 = vector.extract_strided_slice %100 {offsets = [0, 12, 0], sizes = [10, 4, 16], strides = [1, 1, 1]} : vector<10x16x16xf32> to vector<10x4x16xf32>
    %107 = arith.addf %105, %106 : vector<10x4x16xf32>
    %cst_51 = arith.constant 2.500000e-01 : f32
    %108 = vector.broadcast %cst_51 : f32 to vector<10x4x16xf32>
    %109 = arith.mulf %107, %108 : vector<10x4x16xf32>
    %110 = vector.extract_strided_slice %109 {offsets = [0, 0, 0], sizes = [1, 4, 16], strides = [1, 1, 1]} : vector<10x4x16xf32> to vector<1x4x16xf32>
    %111 = vector.shape_cast %110 : vector<1x4x16xf32> to vector<4x16xf32>
    %112 = vector.extract_strided_slice %109 {offsets = [1, 0, 0], sizes = [1, 4, 16], strides = [1, 1, 1]} : vector<10x4x16xf32> to vector<1x4x16xf32>
    %113 = vector.shape_cast %112 : vector<1x4x16xf32> to vector<4x16xf32>
    %114 = vector.extract_strided_slice %109 {offsets = [2, 0, 0], sizes = [1, 4, 16], strides = [1, 1, 1]} : vector<10x4x16xf32> to vector<1x4x16xf32>
    %115 = vector.shape_cast %114 : vector<1x4x16xf32> to vector<4x16xf32>
    %116 = vector.extract_strided_slice %109 {offsets = [3, 0, 0], sizes = [1, 4, 16], strides = [1, 1, 1]} : vector<10x4x16xf32> to vector<1x4x16xf32>
    %117 = vector.shape_cast %116 : vector<1x4x16xf32> to vector<4x16xf32>
    %118 = vector.extract_strided_slice %109 {offsets = [4, 0, 0], sizes = [1, 4, 16], strides = [1, 1, 1]} : vector<10x4x16xf32> to vector<1x4x16xf32>
    %119 = vector.shape_cast %118 : vector<1x4x16xf32> to vector<4x16xf32>
    %120 = tpu.concatenate %111, %113, %115, %117, %119 in 1 : vector<4x16xf32>, vector<4x16xf32>, vector<4x16xf32>, vector<4x16xf32>, vector<4x16xf32> -> vector<4x80xf32>
    %121 = vector.extract_strided_slice %109 {offsets = [5, 0, 0], sizes = [1, 4, 16], strides = [1, 1, 1]} : vector<10x4x16xf32> to vector<1x4x16xf32>
    %122 = vector.shape_cast %121 : vector<1x4x16xf32> to vector<4x16xf32>
    %123 = vector.extract_strided_slice %109 {offsets = [6, 0, 0], sizes = [1, 4, 16], strides = [1, 1, 1]} : vector<10x4x16xf32> to vector<1x4x16xf32>
    %124 = vector.shape_cast %123 : vector<1x4x16xf32> to vector<4x16xf32>
    %125 = vector.extract_strided_slice %109 {offsets = [7, 0, 0], sizes = [1, 4, 16], strides = [1, 1, 1]} : vector<10x4x16xf32> to vector<1x4x16xf32>
    %126 = vector.shape_cast %125 : vector<1x4x16xf32> to vector<4x16xf32>
    %127 = vector.extract_strided_slice %109 {offsets = [8, 0, 0], sizes = [1, 4, 16], strides = [1, 1, 1]} : vector<10x4x16xf32> to vector<1x4x16xf32>
    %128 = vector.shape_cast %127 : vector<1x4x16xf32> to vector<4x16xf32>
    %129 = vector.extract_strided_slice %109 {offsets = [9, 0, 0], sizes = [1, 4, 16], strides = [1, 1, 1]} : vector<10x4x16xf32> to vector<1x4x16xf32>
    %130 = vector.shape_cast %129 : vector<1x4x16xf32> to vector<4x16xf32>
    %131 = tpu.concatenate %122, %124, %126, %128, %130 in 1 : vector<4x16xf32>, vector<4x16xf32>, vector<4x16xf32>, vector<4x16xf32>, vector<4x16xf32> -> vector<4x80xf32>
    %132 = tpu.concatenate %120, %131 in 0 : vector<4x80xf32>, vector<4x80xf32> -> vector<8x80xf32>
    %133 = arith.truncf %132 : vector<8x80xf32> to vector<8x80xbf16>
    %c0_52 = arith.constant 0 : index
    %c0_53 = arith.constant 0 : index
    %134 = vector.load %arg19[%c0_52, %c0_53] : memref<80x128xbf16, #tpu.memory_space<vmem>>, vector<80x128xbf16>
    %cst_54 = arith.constant dense<0.000000e+00> : vector<8x128xf32>
    %135 = tpu.matmul %133, %134, %cst_54 {dimension_numbers = #tpu.dot_dimension_numbers<[1], [0], [0], [1], [0, 0, 1, 1], [], []>} : vector<8x80xbf16>, vector<80x128xbf16>, vector<8x128xf32> -> vector<8x128xf32>
    %c0_55 = arith.constant 0 : index
    %c0_56 = arith.constant 0 : index
    %136 = vector.load %arg20[%c0_55, %c0_56] : memref<1x128xf32, #tpu.memory_space<vmem>>, vector<1x128xf32>
    %137 = vector.broadcast %136 : vector<1x128xf32> to vector<8x128xf32>
    %138 = arith.addf %135, %137 : vector<8x128xf32>
    %cst_57 = arith.constant 0.000000e+00 : f32
    %139 = vector.broadcast %cst_57 : f32 to vector<8x128xf32>
    %140 = arith.maximumf %138, %139 : vector<8x128xf32>
    %141 = vector.extract_strided_slice %140 {offsets = [0, 0], sizes = [4, 128], strides = [1, 1]} : vector<8x128xf32> to vector<4x128xf32>
    %142 = arith.truncf %141 : vector<4x128xf32> to vector<4x128xbf16>
    %c0_58 = arith.constant 0 : index
    %c0_59 = arith.constant 0 : index
    %143 = vector.load %arg21[%c0_58, %c0_59] : memref<4x128xbf16, #tpu.memory_space<vmem>>, vector<4x128xbf16>
    %cst_60 = arith.constant dense<0.000000e+00> : vector<4x4xf32>
    %144 = tpu.matmul %143, %142, %cst_60 {dimension_numbers = #tpu.dot_dimension_numbers<[1], [1], [0], [0], [0, 0, 1, 0], [], []>} : vector<4x128xbf16>, vector<4x128xbf16>, vector<4x4xf32> -> vector<4x4xf32>
    %c0_61 = arith.constant 0 : index
    %c0_62 = arith.constant 0 : index
    %145 = vector.load %arg22[%c0_61, %c0_62] : memref<4x1xf32, #tpu.memory_space<vmem>>, vector<4x1xf32>
    %146 = vector.broadcast %145 : vector<4x1xf32> to vector<4x4xf32>
    %147 = arith.addf %144, %146 : vector<4x4xf32>
    %c0_63 = arith.constant 0 : index
    %c0_64 = arith.constant 0 : index
    %c0_65 = arith.constant 0 : index
    %148 = vector.load %arg23[%c0_63, %c0_64, %c0_65] : memref<2x4x4xf32, #tpu.memory_space<vmem>>, vector<1x4x4xf32>
    %149 = vector.shape_cast %148 : vector<1x4x4xf32> to vector<4x4xf32>
    %150 = vector.shape_cast %147 : vector<4x4xf32> to vector<1x4x4xf32>
    tpu.vector_store %arg23[%c0_63, %c0_64, %c0_65], %150 {strides = array<i32>} : memref<2x4x4xf32, #tpu.memory_space<vmem>>, vector<1x4x4xf32>,
    %151 = vector.extract_strided_slice %140 {offsets = [4, 0], sizes = [4, 128], strides = [1, 1]} : vector<8x128xf32> to vector<4x128xf32>
    %152 = arith.truncf %151 : vector<4x128xf32> to vector<4x128xbf16>
    %c0_66 = arith.constant 0 : index
    %c0_67 = arith.constant 0 : index
    %153 = vector.load %arg21[%c0_66, %c0_67] : memref<4x128xbf16, #tpu.memory_space<vmem>>, vector<4x128xbf16>
    %cst_68 = arith.constant dense<0.000000e+00> : vector<4x4xf32>
    %154 = tpu.matmul %153, %152, %cst_68 {dimension_numbers = #tpu.dot_dimension_numbers<[1], [1], [0], [0], [0, 0, 1, 0], [], []>} : vector<4x128xbf16>, vector<4x128xbf16>, vector<4x4xf32> -> vector<4x4xf32>
    %c0_69 = arith.constant 0 : index
    %c0_70 = arith.constant 0 : index
    %155 = vector.load %arg22[%c0_69, %c0_70] : memref<4x1xf32, #tpu.memory_space<vmem>>, vector<4x1xf32>
    %156 = vector.broadcast %155 : vector<4x1xf32> to vector<4x4xf32>
    %157 = arith.addf %154, %156 : vector<4x4xf32>
    %c1 = arith.constant 1 : index
    %c0_71 = arith.constant 0 : index
    %c0_72 = arith.constant 0 : index
    %158 = vector.load %arg23[%c1, %c0_71, %c0_72] : memref<2x4x4xf32, #tpu.memory_space<vmem>>, vector<1x4x4xf32>
    %159 = vector.shape_cast %158 : vector<1x4x4xf32> to vector<4x4xf32>
    %160 = vector.shape_cast %157 : vector<4x4xf32> to vector<1x4x4xf32>
    tpu.vector_store %arg23[%c1, %c0_71, %c0_72], %160 {strides = array<i32>} : memref<2x4x4xf32, #tpu.memory_space<vmem>>, vector<1x4x4xf32>,
    return
  }
  func.func @transform_0(%arg0: i32) -> (i32, i32) {
    %c0_i32 = arith.constant 0 : i32
    %c0_i32_0 = arith.constant 0 : i32
    return %arg0, %c0_i32 : i32, i32
  }
  func.func @transform_1(%arg0: i32) -> (i32, i32) {
    %c0_i32 = arith.constant 0 : i32
    %c0_i32_0 = arith.constant 0 : i32
    %c0_i32_1 = arith.constant 0 : i32
    return %c0_i32, %c0_i32_0 : i32, i32
  }
  func.func @transform_2(%arg0: i32) -> (i32, i32) {
    %c0_i32 = arith.constant 0 : i32
    %c0_i32_0 = arith.constant 0 : i32
    %c0_i32_1 = arith.constant 0 : i32
    return %c0_i32, %c0_i32_0 : i32, i32
  }
  func.func @transform_3(%arg0: i32) -> (i32, i32) {
    %c0_i32 = arith.constant 0 : i32
    %c0_i32_0 = arith.constant 0 : i32
    %c0_i32_1 = arith.constant 0 : i32
    return %c0_i32, %c0_i32_0 : i32, i32
  }
  func.func @transform_4(%arg0: i32) -> (i32, i32) {
    %c0_i32 = arith.constant 0 : i32
    %c0_i32_0 = arith.constant 0 : i32
    %c0_i32_1 = arith.constant 0 : i32
    return %c0_i32, %c0_i32_0 : i32, i32
  }
  func.func @transform_5(%arg0: i32) -> (i32, i32) {
    %c0_i32 = arith.constant 0 : i32
    %c0_i32_0 = arith.constant 0 : i32
    %c0_i32_1 = arith.constant 0 : i32
    return %c0_i32, %c0_i32_0 : i32, i32
  }
  func.func @transform_6(%arg0: i32) -> (i32, i32) {
    %c0_i32 = arith.constant 0 : i32
    %c0_i32_0 = arith.constant 0 : i32
    %c0_i32_1 = arith.constant 0 : i32
    return %c0_i32, %c0_i32_0 : i32, i32
  }
  func.func @transform_7(%arg0: i32) -> (i32, i32) {
    %c0_i32 = arith.constant 0 : i32
    %c0_i32_0 = arith.constant 0 : i32
    %c0_i32_1 = arith.constant 0 : i32
    return %c0_i32, %c0_i32_0 : i32, i32
  }
  func.func @transform_8(%arg0: i32) -> (i32, i32) {
    %c0_i32 = arith.constant 0 : i32
    %c0_i32_0 = arith.constant 0 : i32
    %c0_i32_1 = arith.constant 0 : i32
    return %c0_i32, %c0_i32_0 : i32, i32
  }
  func.func @transform_9(%arg0: i32) -> (i32, i32) {
    %c0_i32 = arith.constant 0 : i32
    %c0_i32_0 = arith.constant 0 : i32
    %c0_i32_1 = arith.constant 0 : i32
    return %c0_i32, %c0_i32_0 : i32, i32
  }
  func.func @transform_10(%arg0: i32) -> (i32, i32) {
    %c0_i32 = arith.constant 0 : i32
    %c0_i32_0 = arith.constant 0 : i32
    %c0_i32_1 = arith.constant 0 : i32
    return %c0_i32, %c0_i32_0 : i32, i32
  }
  func.func @transform_11(%arg0: i32) -> (i32, i32) {
    %c0_i32 = arith.constant 0 : i32
    %c0_i32_0 = arith.constant 0 : i32
    %c0_i32_1 = arith.constant 0 : i32
    return %c0_i32, %c0_i32_0 : i32, i32
  }
  func.func @transform_12(%arg0: i32) -> (i32, i32) {
    %c0_i32 = arith.constant 0 : i32
    %c0_i32_0 = arith.constant 0 : i32
    %c0_i32_1 = arith.constant 0 : i32
    return %c0_i32, %c0_i32_0 : i32, i32
  }
  func.func @transform_13(%arg0: i32) -> (i32, i32) {
    %c0_i32 = arith.constant 0 : i32
    %c0_i32_0 = arith.constant 0 : i32
    %c0_i32_1 = arith.constant 0 : i32
    return %c0_i32, %c0_i32_0 : i32, i32
  }
  func.func @transform_14(%arg0: i32) -> (i32, i32) {
    %c0_i32 = arith.constant 0 : i32
    %c0_i32_0 = arith.constant 0 : i32
    %c0_i32_1 = arith.constant 0 : i32
    return %c0_i32, %c0_i32_0 : i32, i32
  }
  func.func @transform_15(%arg0: i32) -> (i32, i32) {
    %c0_i32 = arith.constant 0 : i32
    %c0_i32_0 = arith.constant 0 : i32
    %c0_i32_1 = arith.constant 0 : i32
    return %c0_i32, %c0_i32_0 : i32, i32
  }
  func.func @transform_16(%arg0: i32) -> (i32, i32) {
    %c0_i32 = arith.constant 0 : i32
    %c0_i32_0 = arith.constant 0 : i32
    %c0_i32_1 = arith.constant 0 : i32
    return %c0_i32, %c0_i32_0 : i32, i32
  }
  func.func @transform_17(%arg0: i32) -> (i32, i32) {
    %c0_i32 = arith.constant 0 : i32
    %c0_i32_0 = arith.constant 0 : i32
    %c0_i32_1 = arith.constant 0 : i32
    return %c0_i32, %c0_i32_0 : i32, i32
  }
  func.func @transform_18(%arg0: i32) -> (i32, i32) {
    %c0_i32 = arith.constant 0 : i32
    %c0_i32_0 = arith.constant 0 : i32
    %c0_i32_1 = arith.constant 0 : i32
    return %c0_i32, %c0_i32_0 : i32, i32
  }
  func.func @transform_19(%arg0: i32) -> (i32, i32) {
    %c0_i32 = arith.constant 0 : i32
    %c0_i32_0 = arith.constant 0 : i32
    %c0_i32_1 = arith.constant 0 : i32
    return %c0_i32, %c0_i32_0 : i32, i32
  }
  func.func @transform_20(%arg0: i32) -> (i32, i32) {
    %c0_i32 = arith.constant 0 : i32
    %c0_i32_0 = arith.constant 0 : i32
    %c0_i32_1 = arith.constant 0 : i32
    return %c0_i32, %c0_i32_0 : i32, i32
  }
  func.func @transform_21(%arg0: i32) -> (i32, i32) {
    %c0_i32 = arith.constant 0 : i32
    %c0_i32_0 = arith.constant 0 : i32
    %c0_i32_1 = arith.constant 0 : i32
    return %c0_i32, %c0_i32_0 : i32, i32
  }
  func.func @transform_22(%arg0: i32) -> (i32, i32, i32) {
    %c0_i32 = arith.constant 0 : i32
    %c0_i32_0 = arith.constant 0 : i32
    %c0_i32_1 = arith.constant 0 : i32
    return %arg0, %c0_i32, %c0_i32_0 : i32, i32, i32
  }
}

</mosaic_0001>

<llo_original>
// kernel: forward.1
$region0: #{forward.1}
  #allocation0 [shape = 'u32[]', space=smem, size = 0x4, offset = 0x4, fixed_abs, tag = 'smem constant byte address 0x4 - core index']
  #allocation1 [shape = 'u32[144,128]{1,0:T(1,128)}', space=vmem, size = 0x12000, scoped, tag = 'internal scratch']
  %s0 = inlined_call_operand.hbm [shape: f32[64,16], index: 0, kind: input, shape index: {}]
  %s1 = inlined_call_operand.hbm [shape: f32[32,32], index: 1, kind: input, shape index: {}]
  %s2 = inlined_call_operand.hbm [shape: bf16[16,128], index: 2, kind: input, shape index: {}]
  %s3 = inlined_call_operand.hbm [shape: f32[1,128], index: 3, kind: input, shape index: {}]
  %s4 = inlined_call_operand.hbm [shape: bf16[128,256], index: 4, kind: input, shape index: {}]
  %s5 = inlined_call_operand.vmem [shape: f32[1,256], index: 5, kind: input, shape index: {}]
  %s6 = inlined_call_operand.hbm [shape: bf16[256,256], index: 6, kind: input, shape index: {}]
  %s7 = inlined_call_operand.vmem [shape: f32[1,256], index: 7, kind: input, shape index: {}]
  %s8 = inlined_call_operand.hbm [shape: bf16[256,32], index: 8, kind: input, shape index: {}]
  %s9 = inlined_call_operand.hbm [shape: f32[1,32], index: 9, kind: input, shape index: {}]
  %s10 = inlined_call_operand.hbm [shape: bf16[32,32], index: 10, kind: input, shape index: {}]
  %s11 = inlined_call_operand.vmem [shape: f32[1,32], index: 11, kind: input, shape index: {}]
  %s12 = inlined_call_operand.vmem [shape: f32[1,32], index: 12, kind: input, shape index: {}]
  %s13 = inlined_call_operand.vmem [shape: f32[1,32], index: 13, kind: input, shape index: {}]
  %s14 = inlined_call_operand.hbm [shape: f32[16,16], index: 14, kind: input, shape index: {}]
  %s15 = inlined_call_operand.hbm [shape: f32[16,16], index: 15, kind: input, shape index: {}]
  %s16 = inlined_call_operand.vmem [shape: bf16[32,16], index: 16, kind: input, shape index: {}]
  %s17 = inlined_call_operand.vmem [shape: f32[1,16], index: 17, kind: input, shape index: {}]
  %s18 = inlined_call_operand.hbm [shape: bf16[80,128], index: 18, kind: input, shape index: {}]
  %s19 = inlined_call_operand.vmem [shape: f32[1,128], index: 19, kind: input, shape index: {}]
  %s20 = inlined_call_operand.vmem [shape: bf16[4,128], index: 20, kind: input, shape index: {}]
  %s21 = inlined_call_operand.vmem [shape: f32[4,1], index: 21, kind: input, shape index: {}]
  %s22 = inlined_call_operand.hbm [shape: f32[2,4,4], index: 22, kind: output, shape index: {}]
  %s23 = sld [smem:[#allocation0]]
  $region146: #{forward.1} parent=0
    _
  %s25 = ssub.s32 1, %s23
  %s26 = scalar_select 0, %s25, %s23
  $region1: #{forward.1} parent=0
    #allocation2 [shape = 'u8[32768]{0}', space=vmem, size = 0x8000, scoped, tag = 'input window, operand 0, single buffered']
    #allocation3 [shape = 's32[1]{0}', space=sflag, size = 0x4, scoped, tag = 'scoped memory for forward.1']
    #allocation4 [shape = 's32[1]{0}', space=sflag, size = 0x4, scoped, tag = 'scoped memory for forward.1']
    #allocation5 [shape = 'u8[16384]{0}', space=vmem, size = 0x4000, scoped, tag = 'input window, operand 1, single buffered']
    #allocation6 [shape = 's32[1]{0}', space=sflag, size = 0x4, scoped, tag = 'scoped memory for forward.1']
    #allocation7 [shape = 'u8[4096]{0}', space=vmem, size = 0x1000, scoped, tag = 'input window, operand 2, single buffered']
    #allocation8 [shape = 'u8[512]{0}', space=vmem, size = 0x400, scoped, tag = 'input window, operand 3, single buffered']
    #allocation9 [shape = 's32[1]{0}', space=sflag, size = 0x4, scoped, tag = 'scoped memory for forward.1']
    #allocation10 [shape = 'u8[65536]{0}', space=vmem, size = 0x10000, scoped, tag = 'input window, operand 4, single buffered']
    #allocation11 [shape = 'u8[131072]{0}', space=vmem, size = 0x20000, scoped, tag = 'input window, operand 6, single buffered']
    #allocation12 [shape = 's32[1]{0}', space=sflag, size = 0x4, scoped, tag = 'scoped memory for forward.1']
    #allocation13 [shape = 'u8[65536]{0}', space=vmem, size = 0x10000, scoped, tag = 'input window, operand 8, single buffered']
    #allocation14 [shape = 'u8[512]{0}', space=vmem, size = 0x400, scoped, tag = 'input window, operand 9, single buffered']
    #allocation15 [shape = 's32[1]{0}', space=sflag, size = 0x4, scoped, tag = 'scoped memory for forward.1']
    #allocation16 [shape = 'u8[8192]{0}', space=vmem, size = 0x2000, scoped, tag = 'input window, operand 10, single buffered']
    #allocation17 [shape = 'u8[8192]{0}', space=vmem, size = 0x2000, scoped, tag = 'input window, operand 14, single buffered']
    #allocation18 [shape = 's32[1]{0}', space=sflag, size = 0x4, scoped, tag = 'scoped memory for forward.1']
    #allocation19 [shape = 'u8[8192]{0}', space=vmem, size = 0x2000, scoped, tag = 'input window, operand 15, single buffered']
    #allocation20 [shape = 'u8[20480]{0}', space=vmem, size = 0x5000, scoped, tag = 'input window, operand 18, single buffered']
    #allocation21 [shape = 's32[1]{0}', space=sflag, size = 0x4, scoped, tag = 'scoped memory for forward.1']
    #allocation22 [shape = 'u8[4096]{0}', space=vmem, size = 0x1000, scoped, tag = 'output window, operand 0, single buffered']
    %27 = vsyncpa [#allocation3], 0
    %28 = vsyncpa [#allocation6], 0
    %29 = vsyncpa [#allocation9], 0
    %30 = vsyncpa [#allocation12], 0
    %31 = vsyncpa [#allocation15], 0
    %32 = vsyncpa [#allocation18], 0
    %33 = vsyncpa [#allocation21], 0
    %34 = vsyncpa [#allocation4], 0
    // Predicated region
    $region2: #{forward.1} parent=1 // pred_check
      _
    $region3: #{forward.1} parent=1 // pred_check_branch
      %36 = sbr.rel (0) target = $region5
    $region4: #{forward.1} parent=1 // pred_region
      %s38 = ssub.s32 1024, 1024
      %39 = vsyncadd [#allocation3], %s38
      %s40 = sshll.u32 [#allocation2], 4
      %s41 = int_to_ptr.vmem [resolvable:$true] %s40
      %46 = dma.hbm_to_vmem [thread:$0]  %s0, 1024, %s41, [#allocation3], 128, 128, 8
    $region5: #{forward.1} parent=1 // pred_fallthru
      _
    // Predicated region
    $region6: #{forward.1} parent=1 // pred_check
      _
    $region7: #{forward.1} parent=1 // pred_check_branch
      %48 = sbr.rel (0) target = $region9
    $region8: #{forward.1} parent=1 // pred_region
      %s50 = ssub.s32 512, 512
      %51 = vsyncadd [#allocation6], %s50
      %s52 = sshll.u32 [#allocation5], 4
      %s53 = int_to_ptr.vmem [resolvable:$true] %s52
      %58 = dma.hbm_to_vmem [thread:$0]  %s1, 512, %s53, [#allocation6], 128, 128, 8
    $region9: #{forward.1} parent=1 // pred_fallthru
      _
    // Predicated region
    $region10: #{forward.1} parent=1 // pred_check
      _
    $region11: #{forward.1} parent=1 // pred_check_branch
      %60 = sbr.rel (0) target = $region13
    $region12: #{forward.1} parent=1 // pred_region
      %s62 = ssub.s32 128, 128
      %63 = vsyncadd [#allocation6], %s62
      %s64 = sshll.u32 [#allocation7], 4
      %s65 = int_to_ptr.vmem [resolvable:$true] %s64
      %70 = dma.hbm_to_vmem [thread:$0]  %s2, 128, %s65, [#allocation6], 64, 64, 4
    $region13: #{forward.1} parent=1 // pred_fallthru
      _
    // Predicated region
    $region14: #{forward.1} parent=1 // pred_check
      _
    $region15: #{forward.1} parent=1 // pred_check_branch
      %72 = sbr.rel (0) target = $region17
    $region16: #{forward.1} parent=1 // pred_region
      %s74 = ssub.s32 16, 16
      %75 = vsyncadd [#allocation9], %s74
      %s77 = sshll.u32 [#allocation8], 4
      %s78 = int_to_ptr.vmem [resolvable:$true] %s77
      %80 = dma.hbm_to_vmem [thread:$0]  %s3, 16, %s78, [#allocation9]
    $region17: #{forward.1} parent=1 // pred_fallthru
      _
    // Predicated region
    $region18: #{forward.1} parent=1 // pred_check
      _
    $region19: #{forward.1} parent=1 // pred_check_branch
      %82 = sbr.rel (0) target = $region21
    $region20: #{forward.1} parent=1 // pred_region
      %s84 = ssub.s32 2048, 2048
      %85 = vsyncadd [#allocation9], %s84
      %s86 = sshll.u32 [#allocation10], 4
      %s87 = int_to_ptr.vmem [resolvable:$true] %s86
      %92 = dma.hbm_to_vmem [thread:$0]  %s4, 2048, %s87, [#allocation9], 128, 128, 8
    $region21: #{forward.1} parent=1 // pred_fallthru
      _
    // Predicated region
    $region22: #{forward.1} parent=1 // pred_check
      _
    $region23: #{forward.1} parent=1 // pred_check_branch
      %94 = sbr.rel (0) target = $region25
    $region24: #{forward.1} parent=1 // pred_region
      _
    $region25: #{forward.1} parent=1 // pred_fallthru
      _
    // Predicated region
    $region26: #{forward.1} parent=1 // pred_check
      _
    $region27: #{forward.1} parent=1 // pred_check_branch
      %96 = sbr.rel (0) target = $region29
    $region28: #{forward.1} parent=1 // pred_region
      %s98 = ssub.s32 4096, 4096
      %99 = vsyncadd [#allocation12], %s98
      %s100 = sshll.u32 [#allocation11], 4
      %s101 = int_to_ptr.vmem [resolvable:$true] %s100
      %106 = dma.hbm_to_vmem [thread:$0]  %s6, 4096, %s101, [#allocation12], 128, 128, 8
    $region29: #{forward.1} parent=1 // pred_fallthru
      _
    // Predicated region
    $region30: #{forward.1} parent=1 // pred_check
      _
    $region31: #{forward.1} parent=1 // pred_check_branch
      %108 = sbr.rel (0) target = $region33
    $region32: #{forward.1} parent=1 // pred_region
      _
    $region33: #{forward.1} parent=1 // pred_fallthru
      _
    // Predicated region
    $region34: #{forward.1} parent=1 // pred_check
      _
    $region35: #{forward.1} parent=1 // pred_check_branch
      %110 = sbr.rel (0) target = $region37
    $region36: #{forward.1} parent=1 // pred_region
      %s112 = ssub.s32 2048, 2048
      %113 = vsyncadd [#allocation12], %s112
      %s114 = sshll.u32 [#allocation13], 4
      %s115 = int_to_ptr.vmem [resolvable:$true] %s114
      %120 = dma.hbm_to_vmem [thread:$0]  %s8, 2048, %s115, [#allocation12], 64, 64, 4
    $region37: #{forward.1} parent=1 // pred_fallthru
      _
    // Predicated region
    $region38: #{forward.1} parent=1 // pred_check
      _
    $region39: #{forward.1} parent=1 // pred_check_branch
      %122 = sbr.rel (0) target = $region41
    $region40: #{forward.1} parent=1 // pred_region
      %s124 = ssub.s32 16, 16
      %125 = vsyncadd [#allocation15], %s124
      %s127 = sshll.u32 [#allocation14], 4
      %s128 = int_to_ptr.vmem [resolvable:$true] %s127
      %130 = dma.hbm_to_vmem [thread:$0]  %s9, 16, %s128, [#allocation15]
    $region41: #{forward.1} parent=1 // pred_fallthru
      _
    // Predicated region
    $region42: #{forward.1} parent=1 // pred_check
      _
    $region43: #{forward.1} parent=1 // pred_check_branch
      %132 = sbr.rel (0) target = $region45
    $region44: #{forward.1} parent=1 // pred_region
      %s134 = ssub.s32 256, 256
      %135 = vsyncadd [#allocation15], %s134
      %s136 = sshll.u32 [#allocation16], 4
      %s137 = int_to_ptr.vmem [resolvable:$true] %s136
      %142 = dma.hbm_to_vmem [thread:$0]  %s10, 256, %s137, [#allocation15], 64, 64, 4
    $region45: #{forward.1} parent=1 // pred_fallthru
      _
    // Predicated region
    $region46: #{forward.1} parent=1 // pred_check
      _
    $region47: #{forward.1} parent=1 // pred_check_branch
      %144 = sbr.rel (0) target = $region49
    $region48: #{forward.1} parent=1 // pred_region
      _
    $region49: #{forward.1} parent=1 // pred_fallthru
      _
    // Predicated region
    $region50: #{forward.1} parent=1 // pred_check
      _
    $region51: #{forward.1} parent=1 // pred_check_branch
      %146 = sbr.rel (0) target = $region53
    $region52: #{forward.1} parent=1 // pred_region
      _
    $region53: #{forward.1} parent=1 // pred_fallthru
      _
    // Predicated region
    $region54: #{forward.1} parent=1 // pred_check
      _
    $region55: #{forward.1} parent=1 // pred_check_branch
      %148 = sbr.rel (0) target = $region57
    $region56: #{forward.1} parent=1 // pred_region
      _
    $region57: #{forward.1} parent=1 // pred_fallthru
      _
    // Predicated region
    $region58: #{forward.1} parent=1 // pred_check
      _
    $region59: #{forward.1} parent=1 // pred_check_branch
      %150 = sbr.rel (0) target = $region61
    $region60: #{forward.1} parent=1 // pred_region
      %s152 = ssub.s32 256, 256
      %153 = vsyncadd [#allocation18], %s152
      %s154 = sshll.u32 [#allocation17], 4
      %s155 = int_to_ptr.vmem [resolvable:$true] %s154
      %160 = dma.hbm_to_vmem [thread:$0]  %s14, 256, %s155, [#allocation18], 128, 128, 8
    $region61: #{forward.1} parent=1 // pred_fallthru
      _
    // Predicated region
    $region62: #{forward.1} parent=1 // pred_check
      _
    $region63: #{forward.1} parent=1 // pred_check_branch
      %162 = sbr.rel (0) target = $region65
    $region64: #{forward.1} parent=1 // pred_region
      %s164 = ssub.s32 256, 256
      %165 = vsyncadd [#allocation18], %s164
      %s166 = sshll.u32 [#allocation19], 4
      %s167 = int_to_ptr.vmem [resolvable:$true] %s166
      %172 = dma.hbm_to_vmem [thread:$0]  %s15, 256, %s167, [#allocation18], 128, 128, 8
    $region65: #{forward.1} parent=1 // pred_fallthru
      _
    // Predicated region
    $region66: #{forward.1} parent=1 // pred_check
      _
    $region67: #{forward.1} parent=1 // pred_check_branch
      %174 = sbr.rel (0) target = $region69
    $region68: #{forward.1} parent=1 // pred_region
      _
    $region69: #{forward.1} parent=1 // pred_fallthru
      _
    // Predicated region
    $region70: #{forward.1} parent=1 // pred_check
      _
    $region71: #{forward.1} parent=1 // pred_check_branch
      %176 = sbr.rel (0) target = $region73
    $region72: #{forward.1} parent=1 // pred_region
      _
    $region73: #{forward.1} parent=1 // pred_fallthru
      _
    // Predicated region
    $region74: #{forward.1} parent=1 // pred_check
      _
    $region75: #{forward.1} parent=1 // pred_check_branch
      %178 = sbr.rel (0) target = $region77
    $region76: #{forward.1} parent=1 // pred_region
      %s180 = ssub.s32 640, 640
      %181 = vsyncadd [#allocation21], %s180
      %s182 = sshll.u32 [#allocation20], 4
      %s183 = int_to_ptr.vmem [resolvable:$true] %s182
      %188 = dma.hbm_to_vmem [thread:$0]  %s18, 640, %s183, [#allocation21], 64, 64, 4
    $region77: #{forward.1} parent=1 // pred_fallthru
      _
    // Predicated region
    $region78: #{forward.1} parent=1 // pred_check
      _
    $region79: #{forward.1} parent=1 // pred_check_branch
      %190 = sbr.rel (0) target = $region81
    $region80: #{forward.1} parent=1 // pred_region
      _
    $region81: #{forward.1} parent=1 // pred_fallthru
      _
    // Predicated region
    $region82: #{forward.1} parent=1 // pred_check
      _
    $region83: #{forward.1} parent=1 // pred_check_branch
      %192 = sbr.rel (0) target = $region85
    $region84: #{forward.1} parent=1 // pred_region
      _
    $region85: #{forward.1} parent=1 // pred_fallthru
      _
    // Predicated region
    $region86: #{forward.1} parent=1 // pred_check
      _
    $region87: #{forward.1} parent=1 // pred_check_branch
      %194 = sbr.rel (0) target = $region89
    $region88: #{forward.1} parent=1 // pred_region
      _
    $region89: #{forward.1} parent=1 // pred_fallthru
      _
    // Predicated region
    $region90: #{forward.1} parent=1 // pred_check
      _
    $region91: #{forward.1} parent=1 // pred_check_branch
      %196 = sbr.rel (0) target = $region93
    $region92: #{forward.1} parent=1 // pred_region
      %197 = dma.done [#allocation3], 1024
    $region93: #{forward.1} parent=1 // pred_fallthru
      _
    // Predicated region
    $region94: #{forward.1} parent=1 // pred_check
      _
    $region95: #{forward.1} parent=1 // pred_check_branch
      %199 = sbr.rel (0) target = $region97
    $region96: #{forward.1} parent=1 // pred_region
      %200 = dma.done [#allocation6], 512
    $region97: #{forward.1} parent=1 // pred_fallthru
      _
    // Predicated region
    $region98: #{forward.1} parent=1 // pred_check
      _
    $region99: #{forward.1} parent=1 // pred_check_branch
      %202 = sbr.rel (0) target = $region101
    $region100: #{forward.1} parent=1 // pred_region
      %203 = dma.done [#allocation6], 128
    $region101: #{forward.1} parent=1 // pred_fallthru
      _
    // Predicated region
    $region102: #{forward.1} parent=1 // pred_check
      _
    $region103: #{forward.1} parent=1 // pred_check_branch
      %205 = sbr.rel (0) target = $region105
    $region104: #{forward.1} parent=1 // pred_region
      %206 = dma.done [#allocation9], 16
    $region105: #{forward.1} parent=1 // pred_fallthru
      _
    // Predicated region
    $region106: #{forward.1} parent=1 // pred_check
      _
    $region107: #{forward.1} parent=1 // pred_check_branch
      %208 = sbr.rel (0) target = $region109
    $region108: #{forward.1} parent=1 // pred_region
      %209 = dma.done [#allocation9], 2048
    $region109: #{forward.1} parent=1 // pred_fallthru
      _
    // Predicated region
    $region110: #{forward.1} parent=1 // pred_check
      _
    $region111: #{forward.1} parent=1 // pred_check_branch
      %211 = sbr.rel (0) target = $region113
    $region112: #{forward.1} parent=1 // pred_region
      %212 = dma.done [#allocation12], 4096
    $region113: #{forward.1} parent=1 // pred_fallthru
      _
    // Predicated region
    $region114: #{forward.1} parent=1 // pred_check
      _
    $region115: #{forward.1} parent=1 // pred_check_branch
      %214 = sbr.rel (0) target = $region117
    $region116: #{forward.1} parent=1 // pred_region
      %215 = dma.done [#allocation12], 2048
    $region117: #{forward.1} parent=1 // pred_fallthru
      _
    // Predicated region
    $region118: #{forward.1} parent=1 // pred_check
      _
    $region119: #{forward.1} parent=1 // pred_check_branch
      %217 = sbr.rel (0) target = $region121
    $region120: #{forward.1} parent=1 // pred_region
      %218 = dma.done [#allocation15], 16
    $region121: #{forward.1} parent=1 // pred_fallthru
      _
    // Predicated region
    $region122: #{forward.1} parent=1 // pred_check
      _
    $region123: #{forward.1} parent=1 // pred_check_branch
      %220 = sbr.rel (0) target = $region125
    $region124: #{forward.1} parent=1 // pred_region
      %221 = dma.done [#allocation15], 256
    $region125: #{forward.1} parent=1 // pred_fallthru
      _
    // Predicated region
    $region126: #{forward.1} parent=1 // pred_check
      _
    $region127: #{forward.1} parent=1 // pred_check_branch
      %223 = sbr.rel (0) target = $region129
    $region128: #{forward.1} parent=1 // pred_region
      %224 = dma.done [#allocation18], 256
    $region129: #{forward.1} parent=1 // pred_fallthru
      _
    // Predicated region
    $region130: #{forward.1} parent=1 // pred_check
      _
    $region131: #{forward.1} parent=1 // pred_check_branch
      %226 = sbr.rel (0) target = $region133
    $region132: #{forward.1} parent=1 // pred_region
      %227 = dma.done [#allocation18], 256
    $region133: #{forward.1} parent=1 // pred_fallthru
      _
    // Predicated region
    $region134: #{forward.1} parent=1 // pred_check
      _
    $region135: #{forward.1} parent=1 // pred_check_branch
      %229 = sbr.rel (0) target = $region137
    $region136: #{forward.1} parent=1 // pred_region
      %230 = dma.done [#allocation21], 640
    $region137: #{forward.1} parent=1 // pred_fallthru
      _
    %v232 = vld [vmem:[#allocation2] sm:$0xff]
    %v233 = vld [vmem:[#allocation2 + $0x8] sm:$0xff]
    %v234 = vld [vmem:[#allocation2 + $0x10] sm:$0xff]
    %v235 = vld [vmem:[#allocation2 + $0x18] sm:$0xff]
    %v236 = vld [vmem:[#allocation2 + $0x20] sm:$0xff]
    %v237 = vld [vmem:[#allocation2 + $0x28] sm:$0xff]
    %v238 = vld [vmem:[#allocation2 + $0x30] sm:$0xff]
    %v239 = vld [vmem:[#allocation2 + $0x38] sm:$0xff]
    %v240 = vpack.c.bf16 %v233, %v232
    %v241 = vpack.c.bf16 %v235, %v234
    %v242 = vpack.c.bf16 %v237, %v236
    %v243 = vpack.c.bf16 %v239, %v238
    %v244 = vld [vmem:[#allocation7] sm:$0xf]
    %v245 = vld [vmem:[#allocation7 + $0x4] sm:$0xf]
    %v246 = vld [vmem:[#allocation8] sm:$0x1]
    %v248 = vlaneseq
    %v249 = vshrl.u32 %v248, 7
    %v250 = vsub.s32 0, %v249
    %v251 = vrot.slane %v246, %v250
    %v255 = vunpack.c.l.b16 %v244
    %v256 = vunpack.c.l.b16 %v245
    %v257 = vpack.c.b16 %v256, %v255
    %vm259 = vcmask 130048
    %v261 = vsel %vm259, %v240, 0
    %v264 = vsel %vm259, %v241, 0
    %v267 = vsel %vm259, %v242, 0
    %v270 = vsel %vm259, %v243, 0
    %272 = vmatprep.subr.bf16.mxu0 0
    %273 = vmatpush1.bf16.msra.mxu0 0
    %274 = vmatprep.subr.bf16.mxu0 0
    %275 = vmatpush1.bf16.msra.mxu0 0
    %276 = vmatprep.subr.bf16.mxu0 0
    %277 = vmatpush1.bf16.msra.mxu0 0
    %278 = vmatprep.subr.bf16.mxu0 0
    %279 = vmatpush1.bf16.msra.mxu0 0
    %280 = vmatprep.subr.bf16.mxu0 0
    %281 = vmatpush1.bf16.msra.mxu0 0
    %282 = vmatprep.subr.bf16.mxu0 0
    %283 = vmatpush1.bf16.msra.mxu0 0
    %284 = vmatprep.subr.bf16.mxu0 0
    %285 = vmatpush1.bf16.msra.mxu0 0
    %286 = vmatprep.subr.bf16.mxu0 0
    %287 = vmatpush1.bf16.msra.mxu0 %v257
    %288 = vmatprep.subr.bf16.mxu0 0
    %289 = vmatpush2.bf16.msra.mxu0 0
    %290 = vmatprep.subr.bf16.mxu0 0
    %291 = vmatpush2.bf16.msra.mxu0 0
    %292 = vmatprep.subr.bf16.mxu0 0
    %293 = vmatpush2.bf16.msra.mxu0 0
    %294 = vmatprep.subr.bf16.mxu0 0
    %295 = vmatpush2.bf16.msra.mxu0 0
    %296 = vmatprep.subr.bf16.mxu0 0
    %297 = vmatpush2.bf16.msra.mxu0 0
    %298 = vmatprep.subr.bf16.mxu0 0
    %299 = vmatpush2.bf16.msra.mxu0 0
    %300 = vmatprep.subr.bf16.mxu0 0
    %301 = vmatpush2.bf16.msra.mxu0 0
    %302 = vmatprep.subr.bf16.mxu0 0
    %303 = vmatpush2.bf16.msra.mxu0 0
    %304 = vmatprep.mubr.bf16.mxu0 0
    %305 = vmatmul.mubr.bf16.gmra.mxu0 %v261
    %v306 = vpop.f32.mrf.mxu0
    %v307 = vadd.f32 %v251, %v306
    %v308 = vpop.f32.mrf.mxu0
    %v309 = vpop.f32.mrf.mxu0
    %v310 = vadd.f32 %v251, %v309
    %v311 = vpop.f32.mrf.mxu0
    %312 = vmatprep.mubr.bf16.mxu0 0
    %313 = vmatmul.mubr.bf16.gmra.mxu0 %v264
    %v314 = vpop.f32.mrf.mxu0
    %v315 = vadd.f32 %v251, %v314
    %v316 = vpop.f32.mrf.mxu0
    %v317 = vpop.f32.mrf.mxu0
    %v318 = vadd.f32 %v251, %v317
    %v319 = vpop.f32.mrf.mxu0
    %320 = vmatprep.mubr.bf16.mxu0 0
    %321 = vmatmul.mubr.bf16.gmra.mxu0 %v267
    %v322 = vpop.f32.mrf.mxu0
    %v323 = vadd.f32 %v251, %v322
    %v324 = vpop.f32.mrf.mxu0
    %v325 = vpop.f32.mrf.mxu0
    %v326 = vadd.f32 %v251, %v325
    %v327 = vpop.f32.mrf.mxu0
    %328 = vmatprep.mubr.bf16.mxu0 0
    %329 = vmatmul.mubr.bf16.gmra.mxu0 %v270
    %v330 = vpop.f32.mrf.mxu0
    %v331 = vadd.f32 %v251, %v330
    %v332 = vpop.f32.mrf.mxu0
    %v333 = vpop.f32.mrf.mxu0
    %v334 = vadd.f32 %v251, %v333
    %v335 = vpop.f32.mrf.mxu0
    %336 = vdwg.mxu0
    %v337 = vmax.f32 %v307, 0.0
    %v338 = vmax.f32 %v310, 0.0
    %v339 = vmax.f32 %v315, 0.0
    %v340 = vmax.f32 %v318, 0.0
    %v341 = vmax.f32 %v323, 0.0
    %v342 = vmax.f32 %v326, 0.0
    %v343 = vmax.f32 %v331, 0.0
    %v344 = vmax.f32 %v334, 0.0
    %v345 = vpack.c.bf16 %v338, %v337
    %v346 = vpack.c.bf16 %v340, %v339
    %v347 = vpack.c.bf16 %v342, %v341
    %v348 = vpack.c.bf16 %v344, %v343
    %v349 = vld [vmem:[#allocation10] sm:$0xff]
    %v350 = vld [vmem:[#allocation10 + $0x8] sm:$0xff]
    %v351 = vld [vmem:[#allocation10 + $0x10] sm:$0xff]
    %v352 = vld [vmem:[#allocation10 + $0x18] sm:$0xff]
    %v353 = vld [vmem:[#allocation10 + $0x20] sm:$0xff]
    %v354 = vld [vmem:[#allocation10 + $0x28] sm:$0xff]
    %v355 = vld [vmem:[#allocation10 + $0x30] sm:$0xff]
    %v356 = vld [vmem:[#allocation10 + $0x38] sm:$0xff]
    %v357 = vld [vmem:[#allocation10 + $0x40] sm:$0xff]
    %v358 = vld [vmem:[#allocation10 + $0x48] sm:$0xff]
    %v359 = vld [vmem:[#allocation10 + $0x50] sm:$0xff]
    %v360 = vld [vmem:[#allocation10 + $0x58] sm:$0xff]
    %v361 = vld [vmem:[#allocation10 + $0x60] sm:$0xff]
    %v362 = vld [vmem:[#allocation10 + $0x68] sm:$0xff]
    %v363 = vld [vmem:[#allocation10 + $0x70] sm:$0xff]
    %v364 = vld [vmem:[#allocation10 + $0x78] sm:$0xff]
    %v365 = vld [vmem:[%s5] sm:$0x3]
    %v367 = vlaneseq
    %v368 = vshrl.u32 %v367, 7
    %v369 = vsub.s32 0, %v368
    %v370 = vrot.slane %v365, %v369
    %v371 = vlaneseq
    %v372 = vshrl.u32 %v371, 7
    %v373 = vsub.s32 1, %v372
    %v374 = vrot.slane %v365, %v373
    %v393 = vunpack.c.l.b16 %v349
    %v394 = vunpack.c.h.b16 %v349
    %v395 = vunpack.c.l.b16 %v350
    %v396 = vunpack.c.h.b16 %v350
    %v397 = vunpack.c.l.b16 %v351
    %v398 = vunpack.c.h.b16 %v351
    %v399 = vunpack.c.l.b16 %v352
    %v400 = vunpack.c.h.b16 %v352
    %v401 = vunpack.c.l.b16 %v353
    %v402 = vunpack.c.h.b16 %v353
    %v403 = vunpack.c.l.b16 %v354
    %v404 = vunpack.c.h.b16 %v354
    %v405 = vunpack.c.l.b16 %v355
    %v406 = vunpack.c.h.b16 %v355
    %v407 = vunpack.c.l.b16 %v356
    %v408 = vunpack.c.h.b16 %v356
    %v409 = vunpack.c.l.b16 %v357
    %v410 = vunpack.c.h.b16 %v357
    %v411 = vunpack.c.l.b16 %v358
    %v412 = vunpack.c.h.b16 %v358
    %v413 = vunpack.c.l.b16 %v359
    %v414 = vunpack.c.h.b16 %v359
    %v415 = vunpack.c.l.b16 %v360
    %v416 = vunpack.c.h.b16 %v360
    %v417 = vunpack.c.l.b16 %v361
    %v418 = vunpack.c.h.b16 %v361
    %v419 = vunpack.c.l.b16 %v362
    %v420 = vunpack.c.h.b16 %v362
    %v421 = vunpack.c.l.b16 %v363
    %v422 = vunpack.c.h.b16 %v363
    %v423 = vunpack.c.l.b16 %v364
    %v424 = vunpack.c.h.b16 %v364
    %v425 = vpack.c.b16 %v395, %v393
    %v426 = vpack.c.b16 %v396, %v394
    %v427 = vpack.c.b16 %v399, %v397
    %v428 = vpack.c.b16 %v400, %v398
    %v429 = vpack.c.b16 %v403, %v401
    %v430 = vpack.c.b16 %v404, %v402
    %v431 = vpack.c.b16 %v407, %v405
    %v432 = vpack.c.b16 %v408, %v406
    %v433 = vpack.c.b16 %v411, %v409
    %v434 = vpack.c.b16 %v412, %v410
    %v435 = vpack.c.b16 %v415, %v413
    %v436 = vpack.c.b16 %v416, %v414
    %v437 = vpack.c.b16 %v419, %v417
    %v438 = vpack.c.b16 %v420, %v418
    %v439 = vpack.c.b16 %v423, %v421
    %v440 = vpack.c.b16 %v424, %v422
    %457 = vmatprep.subr.bf16.mxu0 %v440
    %458 = vmatpush1.bf16.msra.mxu0 %v439
    %459 = vmatprep.subr.bf16.mxu0 %v438
    %460 = vmatpush1.bf16.msra.mxu0 %v437
    %461 = vmatprep.subr.bf16.mxu0 %v436
    %462 = vmatpush1.bf16.msra.mxu0 %v435
    %463 = vmatprep.subr.bf16.mxu0 %v434
    %464 = vmatpush1.bf16.msra.mxu0 %v433
    %465 = vmatprep.subr.bf16.mxu0 %v432
    %466 = vmatpush1.bf16.msra.mxu0 %v431
    %467 = vmatprep.subr.bf16.mxu0 %v430
    %468 = vmatpush1.bf16.msra.mxu0 %v429
    %469 = vmatprep.subr.bf16.mxu0 %v428
    %470 = vmatpush1.bf16.msra.mxu0 %v427
    %471 = vmatprep.subr.bf16.mxu0 %v426
    %472 = vmatpush1.bf16.msra.mxu0 %v425
    %473 = vmatprep.subr.bf16.mxu0 0
    %474 = vmatpush2.bf16.msra.mxu0 0
    %475 = vmatprep.subr.bf16.mxu0 0
    %476 = vmatpush2.bf16.msra.mxu0 0
    %477 = vmatprep.subr.bf16.mxu0 0
    %478 = vmatpush2.bf16.msra.mxu0 0
    %479 = vmatprep.subr.bf16.mxu0 0
    %480 = vmatpush2.bf16.msra.mxu0 0
    %481 = vmatprep.subr.bf16.mxu0 0
    %482 = vmatpush2.bf16.msra.mxu0 0
    %483 = vmatprep.subr.bf16.mxu0 0
    %484 = vmatpush2.bf16.msra.mxu0 0
    %485 = vmatprep.subr.bf16.mxu0 0
    %486 = vmatpush2.bf16.msra.mxu0 0
    %487 = vmatprep.subr.bf16.mxu0 0
    %488 = vmatpush2.bf16.msra.mxu0 0
    %489 = vmatprep.mubr.bf16.mxu0 0
    %490 = vmatmul.mubr.bf16.gmra.mxu0 %v345
    %v491 = vpop.f32.mrf.mxu0
    %v492 = vadd.f32 %v370, %v491
    %v493 = vpop.f32.mrf.mxu0
    %v494 = vadd.f32 %v374, %v493
    %v495 = vpop.f32.mrf.mxu0
    %v496 = vadd.f32 %v370, %v495
    %v497 = vpop.f32.mrf.mxu0
    %v498 = vadd.f32 %v374, %v497
    %499 = vmatprep.mubr.bf16.mxu0 0
    %500 = vmatmul.mubr.bf16.gmra.mxu0 %v346
    %v501 = vpop.f32.mrf.mxu0
    %v502 = vadd.f32 %v370, %v501
    %v503 = vpop.f32.mrf.mxu0
    %v504 = vadd.f32 %v374, %v503
    %v505 = vpop.f32.mrf.mxu0
    %v506 = vadd.f32 %v370, %v505
    %v507 = vpop.f32.mrf.mxu0
    %v508 = vadd.f32 %v374, %v507
    %509 = vmatprep.mubr.bf16.mxu0 0
    %510 = vmatmul.mubr.bf16.gmra.mxu0 %v347
    %v511 = vpop.f32.mrf.mxu0
    %v512 = vadd.f32 %v370, %v511
    %v513 = vpop.f32.mrf.mxu0
    %v514 = vadd.f32 %v374, %v513
    %v515 = vpop.f32.mrf.mxu0
    %v516 = vadd.f32 %v370, %v515
    %v517 = vpop.f32.mrf.mxu0
    %v518 = vadd.f32 %v374, %v517
    %519 = vmatprep.mubr.bf16.mxu0 0
    %520 = vmatmul.mubr.bf16.gmra.mxu0 %v348
    %v521 = vpop.f32.mrf.mxu0
    %v522 = vadd.f32 %v370, %v521
    %v523 = vpop.f32.mrf.mxu0
    %v524 = vadd.f32 %v374, %v523
    %v525 = vpop.f32.mrf.mxu0
    %v526 = vadd.f32 %v370, %v525
    %v527 = vpop.f32.mrf.mxu0
    %v528 = vadd.f32 %v374, %v527
    %529 = vdwg.mxu0
    %v530 = vmax.f32 %v492, 0.0
    %v531 = vmax.f32 %v494, 0.0
    %v532 = vmax.f32 %v496, 0.0
    %v533 = vmax.f32 %v498, 0.0
    %v534 = vmax.f32 %v502, 0.0
    %v535 = vmax.f32 %v504, 0.0
    %v536 = vmax.f32 %v506, 0.0
    %v537 = vmax.f32 %v508, 0.0
    %v538 = vmax.f32 %v512, 0.0
    %v539 = vmax.f32 %v514, 0.0
    %v540 = vmax.f32 %v516, 0.0
    %v541 = vmax.f32 %v518, 0.0
    %v542 = vmax.f32 %v522, 0.0
    %v543 = vmax.f32 %v524, 0.0
    %v544 = vmax.f32 %v526, 0.0
    %v545 = vmax.f32 %v528, 0.0
    %v546 = vpack.c.bf16 %v532, %v530
    %v547 = vpack.c.bf16 %v533, %v531
    %v548 = vpack.c.bf16 %v536, %v534
    %v549 = vpack.c.bf16 %v537, %v535
    %v550 = vpack.c.bf16 %v540, %v538
    %v551 = vpack.c.bf16 %v541, %v539
    %v552 = vpack.c.bf16 %v544, %v542
    %v553 = vpack.c.bf16 %v545, %v543
    %v554 = vld [vmem:[#allocation11] sm:$0xff]
    %v555 = vld [vmem:[#allocation11 + $0x8] sm:$0xff]
    %v556 = vld [vmem:[#allocation11 + $0x10] sm:$0xff]
    %v557 = vld [vmem:[#allocation11 + $0x18] sm:$0xff]
    %v558 = vld [vmem:[#allocation11 + $0x20] sm:$0xff]
    %v559 = vld [vmem:[#allocation11 + $0x28] sm:$0xff]
    %v560 = vld [vmem:[#allocation11 + $0x30] sm:$0xff]
    %v561 = vld [vmem:[#allocation11 + $0x38] sm:$0xff]
    %v562 = vld [vmem:[#allocation11 + $0x40] sm:$0xff]
    %v563 = vld [vmem:[#allocation11 + $0x48] sm:$0xff]
    %v564 = vld [vmem:[#allocation11 + $0x50] sm:$0xff]
    %v565 = vld [vmem:[#allocation11 + $0x58] sm:$0xff]
    %v566 = vld [vmem:[#allocation11 + $0x60] sm:$0xff]
    %v567 = vld [vmem:[#allocation11 + $0x68] sm:$0xff]
    %v568 = vld [vmem:[#allocation11 + $0x70] sm:$0xff]
    %v569 = vld [vmem:[#allocation11 + $0x78] sm:$0xff]
    %v570 = vld [vmem:[#allocation11 + $0x80] sm:$0xff]
    %v571 = vld [vmem:[#allocation11 + $0x88] sm:$0xff]
    %v572 = vld [vmem:[#allocation11 + $0x90] sm:$0xff]
    %v573 = vld [vmem:[#allocation11 + $0x98] sm:$0xff]
    %v574 = vld [vmem:[#allocation11 + $0xa0] sm:$0xff]
    %v575 = vld [vmem:[#allocation11 + $0xa8] sm:$0xff]
    %v576 = vld [vmem:[#allocation11 + $0xb0] sm:$0xff]
    %v577 = vld [vmem:[#allocation11 + $0xb8] sm:$0xff]
    %v578 = vld [vmem:[#allocation11 + $0xc0] sm:$0xff]
    %v579 = vld [vmem:[#allocation11 + $0xc8] sm:$0xff]
    %v580 = vld [vmem:[#allocation11 + $0xd0] sm:$0xff]
    %v581 = vld [vmem:[#allocation11 + $0xd8] sm:$0xff]
    %v582 = vld [vmem:[#allocation11 + $0xe0] sm:$0xff]
    %v583 = vld [vmem:[#allocation11 + $0xe8] sm:$0xff]
    %v584 = vld [vmem:[#allocation11 + $0xf0] sm:$0xff]
    %v585 = vld [vmem:[#allocation11 + $0xf8] sm:$0xff]
    %v586 = vld [vmem:[%s7] sm:$0x3]
    %v588 = vlaneseq
    %v589 = vshrl.u32 %v588, 7
    %v590 = vsub.s32 0, %v589
    %v591 = vrot.slane %v586, %v590
    %v592 = vlaneseq
    %v593 = vshrl.u32 %v592, 7
    %v594 = vsub.s32 1, %v593
    %v595 = vrot.slane %v586, %v594
    %v630 = vunpack.c.l.b16 %v554
    %v631 = vunpack.c.h.b16 %v554
    %v632 = vunpack.c.l.b16 %v555
    %v633 = vunpack.c.h.b16 %v555
    %v634 = vunpack.c.l.b16 %v556
    %v635 = vunpack.c.h.b16 %v556
    %v636 = vunpack.c.l.b16 %v557
    %v637 = vunpack.c.h.b16 %v557
    %v638 = vunpack.c.l.b16 %v558
    %v639 = vunpack.c.h.b16 %v558
    %v640 = vunpack.c.l.b16 %v559
    %v641 = vunpack.c.h.b16 %v559
    %v642 = vunpack.c.l.b16 %v560
    %v643 = vunpack.c.h.b16 %v560
    %v644 = vunpack.c.l.b16 %v561
    %v645 = vunpack.c.h.b16 %v561
    %v646 = vunpack.c.l.b16 %v562
    %v647 = vunpack.c.h.b16 %v562
    %v648 = vunpack.c.l.b16 %v563
    %v649 = vunpack.c.h.b16 %v563
    %v650 = vunpack.c.l.b16 %v564
    %v651 = vunpack.c.h.b16 %v564
    %v652 = vunpack.c.l.b16 %v565
    %v653 = vunpack.c.h.b16 %v565
    %v654 = vunpack.c.l.b16 %v566
    %v655 = vunpack.c.h.b16 %v566
    %v656 = vunpack.c.l.b16 %v567
    %v657 = vunpack.c.h.b16 %v567
    %v658 = vunpack.c.l.b16 %v568
    %v659 = vunpack.c.h.b16 %v568
    %v660 = vunpack.c.l.b16 %v569
    %v661 = vunpack.c.h.b16 %v569
    %v662 = vunpack.c.l.b16 %v570
    %v663 = vunpack.c.h.b16 %v570
    %v664 = vunpack.c.l.b16 %v571
    %v665 = vunpack.c.h.b16 %v571
    %v666 = vunpack.c.l.b16 %v572
    %v667 = vunpack.c.h.b16 %v572
    %v668 = vunpack.c.l.b16 %v573
    %v669 = vunpack.c.h.b16 %v573
    %v670 = vunpack.c.l.b16 %v574
    %v671 = vunpack.c.h.b16 %v574
    %v672 = vunpack.c.l.b16 %v575
    %v673 = vunpack.c.h.b16 %v575
    %v674 = vunpack.c.l.b16 %v576
    %v675 = vunpack.c.h.b16 %v576
    %v676 = vunpack.c.l.b16 %v577
    %v677 = vunpack.c.h.b16 %v577
    %v678 = vunpack.c.l.b16 %v578
    %v679 = vunpack.c.h.b16 %v578
    %v680 = vunpack.c.l.b16 %v579
    %v681 = vunpack.c.h.b16 %v579
    %v682 = vunpack.c.l.b16 %v580
    %v683 = vunpack.c.h.b16 %v580
    %v684 = vunpack.c.l.b16 %v581
    %v685 = vunpack.c.h.b16 %v581
    %v686 = vunpack.c.l.b16 %v582
    %v687 = vunpack.c.h.b16 %v582
    %v688 = vunpack.c.l.b16 %v583
    %v689 = vunpack.c.h.b16 %v583
    %v690 = vunpack.c.l.b16 %v584
    %v691 = vunpack.c.h.b16 %v584
    %v692 = vunpack.c.l.b16 %v585
    %v693 = vunpack.c.h.b16 %v585
    %v694 = vpack.c.b16 %v632, %v630
    %v695 = vpack.c.b16 %v633, %v631
    %v696 = vpack.c.b16 %v636, %v634
    %v697 = vpack.c.b16 %v637, %v635
    %v698 = vpack.c.b16 %v640, %v638
    %v699 = vpack.c.b16 %v641, %v639
    %v700 = vpack.c.b16 %v644, %v642
    %v701 = vpack.c.b16 %v645, %v643
    %v702 = vpack.c.b16 %v648, %v646
    %v703 = vpack.c.b16 %v649, %v647
    %v704 = vpack.c.b16 %v652, %v650
    %v705 = vpack.c.b16 %v653, %v651
    %v706 = vpack.c.b16 %v656, %v654
    %v707 = vpack.c.b16 %v657, %v655
    %v708 = vpack.c.b16 %v660, %v658
    %v709 = vpack.c.b16 %v661, %v659
    %v710 = vpack.c.b16 %v664, %v662
    %v711 = vpack.c.b16 %v665, %v663
    %v712 = vpack.c.b16 %v668, %v666
    %v713 = vpack.c.b16 %v669, %v667
    %v714 = vpack.c.b16 %v672, %v670
    %v715 = vpack.c.b16 %v673, %v671
    %v716 = vpack.c.b16 %v676, %v674
    %v717 = vpack.c.b16 %v677, %v675
    %v718 = vpack.c.b16 %v680, %v678
    %v719 = vpack.c.b16 %v681, %v679
    %v720 = vpack.c.b16 %v684, %v682
    %v721 = vpack.c.b16 %v685, %v683
    %v722 = vpack.c.b16 %v688, %v686
    %v723 = vpack.c.b16 %v689, %v687
    %v724 = vpack.c.b16 %v692, %v690
    %v725 = vpack.c.b16 %v693, %v691
    %758 = vmatprep.subr.bf16.mxu0 %v709
    %759 = vmatpush1.bf16.msra.mxu0 %v708
    %760 = vmatprep.subr.bf16.mxu0 %v707
    %761 = vmatpush1.bf16.msra.mxu0 %v706
    %762 = vmatprep.subr.bf16.mxu0 %v705
    %763 = vmatpush1.bf16.msra.mxu0 %v704
    %764 = vmatprep.subr.bf16.mxu0 %v703
    %765 = vmatpush1.bf16.msra.mxu0 %v702
    %766 = vmatprep.subr.bf16.mxu0 %v701
    %767 = vmatpush1.bf16.msra.mxu0 %v700
    %768 = vmatprep.subr.bf16.mxu0 %v699
    %769 = vmatpush1.bf16.msra.mxu0 %v698
    %770 = vmatprep.subr.bf16.mxu0 %v697
    %771 = vmatpush1.bf16.msra.mxu0 %v696
    %772 = vmatprep.subr.bf16.mxu0 %v695
    %773 = vmatpush1.bf16.msra.mxu0 %v694
    %774 = vmatprep.subr.bf16.mxu0 %v725
    %775 = vmatpush2.bf16.msra.mxu0 %v724
    %776 = vmatprep.subr.bf16.mxu0 %v723
    %777 = vmatpush2.bf16.msra.mxu0 %v722
    %778 = vmatprep.subr.bf16.mxu0 %v721
    %779 = vmatpush2.bf16.msra.mxu0 %v720
    %780 = vmatprep.subr.bf16.mxu0 %v719
    %781 = vmatpush2.bf16.msra.mxu0 %v718
    %782 = vmatprep.subr.bf16.mxu0 %v717
    %783 = vmatpush2.bf16.msra.mxu0 %v716
    %784 = vmatprep.subr.bf16.mxu0 %v715
    %785 = vmatpush2.bf16.msra.mxu0 %v714
    %786 = vmatprep.subr.bf16.mxu0 %v713
    %787 = vmatpush2.bf16.msra.mxu0 %v712
    %788 = vmatprep.subr.bf16.mxu0 %v711
    %789 = vmatpush2.bf16.msra.mxu0 %v710
    %790 = vmatprep.mubr.bf16.mxu0 %v547
    %791 = vmatmul.mubr.bf16.gmra.mxu0 %v546
    %v792 = vpop.f32.mrf.mxu0
    %v793 = vadd.f32 %v591, %v792
    %v794 = vpop.f32.mrf.mxu0
    %v795 = vadd.f32 %v595, %v794
    %v796 = vpop.f32.mrf.mxu0
    %v797 = vadd.f32 %v591, %v796
    %v798 = vpop.f32.mrf.mxu0
    %v799 = vadd.f32 %v595, %v798
    %800 = vmatprep.mubr.bf16.mxu0 %v549
    %801 = vmatmul.mubr.bf16.gmra.mxu0 %v548
    %v802 = vpop.f32.mrf.mxu0
    %v803 = vadd.f32 %v591, %v802
    %v804 = vpop.f32.mrf.mxu0
    %v805 = vadd.f32 %v595, %v804
    %v806 = vpop.f32.mrf.mxu0
    %v807 = vadd.f32 %v591, %v806
    %v808 = vpop.f32.mrf.mxu0
    %v809 = vadd.f32 %v595, %v808
    %810 = vmatprep.mubr.bf16.mxu0 %v551
    %811 = vmatmul.mubr.bf16.gmra.mxu0 %v550
    %v812 = vpop.f32.mrf.mxu0
    %v813 = vadd.f32 %v591, %v812
    %v814 = vpop.f32.mrf.mxu0
    %v815 = vadd.f32 %v595, %v814
    %v816 = vpop.f32.mrf.mxu0
    %v817 = vadd.f32 %v591, %v816
    %v818 = vpop.f32.mrf.mxu0
    %v819 = vadd.f32 %v595, %v818
    %820 = vmatprep.mubr.bf16.mxu0 %v553
    %821 = vmatmul.mubr.bf16.gmra.mxu0 %v552
    %v822 = vpop.f32.mrf.mxu0
    %v823 = vadd.f32 %v591, %v822
    %v824 = vpop.f32.mrf.mxu0
    %v825 = vadd.f32 %v595, %v824
    %v826 = vpop.f32.mrf.mxu0
    %v827 = vadd.f32 %v591, %v826
    %v828 = vpop.f32.mrf.mxu0
    %v829 = vadd.f32 %v595, %v828
    %830 = vdwg.mxu0
    %v831 = vmax.f32 %v793, 0.0
    %v832 = vmax.f32 %v795, 0.0
    %v833 = vmax.f32 %v797, 0.0
    %v834 = vmax.f32 %v799, 0.0
    %v835 = vmax.f32 %v803, 0.0
    %v836 = vmax.f32 %v805, 0.0
    %v837 = vmax.f32 %v807, 0.0
    %v838 = vmax.f32 %v809, 0.0
    %v839 = vmax.f32 %v813, 0.0
    %v840 = vmax.f32 %v815, 0.0
    %v841 = vmax.f32 %v817, 0.0
    %v842 = vmax.f32 %v819, 0.0
    %v843 = vmax.f32 %v823, 0.0
    %v844 = vmax.f32 %v825, 0.0
    %v845 = vmax.f32 %v827, 0.0
    %v846 = vmax.f32 %v829, 0.0
    %v847 = vpack.c.bf16 %v833, %v831
    %v848 = vpack.c.bf16 %v834, %v832
    %v849 = vpack.c.bf16 %v837, %v835
    %v850 = vpack.c.bf16 %v838, %v836
    %v851 = vpack.c.bf16 %v841, %v839
    %v852 = vpack.c.bf16 %v842, %v840
    %v853 = vpack.c.bf16 %v845, %v843
    %v854 = vpack.c.bf16 %v846, %v844
    %v855 = vld [vmem:[#allocation13] sm:$0xf]
    %v856 = vld [vmem:[#allocation13 + $0x4] sm:$0xf]
    %v857 = vld [vmem:[#allocation13 + $0x8] sm:$0xf]
    %v858 = vld [vmem:[#allocation13 + $0xc] sm:$0xf]
    %v859 = vld [vmem:[#allocation13 + $0x10] sm:$0xf]
    %v860 = vld [vmem:[#allocation13 + $0x14] sm:$0xf]
    %v861 = vld [vmem:[#allocation13 + $0x18] sm:$0xf]
    %v862 = vld [vmem:[#allocation13 + $0x1c] sm:$0xf]
    %v863 = vld [vmem:[#allocation13 + $0x20] sm:$0xf]
    %v864 = vld [vmem:[#allocation13 + $0x24] sm:$0xf]
    %v865 = vld [vmem:[#allocation13 + $0x28] sm:$0xf]
    %v866 = vld [vmem:[#allocation13 + $0x2c] sm:$0xf]
    %v867 = vld [vmem:[#allocation13 + $0x30] sm:$0xf]
    %v868 = vld [vmem:[#allocation13 + $0x34] sm:$0xf]
    %v869 = vld [vmem:[#allocation13 + $0x38] sm:$0xf]
    %v870 = vld [vmem:[#allocation13 + $0x3c] sm:$0xf]
    %v871 = vld [vmem:[#allocation13 + $0x40] sm:$0xf]
    %v872 = vld [vmem:[#allocation13 + $0x44] sm:$0xf]
    %v873 = vld [vmem:[#allocation13 + $0x48] sm:$0xf]
    %v874 = vld [vmem:[#allocation13 + $0x4c] sm:$0xf]
    %v875 = vld [vmem:[#allocation13 + $0x50] sm:$0xf]
    %v876 = vld [vmem:[#allocation13 + $0x54] sm:$0xf]
    %v877 = vld [vmem:[#allocation13 + $0x58] sm:$0xf]
    %v878 = vld [vmem:[#allocation13 + $0x5c] sm:$0xf]
    %v879 = vld [vmem:[#allocation13 + $0x60] sm:$0xf]
    %v880 = vld [vmem:[#allocation13 + $0x64] sm:$0xf]
    %v881 = vld [vmem:[#allocation13 + $0x68] sm:$0xf]
    %v882 = vld [vmem:[#allocation13 + $0x6c] sm:$0xf]
    %v883 = vld [vmem:[#allocation13 + $0x70] sm:$0xf]
    %v884 = vld [vmem:[#allocation13 + $0x74] sm:$0xf]
    %v885 = vld [vmem:[#allocation13 + $0x78] sm:$0xf]
    %v886 = vld [vmem:[#allocation13 + $0x7c] sm:$0xf]
    %v887 = vld [vmem:[#allocation14] sm:$0x1]
    %v889 = vlaneseq
    %v890 = vshrl.u32 %v889, 7
    %v891 = vsub.s32 0, %v890
    %v892 = vrot.slane %v887, %v891
    %v926 = vunpack.c.l.b16 %v855
    %v927 = vunpack.c.l.b16 %v856
    %v928 = vunpack.c.l.b16 %v857
    %v929 = vunpack.c.l.b16 %v858
    %v930 = vunpack.c.l.b16 %v859
    %v931 = vunpack.c.l.b16 %v860
    %v932 = vunpack.c.l.b16 %v861
    %v933 = vunpack.c.l.b16 %v862
    %v934 = vunpack.c.l.b16 %v863
    %v935 = vunpack.c.l.b16 %v864
    %v936 = vunpack.c.l.b16 %v865
    %v937 = vunpack.c.l.b16 %v866
    %v938 = vunpack.c.l.b16 %v867
    %v939 = vunpack.c.l.b16 %v868
    %v940 = vunpack.c.l.b16 %v869
    %v941 = vunpack.c.l.b16 %v870
    %v942 = vunpack.c.l.b16 %v871
    %v943 = vunpack.c.l.b16 %v872
    %v944 = vunpack.c.l.b16 %v873
    %v945 = vunpack.c.l.b16 %v874
    %v946 = vunpack.c.l.b16 %v875
    %v947 = vunpack.c.l.b16 %v876
    %v948 = vunpack.c.l.b16 %v877
    %v949 = vunpack.c.l.b16 %v878
    %v950 = vunpack.c.l.b16 %v879
    %v951 = vunpack.c.l.b16 %v880
    %v952 = vunpack.c.l.b16 %v881
    %v953 = vunpack.c.l.b16 %v882
    %v954 = vunpack.c.l.b16 %v883
    %v955 = vunpack.c.l.b16 %v884
    %v956 = vunpack.c.l.b16 %v885
    %v957 = vunpack.c.l.b16 %v886
    %v958 = vpack.c.b16 %v927, %v926
    %v959 = vpack.c.b16 %v929, %v928
    %v960 = vpack.c.b16 %v931, %v930
    %v961 = vpack.c.b16 %v933, %v932
    %v962 = vpack.c.b16 %v935, %v934
    %v963 = vpack.c.b16 %v937, %v936
    %v964 = vpack.c.b16 %v939, %v938
    %v965 = vpack.c.b16 %v941, %v940
    %v966 = vpack.c.b16 %v943, %v942
    %v967 = vpack.c.b16 %v945, %v944
    %v968 = vpack.c.b16 %v947, %v946
    %v969 = vpack.c.b16 %v949, %v948
    %v970 = vpack.c.b16 %v951, %v950
    %v971 = vpack.c.b16 %v953, %v952
    %v972 = vpack.c.b16 %v955, %v954
    %v973 = vpack.c.b16 %v957, %v956
    %990 = vmatprep.subr.bf16.mxu0 0
    %991 = vmatpush1.bf16.msra.mxu0 %v965
    %992 = vmatprep.subr.bf16.mxu0 0
    %993 = vmatpush1.bf16.msra.mxu0 %v964
    %994 = vmatprep.subr.bf16.mxu0 0
    %995 = vmatpush1.bf16.msra.mxu0 %v963
    %996 = vmatprep.subr.bf16.mxu0 0
    %997 = vmatpush1.bf16.msra.mxu0 %v962
    %998 = vmatprep.subr.bf16.mxu0 0
    %999 = vmatpush1.bf16.msra.mxu0 %v961
    %1000 = vmatprep.subr.bf16.mxu0 0
    %1001 = vmatpush1.bf16.msra.mxu0 %v960
    %1002 = vmatprep.subr.bf16.mxu0 0
    %1003 = vmatpush1.bf16.msra.mxu0 %v959
    %1004 = vmatprep.subr.bf16.mxu0 0
    %1005 = vmatpush1.bf16.msra.mxu0 %v958
    %1006 = vmatprep.subr.bf16.mxu0 0
    %1007 = vmatpush2.bf16.msra.mxu0 %v973
    %1008 = vmatprep.subr.bf16.mxu0 0
    %1009 = vmatpush2.bf16.msra.mxu0 %v972
    %1010 = vmatprep.subr.bf16.mxu0 0
    %1011 = vmatpush2.bf16.msra.mxu0 %v971
    %1012 = vmatprep.subr.bf16.mxu0 0
    %1013 = vmatpush2.bf16.msra.mxu0 %v970
    %1014 = vmatprep.subr.bf16.mxu0 0
    %1015 = vmatpush2.bf16.msra.mxu0 %v969
    %1016 = vmatprep.subr.bf16.mxu0 0
    %1017 = vmatpush2.bf16.msra.mxu0 %v968
    %1018 = vmatprep.subr.bf16.mxu0 0
    %1019 = vmatpush2.bf16.msra.mxu0 %v967
    %1020 = vmatprep.subr.bf16.mxu0 0
    %1021 = vmatpush2.bf16.msra.mxu0 %v966
    %1022 = vmatprep.mubr.bf16.mxu0 %v848
    %1023 = vmatmul.mubr.bf16.gmra.mxu0 %v847
    %v1024 = vpop.f32.mrf.mxu0
    %v1025 = vadd.f32 %v892, %v1024
    %v1026 = vpop.f32.mrf.mxu0
    %v1027 = vpop.f32.mrf.mxu0
    %v1028 = vadd.f32 %v892, %v1027
    %v1029 = vpop.f32.mrf.mxu0
    %1030 = vmatprep.mubr.bf16.mxu0 %v850
    %1031 = vmatmul.mubr.bf16.gmra.mxu0 %v849
    %v1032 = vpop.f32.mrf.mxu0
    %v1033 = vadd.f32 %v892, %v1032
    %v1034 = vpop.f32.mrf.mxu0
    %v1035 = vpop.f32.mrf.mxu0
    %v1036 = vadd.f32 %v892, %v1035
    %v1037 = vpop.f32.mrf.mxu0
    %1038 = vmatprep.mubr.bf16.mxu0 %v852
    %1039 = vmatmul.mubr.bf16.gmra.mxu0 %v851
    %v1040 = vpop.f32.mrf.mxu0
    %v1041 = vadd.f32 %v892, %v1040
    %v1042 = vpop.f32.mrf.mxu0
    %v1043 = vpop.f32.mrf.mxu0
    %v1044 = vadd.f32 %v892, %v1043
    %v1045 = vpop.f32.mrf.mxu0
    %1046 = vmatprep.mubr.bf16.mxu0 %v854
    %1047 = vmatmul.mubr.bf16.gmra.mxu0 %v853
    %v1048 = vpop.f32.mrf.mxu0
    %v1049 = vadd.f32 %v892, %v1048
    %v1050 = vpop.f32.mrf.mxu0
    %v1051 = vpop.f32.mrf.mxu0
    %v1052 = vadd.f32 %v892, %v1051
    %v1053 = vpop.f32.mrf.mxu0
    %1054 = vdwg.mxu0
    %v1055 = vld [vmem:[#allocation5] sm:$0xff]
    %v1056 = vld [vmem:[#allocation5 + $0x8] sm:$0xff]
    %v1057 = vld [vmem:[#allocation5 + $0x10] sm:$0xff]
    %v1058 = vld [vmem:[#allocation5 + $0x18] sm:$0xff]
    %v1059 = vadd.f32 %v1025, %v1055
    %v1060 = vadd.f32 %v1028, %v1056
    %v1061 = vadd.f32 %v1033, %v1057
    %v1062 = vadd.f32 %v1036, %v1058
    %v1063 = vadd.f32 %v1041, %v1055
    %v1064 = vadd.f32 %v1044, %v1056
    %v1065 = vadd.f32 %v1049, %v1057
    %v1066 = vadd.f32 %v1052, %v1058
    %vm1070 = vcmask 1043456
    %v1071 = vrot.slane %v1059, 4
    %v1072 = vrot.slane %v1060, 4
    %v1073 = vsel %vm1070, %v1071, %v1072
    %v1074 = vrot.slane %v1061, 4
    %v1075 = vsel %vm1070, %v1072, %v1074
    %v1079 = vrot.slane %v1062, 4
    %v1080 = vsel %vm1070, %v1074, %v1079
    %v1085 = vrot.slane %v1063, 4
    %v1086 = vrot.slane %v1064, 4
    %v1087 = vsel %vm1070, %v1085, %v1086
    %v1088 = vrot.slane %v1065, 4
    %v1089 = vsel %vm1070, %v1086, %v1088
    %v1093 = vrot.slane %v1066, 4
    %v1094 = vsel %vm1070, %v1088, %v1093
    %v1096 = vpack.c.bf16 %v1060, %v1059
    %v1097 = vpack.c.bf16 %v1075, %v1073
    %v1098 = vpack.c.bf16 %v1061, %v1060
    %v1099 = vpack.c.bf16 %v1080, %v1075
    %v1100 = vpack.c.bf16 %v1062, %v1061
    %v1101 = vpack.c.bf16 %v1064, %v1063
    %v1102 = vpack.c.bf16 %v1089, %v1087
    %v1103 = vpack.c.bf16 %v1065, %v1064
    %v1104 = vpack.c.bf16 %v1094, %v1089
    %v1105 = vpack.c.bf16 %v1066, %v1065
    %v1106 = vld [vmem:[#allocation16] sm:$0xf]
    %v1107 = vld [vmem:[#allocation16 + $0x4] sm:$0xf]
    %v1108 = vld [vmem:[#allocation16 + $0x8] sm:$0xf]
    %v1109 = vld [vmem:[#allocation16 + $0xc] sm:$0xf]
    %v1110 = vld [vmem:[%s11] sm:$0x1]
    %v1112 = vlaneseq
    %v1113 = vshrl.u32 %v1112, 7
    %v1114 = vsub.s32 0, %v1113
    %v1115 = vrot.slane %v1110, %v1114
    %v1121 = vunpack.c.l.b16 %v1106
    %v1122 = vunpack.c.l.b16 %v1107
    %v1123 = vunpack.c.l.b16 %v1108
    %v1124 = vunpack.c.l.b16 %v1109
    %v1125 = vpack.c.b16 %v1122, %v1121
    %v1126 = vpack.c.b16 %v1124, %v1123
    %vm1129 = vcmask 261120
    %v1131 = vsel %vm1129, %v1096, 0
    %v1134 = vsel %vm1129, %v1097, 0
    %v1137 = vsel %vm1129, %v1098, 0
    %v1140 = vsel %vm1129, %v1099, 0
    %v1143 = vsel %vm1129, %v1100, 0
    %v1146 = vsel %vm1129, %v1101, 0
    %v1149 = vsel %vm1129, %v1102, 0
    %v1152 = vsel %vm1129, %v1103, 0
    %v1155 = vsel %vm1129, %v1104, 0
    %v1158 = vsel %vm1129, %v1105, 0
    %1160 = vmatprep.subr.bf16.mxu0 0
    %1161 = vmatpush1.bf16.msra.mxu0 0
    %1162 = vmatprep.subr.bf16.mxu0 0
    %1163 = vmatpush1.bf16.msra.mxu0 0
    %1164 = vmatprep.subr.bf16.mxu0 0
    %1165 = vmatpush1.bf16.msra.mxu0 0
    %1166 = vmatprep.subr.bf16.mxu0 0
    %1167 = vmatpush1.bf16.msra.mxu0 0
    %1168 = vmatprep.subr.bf16.mxu0 0
    %1169 = vmatpush1.bf16.msra.mxu0 0
    %1170 = vmatprep.subr.bf16.mxu0 0
    %1171 = vmatpush1.bf16.msra.mxu0 0
    %1172 = vmatprep.subr.bf16.mxu0 0
    %1173 = vmatpush1.bf16.msra.mxu0 %v1126
    %1174 = vmatprep.subr.bf16.mxu0 0
    %1175 = vmatpush1.bf16.msra.mxu0 %v1125
    %1176 = vmatprep.subr.bf16.mxu0 0
    %1177 = vmatpush2.bf16.msra.mxu0 0
    %1178 = vmatprep.subr.bf16.mxu0 0
    %1179 = vmatpush2.bf16.msra.mxu0 0
    %1180 = vmatprep.subr.bf16.mxu0 0
    %1181 = vmatpush2.bf16.msra.mxu0 0
    %1182 = vmatprep.subr.bf16.mxu0 0
    %1183 = vmatpush2.bf16.msra.mxu0 0
    %1184 = vmatprep.subr.bf16.mxu0 0
    %1185 = vmatpush2.bf16.msra.mxu0 0
    %1186 = vmatprep.subr.bf16.mxu0 0
    %1187 = vmatpush2.bf16.msra.mxu0 0
    %1188 = vmatprep.subr.bf16.mxu0 0
    %1189 = vmatpush2.bf16.msra.mxu0 0
    %1190 = vmatprep.subr.bf16.mxu0 0
    %1191 = vmatpush2.bf16.msra.mxu0 0
    %1192 = vmatprep.mubr.bf16.mxu0 0
    %1193 = vmatmul.mubr.bf16.gmra.mxu0 %v1131
    %v1194 = vpop.f32.mrf.mxu0
    %v1195 = vadd.f32 %v1115, %v1194
    %v1196 = vpop.f32.mrf.mxu0
    %v1197 = vpop.f32.mrf.mxu0
    %v1198 = vadd.f32 %v1115, %v1197
    %v1199 = vpop.f32.mrf.mxu0
    %1200 = vmatprep.mubr.bf16.mxu0 0
    %1201 = vmatmul.mubr.bf16.gmra.mxu0 %v1134
    %v1202 = vpop.f32.mrf.mxu0
    %v1203 = vadd.f32 %v1115, %v1202
    %v1204 = vpop.f32.mrf.mxu0
    %v1205 = vpop.f32.mrf.mxu0
    %v1206 = vadd.f32 %v1115, %v1205
    %v1207 = vpop.f32.mrf.mxu0
    %1208 = vmatprep.mubr.bf16.mxu0 0
    %1209 = vmatmul.mubr.bf16.gmra.mxu0 %v1137
    %v1210 = vpop.f32.mrf.mxu0
    %v1211 = vadd.f32 %v1115, %v1210
    %v1212 = vpop.f32.mrf.mxu0
    %v1213 = vpop.f32.mrf.mxu0
    %v1214 = vadd.f32 %v1115, %v1213
    %v1215 = vpop.f32.mrf.mxu0
    %1216 = vmatprep.mubr.bf16.mxu0 0
    %1217 = vmatmul.mubr.bf16.gmra.mxu0 %v1140
    %v1218 = vpop.f32.mrf.mxu0
    %v1219 = vadd.f32 %v1115, %v1218
    %v1220 = vpop.f32.mrf.mxu0
    %v1221 = vpop.f32.mrf.mxu0
    %v1222 = vadd.f32 %v1115, %v1221
    %v1223 = vpop.f32.mrf.mxu0
    %1224 = vmatprep.mubr.bf16.mxu0 0
    %1225 = vmatmul.mubr.bf16.gmra.mxu0 %v1143
    %v1226 = vpop.f32.mrf.mxu0
    %v1227 = vadd.f32 %v1115, %v1226
    %v1228 = vpop.f32.mrf.mxu0
    %v1229 = vpop.f32.mrf.mxu0
    %v1230 = vadd.f32 %v1115, %v1229
    %v1231 = vpop.f32.mrf.mxu0
    %1232 = vmatprep.mubr.bf16.mxu0 0
    %1233 = vmatmul.mubr.bf16.gmra.mxu0 %v1146
    %v1234 = vpop.f32.mrf.mxu0
    %v1235 = vadd.f32 %v1115, %v1234
    %v1236 = vpop.f32.mrf.mxu0
    %v1237 = vpop.f32.mrf.mxu0
    %v1238 = vadd.f32 %v1115, %v1237
    %v1239 = vpop.f32.mrf.mxu0
    %1240 = vmatprep.mubr.bf16.mxu0 0
    %1241 = vmatmul.mubr.bf16.gmra.mxu0 %v1149
    %v1242 = vpop.f32.mrf.mxu0
    %v1243 = vadd.f32 %v1115, %v1242
    %v1244 = vpop.f32.mrf.mxu0
    %v1245 = vpop.f32.mrf.mxu0
    %v1246 = vadd.f32 %v1115, %v1245
    %v1247 = vpop.f32.mrf.mxu0
    %1248 = vmatprep.mubr.bf16.mxu0 0
    %1249 = vmatmul.mubr.bf16.gmra.mxu0 %v1152
    %v1250 = vpop.f32.mrf.mxu0
    %v1251 = vadd.f32 %v1115, %v1250
    %v1252 = vpop.f32.mrf.mxu0
    %v1253 = vpop.f32.mrf.mxu0
    %v1254 = vadd.f32 %v1115, %v1253
    %v1255 = vpop.f32.mrf.mxu0
    %1256 = vmatprep.mubr.bf16.mxu0 0
    %1257 = vmatmul.mubr.bf16.gmra.mxu0 %v1155
    %v1258 = vpop.f32.mrf.mxu0
    %v1259 = vadd.f32 %v1115, %v1258
    %v1260 = vpop.f32.mrf.mxu0
    %v1261 = vpop.f32.mrf.mxu0
    %v1262 = vadd.f32 %v1115, %v1261
    %v1263 = vpop.f32.mrf.mxu0
    %1264 = vmatprep.mubr.bf16.mxu0 0
    %1265 = vmatmul.mubr.bf16.gmra.mxu0 %v1158
    %v1266 = vpop.f32.mrf.mxu0
    %v1267 = vadd.f32 %v1115, %v1266
    %v1268 = vpop.f32.mrf.mxu0
    %v1269 = vpop.f32.mrf.mxu0
    %v1270 = vadd.f32 %v1115, %v1269
    %v1271 = vpop.f32.mrf.mxu0
    %1272 = vdwg.mxu0
    %v1273 = vld [vmem:[%s12] sm:$0x1]
    %v1275 = vlaneseq
    %v1276 = vshrl.u32 %v1275, 7
    %v1277 = vsub.s32 0, %v1276
    %v1278 = vrot.slane %v1273, %v1277
    %v1280 = vmul.f32 %v1059, %v1278
    %v1281 = vmul.f32 %v1060, %v1278
    %v1282 = vmul.f32 %v1073, %v1278
    %v1283 = vmul.f32 %v1075, %v1278
    %v1284 = vmul.f32 %v1061, %v1278
    %v1285 = vmul.f32 %v1080, %v1278
    %v1286 = vmul.f32 %v1062, %v1278
    %v1287 = vmul.f32 %v1063, %v1278
    %v1288 = vmul.f32 %v1064, %v1278
    %v1289 = vmul.f32 %v1087, %v1278
    %v1290 = vmul.f32 %v1089, %v1278
    %v1291 = vmul.f32 %v1065, %v1278
    %v1292 = vmul.f32 %v1094, %v1278
    %v1293 = vmul.f32 %v1066, %v1278
    %v1294 = vld [vmem:[%s13] sm:$0x1]
    %v1296 = vlaneseq
    %v1297 = vshrl.u32 %v1296, 7
    %v1298 = vsub.s32 0, %v1297
    %v1299 = vrot.slane %v1294, %v1298
    %v1301 = vadd.f32 %v1280, %v1299
    %v1302 = vadd.f32 %v1281, %v1299
    %v1303 = vadd.f32 %v1282, %v1299
    %v1304 = vadd.f32 %v1283, %v1299
    %v1305 = vadd.f32 %v1284, %v1299
    %v1306 = vadd.f32 %v1285, %v1299
    %v1307 = vadd.f32 %v1286, %v1299
    %v1308 = vadd.f32 %v1287, %v1299
    %v1309 = vadd.f32 %v1288, %v1299
    %v1310 = vadd.f32 %v1289, %v1299
    %v1311 = vadd.f32 %v1290, %v1299
    %v1312 = vadd.f32 %v1291, %v1299
    %v1313 = vadd.f32 %v1292, %v1299
    %v1314 = vadd.f32 %v1293, %v1299
    %v1315 = vpack.c.bf16 %v1198, %v1195
    %v1316 = vpack.c.bf16 %v1206, %v1203
    %v1317 = vpack.c.bf16 %v1214, %v1211
    %v1318 = vpack.c.bf16 %v1222, %v1219
    %v1319 = vpack.c.bf16 %v1230, %v1227
    %v1320 = vpack.c.bf16 %v1238, %v1235
    %v1321 = vpack.c.bf16 %v1246, %v1243
    %v1322 = vpack.c.bf16 %v1254, %v1251
    %v1323 = vpack.c.bf16 %v1262, %v1259
    %v1324 = vpack.c.bf16 %v1270, %v1267
    %v1325 = vld [vmem:[#allocation17] sm:$0xff]
    %v1326 = vld [vmem:[#allocation17 + $0x8] sm:$0xff]
    %v1328 = vsel %vm1129, %v1315, 0
    %1330 = vmatprep.subr.bf16.mxu0 0
    %1331 = vmatpush1.bf16.xpose.msra.mxu0 0
    %1332 = vmatprep.subr.bf16.mxu0 0
    %1333 = vmatpush1.bf16.xpose.msra.mxu0 0
    %1334 = vmatprep.subr.bf16.mxu0 0
    %1335 = vmatpush1.bf16.xpose.msra.mxu0 0
    %1336 = vmatprep.subr.bf16.mxu0 0
    %1337 = vmatpush1.bf16.xpose.msra.mxu0 0
    %1338 = vmatprep.subr.bf16.mxu0 0
    %1339 = vmatpush1.bf16.xpose.msra.mxu0 0
    %1340 = vmatprep.subr.bf16.mxu0 0
    %1341 = vmatpush1.bf16.xpose.msra.mxu0 0
    %1342 = vmatprep.subr.bf16.mxu0 0
    %1343 = vmatpush1.bf16.xpose.msra.mxu0 0
    %1344 = vmatprep.subr.bf16.mxu0 0
    %1345 = vmatpush1.bf16.xpose.msra.mxu0 %v1328
    %1346 = vmatprep.subr.bf16.mxu0 0
    %1347 = vmatpush2.bf16.xpose.msra.mxu0 0
    %1348 = vmatprep.subr.bf16.mxu0 0
    %1349 = vmatpush2.bf16.xpose.msra.mxu0 0
    %1350 = vmatprep.subr.bf16.mxu0 0
    %1351 = vmatpush2.bf16.xpose.msra.mxu0 0
    %1352 = vmatprep.subr.bf16.mxu0 0
    %1353 = vmatpush2.bf16.xpose.msra.mxu0 0
    %1354 = vmatprep.subr.bf16.mxu0 0
    %1355 = vmatpush2.bf16.xpose.msra.mxu0 0
    %1356 = vmatprep.subr.bf16.mxu0 0
    %1357 = vmatpush2.bf16.xpose.msra.mxu0 0
    %1358 = vmatprep.subr.bf16.mxu0 0
    %1359 = vmatpush2.bf16.xpose.msra.mxu0 0
    %1360 = vmatprep.subr.bf16.mxu0 0
    %1361 = vmatpush2.bf16.xpose.msra.mxu0 0
    %1362 = vmatprep.mubr.bf16.mxu0 0
    %1363 = vmatmul.mubr.bf16.gmra.mxu0 %v1328
    %v1364 = vpop.f32.mrf.mxu0
    %v1365 = vadd.f32 %v1325, %v1364
    %v1366 = vpop.f32.mrf.mxu0
    %v1367 = vpop.f32.mrf.mxu0
    %v1368 = vadd.f32 %v1326, %v1367
    %v1369 = vpop.f32.mrf.mxu0
    %1370 = vdwg.mxu0
    %v1372 = vsel %vm1129, %v1316, 0
    %1374 = vmatprep.subr.bf16.mxu0 0
    %1375 = vmatpush1.bf16.xpose.msra.mxu0 0
    %1376 = vmatprep.subr.bf16.mxu0 0
    %1377 = vmatpush1.bf16.xpose.msra.mxu0 0
    %1378 = vmatprep.subr.bf16.mxu0 0
    %1379 = vmatpush1.bf16.xpose.msra.mxu0 0
    %1380 = vmatprep.subr.bf16.mxu0 0
    %1381 = vmatpush1.bf16.xpose.msra.mxu0 0
    %1382 = vmatprep.subr.bf16.mxu0 0
    %1383 = vmatpush1.bf16.xpose.msra.mxu0 0
    %1384 = vmatprep.subr.bf16.mxu0 0
    %1385 = vmatpush1.bf16.xpose.msra.mxu0 0
    %1386 = vmatprep.subr.bf16.mxu0 0
    %1387 = vmatpush1.bf16.xpose.msra.mxu0 0
    %1388 = vmatprep.subr.bf16.mxu0 0
    %1389 = vmatpush1.bf16.xpose.msra.mxu0 %v1372
    %1390 = vmatprep.subr.bf16.mxu0 0
    %1391 = vmatpush2.bf16.xpose.msra.mxu0 0
    %1392 = vmatprep.subr.bf16.mxu0 0
    %1393 = vmatpush2.bf16.xpose.msra.mxu0 0
    %1394 = vmatprep.subr.bf16.mxu0 0
    %1395 = vmatpush2.bf16.xpose.msra.mxu0 0
    %1396 = vmatprep.subr.bf16.mxu0 0
    %1397 = vmatpush2.bf16.xpose.msra.mxu0 0
    %1398 = vmatprep.subr.bf16.mxu0 0
    %1399 = vmatpush2.bf16.xpose.msra.mxu0 0
    %1400 = vmatprep.subr.bf16.mxu0 0
    %1401 = vmatpush2.bf16.xpose.msra.mxu0 0
    %1402 = vmatprep.subr.bf16.mxu0 0
    %1403 = vmatpush2.bf16.xpose.msra.mxu0 0
    %1404 = vmatprep.subr.bf16.mxu0 0
    %1405 = vmatpush2.bf16.xpose.msra.mxu0 0
    %1406 = vmatprep.mubr.bf16.mxu0 0
    %1407 = vmatmul.mubr.bf16.gmra.mxu0 %v1372
    %v1408 = vpop.f32.mrf.mxu0
    %v1409 = vadd.f32 %v1325, %v1408
    %v1410 = vpop.f32.mrf.mxu0
    %v1411 = vpop.f32.mrf.mxu0
    %v1412 = vadd.f32 %v1326, %v1411
    %v1413 = vpop.f32.mrf.mxu0
    %1414 = vdwg.mxu0
    %v1416 = vsel %vm1129, %v1317, 0
    %1418 = vmatprep.subr.bf16.mxu0 0
    %1419 = vmatpush1.bf16.xpose.msra.mxu0 0
    %1420 = vmatprep.subr.bf16.mxu0 0
    %1421 = vmatpush1.bf16.xpose.msra.mxu0 0
    %1422 = vmatprep.subr.bf16.mxu0 0
    %1423 = vmatpush1.bf16.xpose.msra.mxu0 0
    %1424 = vmatprep.subr.bf16.mxu0 0
    %1425 = vmatpush1.bf16.xpose.msra.mxu0 0
    %1426 = vmatprep.subr.bf16.mxu0 0
    %1427 = vmatpush1.bf16.xpose.msra.mxu0 0
    %1428 = vmatprep.subr.bf16.mxu0 0
    %1429 = vmatpush1.bf16.xpose.msra.mxu0 0
    %1430 = vmatprep.subr.bf16.mxu0 0
    %1431 = vmatpush1.bf16.xpose.msra.mxu0 0
    %1432 = vmatprep.subr.bf16.mxu0 0
    %1433 = vmatpush1.bf16.xpose.msra.mxu0 %v1416
    %1434 = vmatprep.subr.bf16.mxu0 0
    %1435 = vmatpush2.bf16.xpose.msra.mxu0 0
    %1436 = vmatprep.subr.bf16.mxu0 0
    %1437 = vmatpush2.bf16.xpose.msra.mxu0 0
    %1438 = vmatprep.subr.bf16.mxu0 0
    %1439 = vmatpush2.bf16.xpose.msra.mxu0 0
    %1440 = vmatprep.subr.bf16.mxu0 0
    %1441 = vmatpush2.bf16.xpose.msra.mxu0 0
    %1442 = vmatprep.subr.bf16.mxu0 0
    %1443 = vmatpush2.bf16.xpose.msra.mxu0 0
    %1444 = vmatprep.subr.bf16.mxu0 0
    %1445 = vmatpush2.bf16.xpose.msra.mxu0 0
    %1446 = vmatprep.subr.bf16.mxu0 0
    %1447 = vmatpush2.bf16.xpose.msra.mxu0 0
    %1448 = vmatprep.subr.bf16.mxu0 0
    %1449 = vmatpush2.bf16.xpose.msra.mxu0 0
    %1450 = vmatprep.mubr.bf16.mxu0 0
    %1451 = vmatmul.mubr.bf16.gmra.mxu0 %v1416
    %v1452 = vpop.f32.mrf.mxu0
    %v1453 = vadd.f32 %v1325, %v1452
    %v1454 = vpop.f32.mrf.mxu0
    %v1455 = vpop.f32.mrf.mxu0
    %v1456 = vadd.f32 %v1326, %v1455
    %v1457 = vpop.f32.mrf.mxu0
    %1458 = vdwg.mxu0
    %v1460 = vsel %vm1129, %v1318, 0
    %1462 = vmatprep.subr.bf16.mxu0 0
    %1463 = vmatpush1.bf16.xpose.msra.mxu0 0
    %1464 = vmatprep.subr.bf16.mxu0 0
    %1465 = vmatpush1.bf16.xpose.msra.mxu0 0
    %1466 = vmatprep.subr.bf16.mxu0 0
    %1467 = vmatpush1.bf16.xpose.msra.mxu0 0
    %1468 = vmatprep.subr.bf16.mxu0 0
    %1469 = vmatpush1.bf16.xpose.msra.mxu0 0
    %1470 = vmatprep.subr.bf16.mxu0 0
    %1471 = vmatpush1.bf16.xpose.msra.mxu0 0
    %1472 = vmatprep.subr.bf16.mxu0 0
    %1473 = vmatpush1.bf16.xpose.msra.mxu0 0
    %1474 = vmatprep.subr.bf16.mxu0 0
    %1475 = vmatpush1.bf16.xpose.msra.mxu0 0
    %1476 = vmatprep.subr.bf16.mxu0 0
    %1477 = vmatpush1.bf16.xpose.msra.mxu0 %v1460
    %1478 = vmatprep.subr.bf16.mxu0 0
    %1479 = vmatpush2.bf16.xpose.msra.mxu0 0
    %1480 = vmatprep.subr.bf16.mxu0 0
    %1481 = vmatpush2.bf16.xpose.msra.mxu0 0
    %1482 = vmatprep.subr.bf16.mxu0 0
    %1483 = vmatpush2.bf16.xpose.msra.mxu0 0
    %1484 = vmatprep.subr.bf16.mxu0 0
    %1485 = vmatpush2.bf16.xpose.msra.mxu0 0
    %1486 = vmatprep.subr.bf16.mxu0 0
    %1487 = vmatpush2.bf16.xpose.msra.mxu0 0
    %1488 = vmatprep.subr.bf16.mxu0 0
    %1489 = vmatpush2.bf16.xpose.msra.mxu0 0
    %1490 = vmatprep.subr.bf16.mxu0 0
    %1491 = vmatpush2.bf16.xpose.msra.mxu0 0
    %1492 = vmatprep.subr.bf16.mxu0 0
    %1493 = vmatpush2.bf16.xpose.msra.mxu0 0
    %1494 = vmatprep.mubr.bf16.mxu0 0
    %1495 = vmatmul.mubr.bf16.gmra.mxu0 %v1460
    %v1496 = vpop.f32.mrf.mxu0
    %v1497 = vadd.f32 %v1325, %v1496
    %v1498 = vpop.f32.mrf.mxu0
    %v1499 = vpop.f32.mrf.mxu0
    %v1500 = vadd.f32 %v1326, %v1499
    %v1501 = vpop.f32.mrf.mxu0
    %1502 = vdwg.mxu0
    %v1504 = vsel %vm1129, %v1319, 0
    %1506 = vmatprep.subr.bf16.mxu0 0
    %1507 = vmatpush1.bf16.xpose.msra.mxu0 0
    %1508 = vmatprep.subr.bf16.mxu0 0
    %1509 = vmatpush1.bf16.xpose.msra.mxu0 0
    %1510 = vmatprep.subr.bf16.mxu0 0
    %1511 = vmatpush1.bf16.xpose.msra.mxu0 0
    %1512 = vmatprep.subr.bf16.mxu0 0
    %1513 = vmatpush1.bf16.xpose.msra.mxu0 0
    %1514 = vmatprep.subr.bf16.mxu0 0
    %1515 = vmatpush1.bf16.xpose.msra.mxu0 0
    %1516 = vmatprep.subr.bf16.mxu0 0
    %1517 = vmatpush1.bf16.xpose.msra.mxu0 0
    %1518 = vmatprep.subr.bf16.mxu0 0
    %1519 = vmatpush1.bf16.xpose.msra.mxu0 0
    %1520 = vmatprep.subr.bf16.mxu0 0
    %1521 = vmatpush1.bf16.xpose.msra.mxu0 %v1504
    %1522 = vmatprep.subr.bf16.mxu0 0
    %1523 = vmatpush2.bf16.xpose.msra.mxu0 0
    %1524 = vmatprep.subr.bf16.mxu0 0
    %1525 = vmatpush2.bf16.xpose.msra.mxu0 0
    %1526 = vmatprep.subr.bf16.mxu0 0
    %1527 = vmatpush2.bf16.xpose.msra.mxu0 0
    %1528 = vmatprep.subr.bf16.mxu0 0
    %1529 = vmatpush2.bf16.xpose.msra.mxu0 0
    %1530 = vmatprep.subr.bf16.mxu0 0
    %1531 = vmatpush2.bf16.xpose.msra.mxu0 0
    %1532 = vmatprep.subr.bf16.mxu0 0
    %1533 = vmatpush2.bf16.xpose.msra.mxu0 0
    %1534 = vmatprep.subr.bf16.mxu0 0
    %1535 = vmatpush2.bf16.xpose.msra.mxu0 0
    %1536 = vmatprep.subr.bf16.mxu0 0
    %1537 = vmatpush2.bf16.xpose.msra.mxu0 0
    %1538 = vmatprep.mubr.bf16.mxu0 0
    %1539 = vmatmul.mubr.bf16.gmra.mxu0 %v1504
    %v1540 = vpop.f32.mrf.mxu0
    %v1541 = vadd.f32 %v1325, %v1540
    %v1542 = vpop.f32.mrf.mxu0
    %v1543 = vpop.f32.mrf.mxu0
    %v1544 = vadd.f32 %v1326, %v1543
    %v1545 = vpop.f32.mrf.mxu0
    %1546 = vdwg.mxu0
    %v1548 = vsel %vm1129, %v1320, 0
    %1550 = vmatprep.subr.bf16.mxu0 0
    %1551 = vmatpush1.bf16.xpose.msra.mxu0 0
    %1552 = vmatprep.subr.bf16.mxu0 0
    %1553 = vmatpush1.bf16.xpose.msra.mxu0 0
    %1554 = vmatprep.subr.bf16.mxu0 0
    %1555 = vmatpush1.bf16.xpose.msra.mxu0 0
    %1556 = vmatprep.subr.bf16.mxu0 0
    %1557 = vmatpush1.bf16.xpose.msra.mxu0 0
    %1558 = vmatprep.subr.bf16.mxu0 0
    %1559 = vmatpush1.bf16.xpose.msra.mxu0 0
    %1560 = vmatprep.subr.bf16.mxu0 0
    %1561 = vmatpush1.bf16.xpose.msra.mxu0 0
    %1562 = vmatprep.subr.bf16.mxu0 0
    %1563 = vmatpush1.bf16.xpose.msra.mxu0 0
    %1564 = vmatprep.subr.bf16.mxu0 0
    %1565 = vmatpush1.bf16.xpose.msra.mxu0 %v1548
    %1566 = vmatprep.subr.bf16.mxu0 0
    %1567 = vmatpush2.bf16.xpose.msra.mxu0 0
    %1568 = vmatprep.subr.bf16.mxu0 0
    %1569 = vmatpush2.bf16.xpose.msra.mxu0 0
    %1570 = vmatprep.subr.bf16.mxu0 0
    %1571 = vmatpush2.bf16.xpose.msra.mxu0 0
    %1572 = vmatprep.subr.bf16.mxu0 0
    %1573 = vmatpush2.bf16.xpose.msra.mxu0 0
    %1574 = vmatprep.subr.bf16.mxu0 0
    %1575 = vmatpush2.bf16.xpose.msra.mxu0 0
    %1576 = vmatprep.subr.bf16.mxu0 0
    %1577 = vmatpush2.bf16.xpose.msra.mxu0 0
    %1578 = vmatprep.subr.bf16.mxu0 0
    %1579 = vmatpush2.bf16.xpose.msra.mxu0 0
    %1580 = vmatprep.subr.bf16.mxu0 0
    %1581 = vmatpush2.bf16.xpose.msra.mxu0 0
    %1582 = vmatprep.mubr.bf16.mxu0 0
    %1583 = vmatmul.mubr.bf16.gmra.mxu0 %v1548
    %v1584 = vpop.f32.mrf.mxu0
    %v1585 = vadd.f32 %v1325, %v1584
    %v1586 = vpop.f32.mrf.mxu0
    %v1587 = vpop.f32.mrf.mxu0
    %v1588 = vadd.f32 %v1326, %v1587
    %v1589 = vpop.f32.mrf.mxu0
    %1590 = vdwg.mxu0
    %v1592 = vsel %vm1129, %v1321, 0
    %1594 = vmatprep.subr.bf16.mxu0 0
    %1595 = vmatpush1.bf16.xpose.msra.mxu0 0
    %1596 = vmatprep.subr.bf16.mxu0 0
    %1597 = vmatpush1.bf16.xpose.msra.mxu0 0
    %1598 = vmatprep.subr.bf16.mxu0 0
    %1599 = vmatpush1.bf16.xpose.msra.mxu0 0
    %1600 = vmatprep.subr.bf16.mxu0 0
    %1601 = vmatpush1.bf16.xpose.msra.mxu0 0
    %1602 = vmatprep.subr.bf16.mxu0 0
    %1603 = vmatpush1.bf16.xpose.msra.mxu0 0
    %1604 = vmatprep.subr.bf16.mxu0 0
    %1605 = vmatpush1.bf16.xpose.msra.mxu0 0
    %1606 = vmatprep.subr.bf16.mxu0 0
    %1607 = vmatpush1.bf16.xpose.msra.mxu0 0
    %1608 = vmatprep.subr.bf16.mxu0 0
    %1609 = vmatpush1.bf16.xpose.msra.mxu0 %v1592
    %1610 = vmatprep.subr.bf16.mxu0 0
    %1611 = vmatpush2.bf16.xpose.msra.mxu0 0
    %1612 = vmatprep.subr.bf16.mxu0 0
    %1613 = vmatpush2.bf16.xpose.msra.mxu0 0
    %1614 = vmatprep.subr.bf16.mxu0 0
    %1615 = vmatpush2.bf16.xpose.msra.mxu0 0
    %1616 = vmatprep.subr.bf16.mxu0 0
    %1617 = vmatpush2.bf16.xpose.msra.mxu0 0
    %1618 = vmatprep.subr.bf16.mxu0 0
    %1619 = vmatpush2.bf16.xpose.msra.mxu0 0
    %1620 = vmatprep.subr.bf16.mxu0 0
    %1621 = vmatpush2.bf16.xpose.msra.mxu0 0
    %1622 = vmatprep.subr.bf16.mxu0 0
    %1623 = vmatpush2.bf16.xpose.msra.mxu0 0
    %1624 = vmatprep.subr.bf16.mxu0 0
    %1625 = vmatpush2.bf16.xpose.msra.mxu0 0
    %1626 = vmatprep.mubr.bf16.mxu0 0
    %1627 = vmatmul.mubr.bf16.gmra.mxu0 %v1592
    %v1628 = vpop.f32.mrf.mxu0
    %v1629 = vadd.f32 %v1325, %v1628
    %v1630 = vpop.f32.mrf.mxu0
    %v1631 = vpop.f32.mrf.mxu0
    %v1632 = vadd.f32 %v1326, %v1631
    %v1633 = vpop.f32.mrf.mxu0
    %1634 = vdwg.mxu0
    %v1636 = vsel %vm1129, %v1322, 0
    %1638 = vmatprep.subr.bf16.mxu0 0
    %1639 = vmatpush1.bf16.xpose.msra.mxu0 0
    %1640 = vmatprep.subr.bf16.mxu0 0
    %1641 = vmatpush1.bf16.xpose.msra.mxu0 0
    %1642 = vmatprep.subr.bf16.mxu0 0
    %1643 = vmatpush1.bf16.xpose.msra.mxu0 0
    %1644 = vmatprep.subr.bf16.mxu0 0
    %1645 = vmatpush1.bf16.xpose.msra.mxu0 0
    %1646 = vmatprep.subr.bf16.mxu0 0
    %1647 = vmatpush1.bf16.xpose.msra.mxu0 0
    %1648 = vmatprep.subr.bf16.mxu0 0
    %1649 = vmatpush1.bf16.xpose.msra.mxu0 0
    %1650 = vmatprep.subr.bf16.mxu0 0
    %1651 = vmatpush1.bf16.xpose.msra.mxu0 0
    %1652 = vmatprep.subr.bf16.mxu0 0
    %1653 = vmatpush1.bf16.xpose.msra.mxu0 %v1636
    %1654 = vmatprep.subr.bf16.mxu0 0
    %1655 = vmatpush2.bf16.xpose.msra.mxu0 0
    %1656 = vmatprep.subr.bf16.mxu0 0
    %1657 = vmatpush2.bf16.xpose.msra.mxu0 0
    %1658 = vmatprep.subr.bf16.mxu0 0
    %1659 = vmatpush2.bf16.xpose.msra.mxu0 0
    %1660 = vmatprep.subr.bf16.mxu0 0
    %1661 = vmatpush2.bf16.xpose.msra.mxu0 0
    %1662 = vmatprep.subr.bf16.mxu0 0
    %1663 = vmatpush2.bf16.xpose.msra.mxu0 0
    %1664 = vmatprep.subr.bf16.mxu0 0
    %1665 = vmatpush2.bf16.xpose.msra.mxu0 0
    %1666 = vmatprep.subr.bf16.mxu0 0
    %1667 = vmatpush2.bf16.xpose.msra.mxu0 0
    %1668 = vmatprep.subr.bf16.mxu0 0
    %1669 = vmatpush2.bf16.xpose.msra.mxu0 0
    %1670 = vmatprep.mubr.bf16.mxu0 0
    %1671 = vmatmul.mubr.bf16.gmra.mxu0 %v1636
    %v1672 = vpop.f32.mrf.mxu0
    %v1673 = vadd.f32 %v1325, %v1672
    %v1674 = vpop.f32.mrf.mxu0
    %v1675 = vpop.f32.mrf.mxu0
    %v1676 = vadd.f32 %v1326, %v1675
    %v1677 = vpop.f32.mrf.mxu0
    %1678 = vdwg.mxu0
    %v1680 = vsel %vm1129, %v1323, 0
    %1682 = vmatprep.subr.bf16.mxu0 0
    %1683 = vmatpush1.bf16.xpose.msra.mxu0 0
    %1684 = vmatprep.subr.bf16.mxu0 0
    %1685 = vmatpush1.bf16.xpose.msra.mxu0 0
    %1686 = vmatprep.subr.bf16.mxu0 0
    %1687 = vmatpush1.bf16.xpose.msra.mxu0 0
    %1688 = vmatprep.subr.bf16.mxu0 0
    %1689 = vmatpush1.bf16.xpose.msra.mxu0 0
    %1690 = vmatprep.subr.bf16.mxu0 0
    %1691 = vmatpush1.bf16.xpose.msra.mxu0 0
    %1692 = vmatprep.subr.bf16.mxu0 0
    %1693 = vmatpush1.bf16.xpose.msra.mxu0 0
    %1694 = vmatprep.subr.bf16.mxu0 0
    %1695 = vmatpush1.bf16.xpose.msra.mxu0 0
    %1696 = vmatprep.subr.bf16.mxu0 0
    %1697 = vmatpush1.bf16.xpose.msra.mxu0 %v1680
    %1698 = vmatprep.subr.bf16.mxu0 0
    %1699 = vmatpush2.bf16.xpose.msra.mxu0 0
    %1700 = vmatprep.subr.bf16.mxu0 0
    %1701 = vmatpush2.bf16.xpose.msra.mxu0 0
    %1702 = vmatprep.subr.bf16.mxu0 0
    %1703 = vmatpush2.bf16.xpose.msra.mxu0 0
    %1704 = vmatprep.subr.bf16.mxu0 0
    %1705 = vmatpush2.bf16.xpose.msra.mxu0 0
    %1706 = vmatprep.subr.bf16.mxu0 0
    %1707 = vmatpush2.bf16.xpose.msra.mxu0 0
    %1708 = vmatprep.subr.bf16.mxu0 0
    %1709 = vmatpush2.bf16.xpose.msra.mxu0 0
    %1710 = vmatprep.subr.bf16.mxu0 0
    %1711 = vmatpush2.bf16.xpose.msra.mxu0 0
    %1712 = vmatprep.subr.bf16.mxu0 0
    %1713 = vmatpush2.bf16.xpose.msra.mxu0 0
    %1714 = vmatprep.mubr.bf16.mxu0 0
    %1715 = vmatmul.mubr.bf16.gmra.mxu0 %v1680
    %v1716 = vpop.f32.mrf.mxu0
    %v1717 = vadd.f32 %v1325, %v1716
    %v1718 = vpop.f32.mrf.mxu0
    %v1719 = vpop.f32.mrf.mxu0
    %v1720 = vadd.f32 %v1326, %v1719
    %v1721 = vpop.f32.mrf.mxu0
    %1722 = vdwg.mxu0
    %v1724 = vsel %vm1129, %v1324, 0
    %1726 = vmatprep.subr.bf16.mxu0 0
    %1727 = vmatpush1.bf16.xpose.msra.mxu0 0
    %1728 = vmatprep.subr.bf16.mxu0 0
    %1729 = vmatpush1.bf16.xpose.msra.mxu0 0
    %1730 = vmatprep.subr.bf16.mxu0 0
    %1731 = vmatpush1.bf16.xpose.msra.mxu0 0
    %1732 = vmatprep.subr.bf16.mxu0 0
    %1733 = vmatpush1.bf16.xpose.msra.mxu0 0
    %1734 = vmatprep.subr.bf16.mxu0 0
    %1735 = vmatpush1.bf16.xpose.msra.mxu0 0
    %1736 = vmatprep.subr.bf16.mxu0 0
    %1737 = vmatpush1.bf16.xpose.msra.mxu0 0
    %1738 = vmatprep.subr.bf16.mxu0 0
    %1739 = vmatpush1.bf16.xpose.msra.mxu0 0
    %1740 = vmatprep.subr.bf16.mxu0 0
    %1741 = vmatpush1.bf16.xpose.msra.mxu0 %v1724
    %1742 = vmatprep.subr.bf16.mxu0 0
    %1743 = vmatpush2.bf16.xpose.msra.mxu0 0
    %1744 = vmatprep.subr.bf16.mxu0 0
    %1745 = vmatpush2.bf16.xpose.msra.mxu0 0
    %1746 = vmatprep.subr.bf16.mxu0 0
    %1747 = vmatpush2.bf16.xpose.msra.mxu0 0
    %1748 = vmatprep.subr.bf16.mxu0 0
    %1749 = vmatpush2.bf16.xpose.msra.mxu0 0
    %1750 = vmatprep.subr.bf16.mxu0 0
    %1751 = vmatpush2.bf16.xpose.msra.mxu0 0
    %1752 = vmatprep.subr.bf16.mxu0 0
    %1753 = vmatpush2.bf16.xpose.msra.mxu0 0
    %1754 = vmatprep.subr.bf16.mxu0 0
    %1755 = vmatpush2.bf16.xpose.msra.mxu0 0
    %1756 = vmatprep.subr.bf16.mxu0 0
    %1757 = vmatpush2.bf16.xpose.msra.mxu0 0
    %1758 = vmatprep.mubr.bf16.mxu0 0
    %1759 = vmatmul.mubr.bf16.gmra.mxu0 %v1724
    %v1760 = vpop.f32.mrf.mxu0
    %v1761 = vadd.f32 %v1325, %v1760
    %v1762 = vpop.f32.mrf.mxu0
    %v1763 = vpop.f32.mrf.mxu0
    %v1764 = vadd.f32 %v1326, %v1763
    %v1765 = vpop.f32.mrf.mxu0
    %1766 = vdwg.mxu0
    %vm1767 = vcmp.gt.f32.partialorder %v1365, 0.0
    %vm1768 = vcmp.gt.f32.partialorder %v1368, 0.0
    %vm1769 = vcmp.gt.f32.partialorder %v1409, 0.0
    %vm1770 = vcmp.gt.f32.partialorder %v1412, 0.0
    %vm1771 = vcmp.gt.f32.partialorder %v1453, 0.0
    %vm1772 = vcmp.gt.f32.partialorder %v1456, 0.0
    %vm1773 = vcmp.gt.f32.partialorder %v1497, 0.0
    %vm1774 = vcmp.gt.f32.partialorder %v1500, 0.0
    %vm1775 = vcmp.gt.f32.partialorder %v1541, 0.0
    %vm1776 = vcmp.gt.f32.partialorder %v1544, 0.0
    %vm1777 = vcmp.gt.f32.partialorder %v1585, 0.0
    %vm1778 = vcmp.gt.f32.partialorder %v1588, 0.0
    %vm1779 = vcmp.gt.f32.partialorder %v1629, 0.0
    %vm1780 = vcmp.gt.f32.partialorder %v1632, 0.0
    %vm1781 = vcmp.gt.f32.partialorder %v1673, 0.0
    %vm1782 = vcmp.gt.f32.partialorder %v1676, 0.0
    %vm1783 = vcmp.gt.f32.partialorder %v1717, 0.0
    %vm1784 = vcmp.gt.f32.partialorder %v1720, 0.0
    %vm1785 = vcmp.gt.f32.partialorder %v1761, 0.0
    %vm1786 = vcmp.gt.f32.partialorder %v1764, 0.0
    %v1787 = vmul.f32 %v1365, 0.01
    %v1788 = vmul.f32 %v1368, 0.01
    %v1789 = vmul.f32 %v1409, 0.01
    %v1790 = vmul.f32 %v1412, 0.01
    %v1791 = vmul.f32 %v1453, 0.01
    %v1792 = vmul.f32 %v1456, 0.01
    %v1793 = vmul.f32 %v1497, 0.01
    %v1794 = vmul.f32 %v1500, 0.01
    %v1795 = vmul.f32 %v1541, 0.01
    %v1796 = vmul.f32 %v1544, 0.01
    %v1797 = vmul.f32 %v1585, 0.01
    %v1798 = vmul.f32 %v1588, 0.01
    %v1799 = vmul.f32 %v1629, 0.01
    %v1800 = vmul.f32 %v1632, 0.01
    %v1801 = vmul.f32 %v1673, 0.01
    %v1802 = vmul.f32 %v1676, 0.01
    %v1803 = vmul.f32 %v1717, 0.01
    %v1804 = vmul.f32 %v1720, 0.01
    %v1805 = vmul.f32 %v1761, 0.01
    %v1806 = vmul.f32 %v1764, 0.01
    %v1807 = vsel %vm1767, %v1365, %v1787
    %v1808 = vsel %vm1768, %v1368, %v1788
    %v1809 = vsel %vm1769, %v1409, %v1789
    %v1810 = vsel %vm1770, %v1412, %v1790
    %v1811 = vsel %vm1771, %v1453, %v1791
    %v1812 = vsel %vm1772, %v1456, %v1792
    %v1813 = vsel %vm1773, %v1497, %v1793
    %v1814 = vsel %vm1774, %v1500, %v1794
    %v1815 = vsel %vm1775, %v1541, %v1795
    %v1816 = vsel %vm1776, %v1544, %v1796
    %v1817 = vsel %vm1777, %v1585, %v1797
    %v1818 = vsel %vm1778, %v1588, %v1798
    %v1819 = vsel %vm1779, %v1629, %v1799
    %v1820 = vsel %vm1780, %v1632, %v1800
    %v1821 = vsel %vm1781, %v1673, %v1801
    %v1822 = vsel %vm1782, %v1676, %v1802
    %v1823 = vsel %vm1783, %v1717, %v1803
    %v1824 = vsel %vm1784, %v1720, %v1804
    %v1825 = vsel %vm1785, %v1761, %v1805
    %v1826 = vsel %vm1786, %v1764, %v1806
    %v1827 = vsel %vm259, %v1807, -inf
    %1828 = vmax.xlane.f32.xlu0 %v1827
    %v1829 = vpop.xlane.xlu0 %1828
    %v1830 = vsel %vm259, %v1808, -inf
    %1831 = vmax.xlane.f32.xlu0 %v1830
    %v1832 = vpop.xlane.xlu0 %1831
    %v1833 = vsel %vm259, %v1809, -inf
    %1834 = vmax.xlane.f32.xlu0 %v1833
    %v1835 = vpop.xlane.xlu0 %1834
    %v1836 = vsel %vm259, %v1810, -inf
    %1837 = vmax.xlane.f32.xlu0 %v1836
    %v1838 = vpop.xlane.xlu0 %1837
    %v1839 = vsel %vm259, %v1811, -inf
    %1840 = vmax.xlane.f32.xlu0 %v1839
    %v1841 = vpop.xlane.xlu0 %1840
    %v1842 = vsel %vm259, %v1812, -inf
    %1843 = vmax.xlane.f32.xlu0 %v1842
    %v1844 = vpop.xlane.xlu0 %1843
    %v1845 = vsel %vm259, %v1813, -inf
    %1846 = vmax.xlane.f32.xlu0 %v1845
    %v1847 = vpop.xlane.xlu0 %1846
    %v1848 = vsel %vm259, %v1814, -inf
    %1849 = vmax.xlane.f32.xlu0 %v1848
    %v1850 = vpop.xlane.xlu0 %1849
    %v1851 = vsel %vm259, %v1815, -inf
    %1852 = vmax.xlane.f32.xlu0 %v1851
    %v1853 = vpop.xlane.xlu0 %1852
    %v1854 = vsel %vm259, %v1816, -inf
    %1855 = vmax.xlane.f32.xlu0 %v1854
    %v1856 = vpop.xlane.xlu0 %1855
    %v1857 = vsel %vm259, %v1817, -inf
    %1858 = vmax.xlane.f32.xlu0 %v1857
    %v1859 = vpop.xlane.xlu0 %1858
    %v1860 = vsel %vm259, %v1818, -inf
    %1861 = vmax.xlane.f32.xlu0 %v1860
    %v1862 = vpop.xlane.xlu0 %1861
    %v1863 = vsel %vm259, %v1819, -inf
    %1864 = vmax.xlane.f32.xlu0 %v1863
    %v1865 = vpop.xlane.xlu0 %1864
    %v1866 = vsel %vm259, %v1820, -inf
    %1867 = vmax.xlane.f32.xlu0 %v1866
    %v1868 = vpop.xlane.xlu0 %1867
    %v1869 = vsel %vm259, %v1821, -inf
    %1870 = vmax.xlane.f32.xlu0 %v1869
    %v1871 = vpop.xlane.xlu0 %1870
    %v1872 = vsel %vm259, %v1822, -inf
    %1873 = vmax.xlane.f32.xlu0 %v1872
    %v1874 = vpop.xlane.xlu0 %1873
    %v1875 = vsel %vm259, %v1823, -inf
    %1876 = vmax.xlane.f32.xlu0 %v1875
    %v1877 = vpop.xlane.xlu0 %1876
    %v1878 = vsel %vm259, %v1824, -inf
    %1879 = vmax.xlane.f32.xlu0 %v1878
    %v1880 = vpop.xlane.xlu0 %1879
    %v1881 = vsel %vm259, %v1825, -inf
    %1882 = vmax.xlane.f32.xlu0 %v1881
    %v1883 = vpop.xlane.xlu0 %1882
    %v1884 = vsel %vm259, %v1826, -inf
    %1885 = vmax.xlane.f32.xlu0 %v1884
    %v1886 = vpop.xlane.xlu0 %1885
    %v1887 = vsub.f32 %v1807, %v1829
    %v1888 = vsub.f32 %v1808, %v1832
    %v1889 = vsub.f32 %v1809, %v1835
    %v1890 = vsub.f32 %v1810, %v1838
    %v1891 = vsub.f32 %v1811, %v1841
    %v1892 = vsub.f32 %v1812, %v1844
    %v1893 = vsub.f32 %v1813, %v1847
    %v1894 = vsub.f32 %v1814, %v1850
    %v1895 = vsub.f32 %v1815, %v1853
    %v1896 = vsub.f32 %v1816, %v1856
    %v1897 = vsub.f32 %v1817, %v1859
    %v1898 = vsub.f32 %v1818, %v1862
    %v1899 = vsub.f32 %v1819, %v1865
    %v1900 = vsub.f32 %v1820, %v1868
    %v1901 = vsub.f32 %v1821, %v1871
    %v1902 = vsub.f32 %v1822, %v1874
    %v1903 = vsub.f32 %v1823, %v1877
    %v1904 = vsub.f32 %v1824, %v1880
    %v1905 = vsub.f32 %v1825, %v1883
    %v1906 = vsub.f32 %v1826, %v1886
    %v1907 = vmul.f32 %v1887, 1.442695
    %v1908 = vpow.pop %v1907
    %v1909 = vmul.f32 %v1888, 1.442695
    %v1910 = vpow.pop %v1909
    %v1911 = vmul.f32 %v1889, 1.442695
    %v1912 = vpow.pop %v1911
    %v1913 = vmul.f32 %v1890, 1.442695
    %v1914 = vpow.pop %v1913
    %v1915 = vmul.f32 %v1891, 1.442695
    %v1916 = vpow.pop %v1915
    %v1917 = vmul.f32 %v1892, 1.442695
    %v1918 = vpow.pop %v1917
    %v1919 = vmul.f32 %v1893, 1.442695
    %v1920 = vpow.pop %v1919
    %v1921 = vmul.f32 %v1894, 1.442695
    %v1922 = vpow.pop %v1921
    %v1923 = vmul.f32 %v1895, 1.442695
    %v1924 = vpow.pop %v1923
    %v1925 = vmul.f32 %v1896, 1.442695
    %v1926 = vpow.pop %v1925
    %v1927 = vmul.f32 %v1897, 1.442695
    %v1928 = vpow.pop %v1927
    %v1929 = vmul.f32 %v1898, 1.442695
    %v1930 = vpow.pop %v1929
    %v1931 = vmul.f32 %v1899, 1.442695
    %v1932 = vpow.pop %v1931
    %v1933 = vmul.f32 %v1900, 1.442695
    %v1934 = vpow.pop %v1933
    %v1935 = vmul.f32 %v1901, 1.442695
    %v1936 = vpow.pop %v1935
    %v1937 = vmul.f32 %v1902, 1.442695
    %v1938 = vpow.pop %v1937
    %v1939 = vmul.f32 %v1903, 1.442695
    %v1940 = vpow.pop %v1939
    %v1941 = vmul.f32 %v1904, 1.442695
    %v1942 = vpow.pop %v1941
    %v1943 = vmul.f32 %v1905, 1.442695
    %v1944 = vpow.pop %v1943
    %v1945 = vmul.f32 %v1906, 1.442695
    %v1946 = vpow.pop %v1945
    %v1947 = vsel %vm259, %v1908, 0.0
    %1948 = vadd.xlane.f32.xlu0 %v1947
    %v1949 = vpop.xlane.xlu0 %1948
    %v1950 = vsel %vm259, %v1910, 0.0
    %1951 = vadd.xlane.f32.xlu0 %v1950
    %v1952 = vpop.xlane.xlu0 %1951
    %v1953 = vsel %vm259, %v1912, 0.0
    %1954 = vadd.xlane.f32.xlu0 %v1953
    %v1955 = vpop.xlane.xlu0 %1954
    %v1956 = vsel %vm259, %v1914, 0.0
    %1957 = vadd.xlane.f32.xlu0 %v1956
    %v1958 = vpop.xlane.xlu0 %1957
    %v1959 = vsel %vm259, %v1916, 0.0
    %1960 = vadd.xlane.f32.xlu0 %v1959
    %v1961 = vpop.xlane.xlu0 %1960
    %v1962 = vsel %vm259, %v1918, 0.0
    %1963 = vadd.xlane.f32.xlu0 %v1962
    %v1964 = vpop.xlane.xlu0 %1963
    %v1965 = vsel %vm259, %v1920, 0.0
    %1966 = vadd.xlane.f32.xlu0 %v1965
    %v1967 = vpop.xlane.xlu0 %1966
    %v1968 = vsel %vm259, %v1922, 0.0
    %1969 = vadd.xlane.f32.xlu0 %v1968
    %v1970 = vpop.xlane.xlu0 %1969
    %v1971 = vsel %vm259, %v1924, 0.0
    %1972 = vadd.xlane.f32.xlu0 %v1971
    %v1973 = vpop.xlane.xlu0 %1972
    %v1974 = vsel %vm259, %v1926, 0.0
    %1975 = vadd.xlane.f32.xlu0 %v1974
    %v1976 = vpop.xlane.xlu0 %1975
    %v1977 = vsel %vm259, %v1928, 0.0
    %1978 = vadd.xlane.f32.xlu0 %v1977
    %v1979 = vpop.xlane.xlu0 %1978
    %v1980 = vsel %vm259, %v1930, 0.0
    %1981 = vadd.xlane.f32.xlu0 %v1980
    %v1982 = vpop.xlane.xlu0 %1981
    %v1983 = vsel %vm259, %v1932, 0.0
    %1984 = vadd.xlane.f32.xlu0 %v1983
    %v1985 = vpop.xlane.xlu0 %1984
    %v1986 = vsel %vm259, %v1934, 0.0
    %1987 = vadd.xlane.f32.xlu0 %v1986
    %v1988 = vpop.xlane.xlu0 %1987
    %v1989 = vsel %vm259, %v1936, 0.0
    %1990 = vadd.xlane.f32.xlu0 %v1989
    %v1991 = vpop.xlane.xlu0 %1990
    %v1992 = vsel %vm259, %v1938, 0.0
    %1993 = vadd.xlane.f32.xlu0 %v1992
    %v1994 = vpop.xlane.xlu0 %1993
    %v1995 = vsel %vm259, %v1940, 0.0
    %1996 = vadd.xlane.f32.xlu0 %v1995
    %v1997 = vpop.xlane.xlu0 %1996
    %v1998 = vsel %vm259, %v1942, 0.0
    %1999 = vadd.xlane.f32.xlu0 %v1998
    %v2000 = vpop.xlane.xlu0 %1999
    %v2001 = vsel %vm259, %v1944, 0.0
    %2002 = vadd.xlane.f32.xlu0 %v2001
    %v2003 = vpop.xlane.xlu0 %2002
    %v2004 = vsel %vm259, %v1946, 0.0
    %2005 = vadd.xlane.f32.xlu0 %v2004
    %v2006 = vpop.xlane.xlu0 %2005
    %v2007 = vrcp.pop %v1949
    %v2008 = vrcp.pop %v1952
    %v2009 = vrcp.pop %v1955
    %v2010 = vrcp.pop %v1958
    %v2011 = vrcp.pop %v1961
    %v2012 = vrcp.pop %v1964
    %v2013 = vrcp.pop %v1967
    %v2014 = vrcp.pop %v1970
    %v2015 = vrcp.pop %v1973
    %v2016 = vrcp.pop %v1976
    %v2017 = vrcp.pop %v1979
    %v2018 = vrcp.pop %v1982
    %v2019 = vrcp.pop %v1985
    %v2020 = vrcp.pop %v1988
    %v2021 = vrcp.pop %v1991
    %v2022 = vrcp.pop %v1994
    %v2023 = vrcp.pop %v1997
    %v2024 = vrcp.pop %v2000
    %v2025 = vrcp.pop %v2003
    %v2026 = vrcp.pop %v2006
    %v2027 = vmul.f32 %v1908, %v2007
    %v2028 = vmul.f32 %v1910, %v2008
    %v2029 = vmul.f32 %v1912, %v2009
    %v2030 = vmul.f32 %v1914, %v2010
    %v2031 = vmul.f32 %v1916, %v2011
    %v2032 = vmul.f32 %v1918, %v2012
    %v2033 = vmul.f32 %v1920, %v2013
    %v2034 = vmul.f32 %v1922, %v2014
    %v2035 = vmul.f32 %v1924, %v2015
    %v2036 = vmul.f32 %v1926, %v2016
    %v2037 = vmul.f32 %v1928, %v2017
    %v2038 = vmul.f32 %v1930, %v2018
    %v2039 = vmul.f32 %v1932, %v2019
    %v2040 = vmul.f32 %v1934, %v2020
    %v2041 = vmul.f32 %v1936, %v2021
    %v2042 = vmul.f32 %v1938, %v2022
    %v2043 = vmul.f32 %v1940, %v2023
    %v2044 = vmul.f32 %v1942, %v2024
    %v2045 = vmul.f32 %v1944, %v2025
    %v2046 = vmul.f32 %v1946, %v2026
    %v2047 = vld [vmem:[#allocation19] sm:$0xff]
    %v2048 = vld [vmem:[#allocation19 + $0x8] sm:$0xff]
    %v2049 = vmul.f32 %v2027, %v2047
    %v2050 = vmul.f32 %v2028, %v2048
    %v2051 = vmul.f32 %v2029, %v2047
    %v2052 = vmul.f32 %v2030, %v2048
    %v2053 = vmul.f32 %v2031, %v2047
    %v2054 = vmul.f32 %v2032, %v2048
    %v2055 = vmul.f32 %v2033, %v2047
    %v2056 = vmul.f32 %v2034, %v2048
    %v2057 = vmul.f32 %v2035, %v2047
    %v2058 = vmul.f32 %v2036, %v2048
    %v2059 = vmul.f32 %v2037, %v2047
    %v2060 = vmul.f32 %v2038, %v2048
    %v2061 = vmul.f32 %v2039, %v2047
    %v2062 = vmul.f32 %v2040, %v2048
    %v2063 = vmul.f32 %v2041, %v2047
    %v2064 = vmul.f32 %v2042, %v2048
    %v2065 = vmul.f32 %v2043, %v2047
    %v2066 = vmul.f32 %v2044, %v2048
    %v2067 = vmul.f32 %v2045, %v2047
    %v2068 = vmul.f32 %v2046, %v2048
    %v2069 = vpack.c.bf16 %v2050, %v2049
    %v2070 = vpack.c.bf16 %v2052, %v2051
    %v2071 = vpack.c.bf16 %v2054, %v2053
    %v2072 = vpack.c.bf16 %v2056, %v2055
    %v2073 = vpack.c.bf16 %v2058, %v2057
    %v2074 = vpack.c.bf16 %v2060, %v2059
    %v2075 = vpack.c.bf16 %v2062, %v2061
    %v2076 = vpack.c.bf16 %v2064, %v2063
    %v2077 = vpack.c.bf16 %v2066, %v2065
    %v2078 = vpack.c.bf16 %v2068, %v2067
    %v2079 = vpack.c.bf16 %v1302, %v1301
    %v2080 = vpack.c.bf16 %v1304, %v1303
    %v2081 = vpack.c.bf16 %v1305, %v1302
    %v2082 = vpack.c.bf16 %v1306, %v1304
    %v2083 = vpack.c.bf16 %v1307, %v1305
    %v2084 = vpack.c.bf16 %v1309, %v1308
    %v2085 = vpack.c.bf16 %v1311, %v1310
    %v2086 = vpack.c.bf16 %v1312, %v1309
    %v2087 = vpack.c.bf16 %v1313, %v1311
    %v2088 = vpack.c.bf16 %v1314, %v1312
    %v2090 = vsel %vm259, %v2069, 0
    %2092 = vmatprep.subr.bf16.mxu0 0
    %2093 = vmatpush1.bf16.msra.mxu0 0
    %2094 = vmatprep.subr.bf16.mxu0 0
    %2095 = vmatpush1.bf16.msra.mxu0 0
    %2096 = vmatprep.subr.bf16.mxu0 0
    %2097 = vmatpush1.bf16.msra.mxu0 0
    %2098 = vmatprep.subr.bf16.mxu0 0
    %2099 = vmatpush1.bf16.msra.mxu0 0
    %2100 = vmatprep.subr.bf16.mxu0 0
    %2101 = vmatpush1.bf16.msra.mxu0 0
    %2102 = vmatprep.subr.bf16.mxu0 0
    %2103 = vmatpush1.bf16.msra.mxu0 0
    %2104 = vmatprep.subr.bf16.mxu0 0
    %2105 = vmatpush1.bf16.msra.mxu0 0
    %2106 = vmatprep.subr.bf16.mxu0 0
    %2107 = vmatpush1.bf16.msra.mxu0 %v2079
    %2108 = vmatprep.subr.bf16.mxu0 0
    %2109 = vmatpush2.bf16.msra.mxu0 0
    %2110 = vmatprep.subr.bf16.mxu0 0
    %2111 = vmatpush2.bf16.msra.mxu0 0
    %2112 = vmatprep.subr.bf16.mxu0 0
    %2113 = vmatpush2.bf16.msra.mxu0 0
    %2114 = vmatprep.subr.bf16.mxu0 0
    %2115 = vmatpush2.bf16.msra.mxu0 0
    %2116 = vmatprep.subr.bf16.mxu0 0
    %2117 = vmatpush2.bf16.msra.mxu0 0
    %2118 = vmatprep.subr.bf16.mxu0 0
    %2119 = vmatpush2.bf16.msra.mxu0 0
    %2120 = vmatprep.subr.bf16.mxu0 0
    %2121 = vmatpush2.bf16.msra.mxu0 0
    %2122 = vmatprep.subr.bf16.mxu0 0
    %2123 = vmatpush2.bf16.msra.mxu0 0
    %2124 = vmatprep.mubr.bf16.mxu0 0
    %2125 = vmatmul.mubr.bf16.gmra.mxu0 %v2090
    %v2126 = vpop.f32.mrf.mxu0
    %v2127 = vadd.f32 %v1301, %v2126
    %v2128 = vpop.f32.mrf.mxu0
    %v2129 = vpop.f32.mrf.mxu0
    %v2130 = vadd.f32 %v1302, %v2129
    %v2131 = vpop.f32.mrf.mxu0
    %2132 = vdwg.mxu0
    %v2134 = vsel %vm259, %v2070, 0
    %2136 = vmatprep.subr.bf16.mxu0 0
    %2137 = vmatpush1.bf16.msra.mxu0 0
    %2138 = vmatprep.subr.bf16.mxu0 0
    %2139 = vmatpush1.bf16.msra.mxu0 0
    %2140 = vmatprep.subr.bf16.mxu0 0
    %2141 = vmatpush1.bf16.msra.mxu0 0
    %2142 = vmatprep.subr.bf16.mxu0 0
    %2143 = vmatpush1.bf16.msra.mxu0 0
    %2144 = vmatprep.subr.bf16.mxu0 0
    %2145 = vmatpush1.bf16.msra.mxu0 0
    %2146 = vmatprep.subr.bf16.mxu0 0
    %2147 = vmatpush1.bf16.msra.mxu0 0
    %2148 = vmatprep.subr.bf16.mxu0 0
    %2149 = vmatpush1.bf16.msra.mxu0 0
    %2150 = vmatprep.subr.bf16.mxu0 0
    %2151 = vmatpush1.bf16.msra.mxu0 %v2080
    %2152 = vmatprep.subr.bf16.mxu0 0
    %2153 = vmatpush2.bf16.msra.mxu0 0
    %2154 = vmatprep.subr.bf16.mxu0 0
    %2155 = vmatpush2.bf16.msra.mxu0 0
    %2156 = vmatprep.subr.bf16.mxu0 0
    %2157 = vmatpush2.bf16.msra.mxu0 0
    %2158 = vmatprep.subr.bf16.mxu0 0
    %2159 = vmatpush2.bf16.msra.mxu0 0
    %2160 = vmatprep.subr.bf16.mxu0 0
    %2161 = vmatpush2.bf16.msra.mxu0 0
    %2162 = vmatprep.subr.bf16.mxu0 0
    %2163 = vmatpush2.bf16.msra.mxu0 0
    %2164 = vmatprep.subr.bf16.mxu0 0
    %2165 = vmatpush2.bf16.msra.mxu0 0
    %2166 = vmatprep.subr.bf16.mxu0 0
    %2167 = vmatpush2.bf16.msra.mxu0 0
    %2168 = vmatprep.mubr.bf16.mxu0 0
    %2169 = vmatmul.mubr.bf16.gmra.mxu0 %v2134
    %v2170 = vpop.f32.mrf.mxu0
    %v2171 = vadd.f32 %v1303, %v2170
    %v2172 = vpop.f32.mrf.mxu0
    %v2173 = vpop.f32.mrf.mxu0
    %v2174 = vadd.f32 %v1304, %v2173
    %v2175 = vpop.f32.mrf.mxu0
    %2176 = vdwg.mxu0
    %v2178 = vsel %vm259, %v2071, 0
    %2180 = vmatprep.subr.bf16.mxu0 0
    %2181 = vmatpush1.bf16.msra.mxu0 0
    %2182 = vmatprep.subr.bf16.mxu0 0
    %2183 = vmatpush1.bf16.msra.mxu0 0
    %2184 = vmatprep.subr.bf16.mxu0 0
    %2185 = vmatpush1.bf16.msra.mxu0 0
    %2186 = vmatprep.subr.bf16.mxu0 0
    %2187 = vmatpush1.bf16.msra.mxu0 0
    %2188 = vmatprep.subr.bf16.mxu0 0
    %2189 = vmatpush1.bf16.msra.mxu0 0
    %2190 = vmatprep.subr.bf16.mxu0 0
    %2191 = vmatpush1.bf16.msra.mxu0 0
    %2192 = vmatprep.subr.bf16.mxu0 0
    %2193 = vmatpush1.bf16.msra.mxu0 0
    %2194 = vmatprep.subr.bf16.mxu0 0
    %2195 = vmatpush1.bf16.msra.mxu0 %v2081
    %2196 = vmatprep.subr.bf16.mxu0 0
    %2197 = vmatpush2.bf16.msra.mxu0 0
    %2198 = vmatprep.subr.bf16.mxu0 0
    %2199 = vmatpush2.bf16.msra.mxu0 0
    %2200 = vmatprep.subr.bf16.mxu0 0
    %2201 = vmatpush2.bf16.msra.mxu0 0
    %2202 = vmatprep.subr.bf16.mxu0 0
    %2203 = vmatpush2.bf16.msra.mxu0 0
    %2204 = vmatprep.subr.bf16.mxu0 0
    %2205 = vmatpush2.bf16.msra.mxu0 0
    %2206 = vmatprep.subr.bf16.mxu0 0
    %2207 = vmatpush2.bf16.msra.mxu0 0
    %2208 = vmatprep.subr.bf16.mxu0 0
    %2209 = vmatpush2.bf16.msra.mxu0 0
    %2210 = vmatprep.subr.bf16.mxu0 0
    %2211 = vmatpush2.bf16.msra.mxu0 0
    %2212 = vmatprep.mubr.bf16.mxu0 0
    %2213 = vmatmul.mubr.bf16.gmra.mxu0 %v2178
    %v2214 = vpop.f32.mrf.mxu0
    %v2215 = vadd.f32 %v1302, %v2214
    %v2216 = vpop.f32.mrf.mxu0
    %v2217 = vpop.f32.mrf.mxu0
    %v2218 = vadd.f32 %v1305, %v2217
    %v2219 = vpop.f32.mrf.mxu0
    %2220 = vdwg.mxu0
    %v2222 = vsel %vm259, %v2072, 0
    %2224 = vmatprep.subr.bf16.mxu0 0
    %2225 = vmatpush1.bf16.msra.mxu0 0
    %2226 = vmatprep.subr.bf16.mxu0 0
    %2227 = vmatpush1.bf16.msra.mxu0 0
    %2228 = vmatprep.subr.bf16.mxu0 0
    %2229 = vmatpush1.bf16.msra.mxu0 0
    %2230 = vmatprep.subr.bf16.mxu0 0
    %2231 = vmatpush1.bf16.msra.mxu0 0
    %2232 = vmatprep.subr.bf16.mxu0 0
    %2233 = vmatpush1.bf16.msra.mxu0 0
    %2234 = vmatprep.subr.bf16.mxu0 0
    %2235 = vmatpush1.bf16.msra.mxu0 0
    %2236 = vmatprep.subr.bf16.mxu0 0
    %2237 = vmatpush1.bf16.msra.mxu0 0
    %2238 = vmatprep.subr.bf16.mxu0 0
    %2239 = vmatpush1.bf16.msra.mxu0 %v2082
    %2240 = vmatprep.subr.bf16.mxu0 0
    %2241 = vmatpush2.bf16.msra.mxu0 0
    %2242 = vmatprep.subr.bf16.mxu0 0
    %2243 = vmatpush2.bf16.msra.mxu0 0
    %2244 = vmatprep.subr.bf16.mxu0 0
    %2245 = vmatpush2.bf16.msra.mxu0 0
    %2246 = vmatprep.subr.bf16.mxu0 0
    %2247 = vmatpush2.bf16.msra.mxu0 0
    %2248 = vmatprep.subr.bf16.mxu0 0
    %2249 = vmatpush2.bf16.msra.mxu0 0
    %2250 = vmatprep.subr.bf16.mxu0 0
    %2251 = vmatpush2.bf16.msra.mxu0 0
    %2252 = vmatprep.subr.bf16.mxu0 0
    %2253 = vmatpush2.bf16.msra.mxu0 0
    %2254 = vmatprep.subr.bf16.mxu0 0
    %2255 = vmatpush2.bf16.msra.mxu0 0
    %2256 = vmatprep.mubr.bf16.mxu0 0
    %2257 = vmatmul.mubr.bf16.gmra.mxu0 %v2222
    %v2258 = vpop.f32.mrf.mxu0
    %v2259 = vadd.f32 %v1304, %v2258
    %v2260 = vpop.f32.mrf.mxu0
    %v2261 = vpop.f32.mrf.mxu0
    %v2262 = vadd.f32 %v1306, %v2261
    %v2263 = vpop.f32.mrf.mxu0
    %2264 = vdwg.mxu0
    %v2266 = vsel %vm259, %v2073, 0
    %2268 = vmatprep.subr.bf16.mxu0 0
    %2269 = vmatpush1.bf16.msra.mxu0 0
    %2270 = vmatprep.subr.bf16.mxu0 0
    %2271 = vmatpush1.bf16.msra.mxu0 0
    %2272 = vmatprep.subr.bf16.mxu0 0
    %2273 = vmatpush1.bf16.msra.mxu0 0
    %2274 = vmatprep.subr.bf16.mxu0 0
    %2275 = vmatpush1.bf16.msra.mxu0 0
    %2276 = vmatprep.subr.bf16.mxu0 0
    %2277 = vmatpush1.bf16.msra.mxu0 0
    %2278 = vmatprep.subr.bf16.mxu0 0
    %2279 = vmatpush1.bf16.msra.mxu0 0
    %2280 = vmatprep.subr.bf16.mxu0 0
    %2281 = vmatpush1.bf16.msra.mxu0 0
    %2282 = vmatprep.subr.bf16.mxu0 0
    %2283 = vmatpush1.bf16.msra.mxu0 %v2083
    %2284 = vmatprep.subr.bf16.mxu0 0
    %2285 = vmatpush2.bf16.msra.mxu0 0
    %2286 = vmatprep.subr.bf16.mxu0 0
    %2287 = vmatpush2.bf16.msra.mxu0 0
    %2288 = vmatprep.subr.bf16.mxu0 0
    %2289 = vmatpush2.bf16.msra.mxu0 0
    %2290 = vmatprep.subr.bf16.mxu0 0
    %2291 = vmatpush2.bf16.msra.mxu0 0
    %2292 = vmatprep.subr.bf16.mxu0 0
    %2293 = vmatpush2.bf16.msra.mxu0 0
    %2294 = vmatprep.subr.bf16.mxu0 0
    %2295 = vmatpush2.bf16.msra.mxu0 0
    %2296 = vmatprep.subr.bf16.mxu0 0
    %2297 = vmatpush2.bf16.msra.mxu0 0
    %2298 = vmatprep.subr.bf16.mxu0 0
    %2299 = vmatpush2.bf16.msra.mxu0 0
    %2300 = vmatprep.mubr.bf16.mxu0 0
    %2301 = vmatmul.mubr.bf16.gmra.mxu0 %v2266
    %v2302 = vpop.f32.mrf.mxu0
    %v2303 = vadd.f32 %v1305, %v2302
    %v2304 = vpop.f32.mrf.mxu0
    %v2305 = vpop.f32.mrf.mxu0
    %v2306 = vadd.f32 %v1307, %v2305
    %v2307 = vpop.f32.mrf.mxu0
    %2308 = vdwg.mxu0
    %v2310 = vsel %vm259, %v2074, 0
    %2312 = vmatprep.subr.bf16.mxu0 0
    %2313 = vmatpush1.bf16.msra.mxu0 0
    %2314 = vmatprep.subr.bf16.mxu0 0
    %2315 = vmatpush1.bf16.msra.mxu0 0
    %2316 = vmatprep.subr.bf16.mxu0 0
    %2317 = vmatpush1.bf16.msra.mxu0 0
    %2318 = vmatprep.subr.bf16.mxu0 0
    %2319 = vmatpush1.bf16.msra.mxu0 0
    %2320 = vmatprep.subr.bf16.mxu0 0
    %2321 = vmatpush1.bf16.msra.mxu0 0
    %2322 = vmatprep.subr.bf16.mxu0 0
    %2323 = vmatpush1.bf16.msra.mxu0 0
    %2324 = vmatprep.subr.bf16.mxu0 0
    %2325 = vmatpush1.bf16.msra.mxu0 0
    %2326 = vmatprep.subr.bf16.mxu0 0
    %2327 = vmatpush1.bf16.msra.mxu0 %v2084
    %2328 = vmatprep.subr.bf16.mxu0 0
    %2329 = vmatpush2.bf16.msra.mxu0 0
    %2330 = vmatprep.subr.bf16.mxu0 0
    %2331 = vmatpush2.bf16.msra.mxu0 0
    %2332 = vmatprep.subr.bf16.mxu0 0
    %2333 = vmatpush2.bf16.msra.mxu0 0
    %2334 = vmatprep.subr.bf16.mxu0 0
    %2335 = vmatpush2.bf16.msra.mxu0 0
    %2336 = vmatprep.subr.bf16.mxu0 0
    %2337 = vmatpush2.bf16.msra.mxu0 0
    %2338 = vmatprep.subr.bf16.mxu0 0
    %2339 = vmatpush2.bf16.msra.mxu0 0
    %2340 = vmatprep.subr.bf16.mxu0 0
    %2341 = vmatpush2.bf16.msra.mxu0 0
    %2342 = vmatprep.subr.bf16.mxu0 0
    %2343 = vmatpush2.bf16.msra.mxu0 0
    %2344 = vmatprep.mubr.bf16.mxu0 0
    %2345 = vmatmul.mubr.bf16.gmra.mxu0 %v2310
    %v2346 = vpop.f32.mrf.mxu0
    %v2347 = vadd.f32 %v1308, %v2346
    %v2348 = vpop.f32.mrf.mxu0
    %v2349 = vpop.f32.mrf.mxu0
    %v2350 = vadd.f32 %v1309, %v2349
    %v2351 = vpop.f32.mrf.mxu0
    %2352 = vdwg.mxu0
    %v2354 = vsel %vm259, %v2075, 0
    %2356 = vmatprep.subr.bf16.mxu0 0
    %2357 = vmatpush1.bf16.msra.mxu0 0
    %2358 = vmatprep.subr.bf16.mxu0 0
    %2359 = vmatpush1.bf16.msra.mxu0 0
    %2360 = vmatprep.subr.bf16.mxu0 0
    %2361 = vmatpush1.bf16.msra.mxu0 0
    %2362 = vmatprep.subr.bf16.mxu0 0
    %2363 = vmatpush1.bf16.msra.mxu0 0
    %2364 = vmatprep.subr.bf16.mxu0 0
    %2365 = vmatpush1.bf16.msra.mxu0 0
    %2366 = vmatprep.subr.bf16.mxu0 0
    %2367 = vmatpush1.bf16.msra.mxu0 0
    %2368 = vmatprep.subr.bf16.mxu0 0
    %2369 = vmatpush1.bf16.msra.mxu0 0
    %2370 = vmatprep.subr.bf16.mxu0 0
    %2371 = vmatpush1.bf16.msra.mxu0 %v2085
    %2372 = vmatprep.subr.bf16.mxu0 0
    %2373 = vmatpush2.bf16.msra.mxu0 0
    %2374 = vmatprep.subr.bf16.mxu0 0
    %2375 = vmatpush2.bf16.msra.mxu0 0
    %2376 = vmatprep.subr.bf16.mxu0 0
    %2377 = vmatpush2.bf16.msra.mxu0 0
    %2378 = vmatprep.subr.bf16.mxu0 0
    %2379 = vmatpush2.bf16.msra.mxu0 0
    %2380 = vmatprep.subr.bf16.mxu0 0
    %2381 = vmatpush2.bf16.msra.mxu0 0
    %2382 = vmatprep.subr.bf16.mxu0 0
    %2383 = vmatpush2.bf16.msra.mxu0 0
    %2384 = vmatprep.subr.bf16.mxu0 0
    %2385 = vmatpush2.bf16.msra.mxu0 0
    %2386 = vmatprep.subr.bf16.mxu0 0
    %2387 = vmatpush2.bf16.msra.mxu0 0
    %2388 = vmatprep.mubr.bf16.mxu0 0
    %2389 = vmatmul.mubr.bf16.gmra.mxu0 %v2354
    %v2390 = vpop.f32.mrf.mxu0
    %v2391 = vadd.f32 %v1310, %v2390
    %v2392 = vpop.f32.mrf.mxu0
    %v2393 = vpop.f32.mrf.mxu0
    %v2394 = vadd.f32 %v1311, %v2393
    %v2395 = vpop.f32.mrf.mxu0
    %2396 = vdwg.mxu0
    %v2398 = vsel %vm259, %v2076, 0
    %2400 = vmatprep.subr.bf16.mxu0 0
    %2401 = vmatpush1.bf16.msra.mxu0 0
    %2402 = vmatprep.subr.bf16.mxu0 0
    %2403 = vmatpush1.bf16.msra.mxu0 0
    %2404 = vmatprep.subr.bf16.mxu0 0
    %2405 = vmatpush1.bf16.msra.mxu0 0
    %2406 = vmatprep.subr.bf16.mxu0 0
    %2407 = vmatpush1.bf16.msra.mxu0 0
    %2408 = vmatprep.subr.bf16.mxu0 0
    %2409 = vmatpush1.bf16.msra.mxu0 0
    %2410 = vmatprep.subr.bf16.mxu0 0
    %2411 = vmatpush1.bf16.msra.mxu0 0
    %2412 = vmatprep.subr.bf16.mxu0 0
    %2413 = vmatpush1.bf16.msra.mxu0 0
    %2414 = vmatprep.subr.bf16.mxu0 0
    %2415 = vmatpush1.bf16.msra.mxu0 %v2086
    %2416 = vmatprep.subr.bf16.mxu0 0
    %2417 = vmatpush2.bf16.msra.mxu0 0
    %2418 = vmatprep.subr.bf16.mxu0 0
    %2419 = vmatpush2.bf16.msra.mxu0 0
    %2420 = vmatprep.subr.bf16.mxu0 0
    %2421 = vmatpush2.bf16.msra.mxu0 0
    %2422 = vmatprep.subr.bf16.mxu0 0
    %2423 = vmatpush2.bf16.msra.mxu0 0
    %2424 = vmatprep.subr.bf16.mxu0 0
    %2425 = vmatpush2.bf16.msra.mxu0 0
    %2426 = vmatprep.subr.bf16.mxu0 0
    %2427 = vmatpush2.bf16.msra.mxu0 0
    %2428 = vmatprep.subr.bf16.mxu0 0
    %2429 = vmatpush2.bf16.msra.mxu0 0
    %2430 = vmatprep.subr.bf16.mxu0 0
    %2431 = vmatpush2.bf16.msra.mxu0 0
    %2432 = vmatprep.mubr.bf16.mxu0 0
    %2433 = vmatmul.mubr.bf16.gmra.mxu0 %v2398
    %v2434 = vpop.f32.mrf.mxu0
    %v2435 = vadd.f32 %v1309, %v2434
    %v2436 = vpop.f32.mrf.mxu0
    %v2437 = vpop.f32.mrf.mxu0
    %v2438 = vadd.f32 %v1312, %v2437
    %v2439 = vpop.f32.mrf.mxu0
    %2440 = vdwg.mxu0
    %v2442 = vsel %vm259, %v2077, 0
    %2444 = vmatprep.subr.bf16.mxu0 0
    %2445 = vmatpush1.bf16.msra.mxu0 0
    %2446 = vmatprep.subr.bf16.mxu0 0
    %2447 = vmatpush1.bf16.msra.mxu0 0
    %2448 = vmatprep.subr.bf16.mxu0 0
    %2449 = vmatpush1.bf16.msra.mxu0 0
    %2450 = vmatprep.subr.bf16.mxu0 0
    %2451 = vmatpush1.bf16.msra.mxu0 0
    %2452 = vmatprep.subr.bf16.mxu0 0
    %2453 = vmatpush1.bf16.msra.mxu0 0
    %2454 = vmatprep.subr.bf16.mxu0 0
    %2455 = vmatpush1.bf16.msra.mxu0 0
    %2456 = vmatprep.subr.bf16.mxu0 0
    %2457 = vmatpush1.bf16.msra.mxu0 0
    %2458 = vmatprep.subr.bf16.mxu0 0
    %2459 = vmatpush1.bf16.msra.mxu0 %v2087
    %2460 = vmatprep.subr.bf16.mxu0 0
    %2461 = vmatpush2.bf16.msra.mxu0 0
    %2462 = vmatprep.subr.bf16.mxu0 0
    %2463 = vmatpush2.bf16.msra.mxu0 0
    %2464 = vmatprep.subr.bf16.mxu0 0
    %2465 = vmatpush2.bf16.msra.mxu0 0
    %2466 = vmatprep.subr.bf16.mxu0 0
    %2467 = vmatpush2.bf16.msra.mxu0 0
    %2468 = vmatprep.subr.bf16.mxu0 0
    %2469 = vmatpush2.bf16.msra.mxu0 0
    %2470 = vmatprep.subr.bf16.mxu0 0
    %2471 = vmatpush2.bf16.msra.mxu0 0
    %2472 = vmatprep.subr.bf16.mxu0 0
    %2473 = vmatpush2.bf16.msra.mxu0 0
    %2474 = vmatprep.subr.bf16.mxu0 0
    %2475 = vmatpush2.bf16.msra.mxu0 0
    %2476 = vmatprep.mubr.bf16.mxu0 0
    %2477 = vmatmul.mubr.bf16.gmra.mxu0 %v2442
    %v2478 = vpop.f32.mrf.mxu0
    %v2479 = vadd.f32 %v1311, %v2478
    %v2480 = vpop.f32.mrf.mxu0
    %v2481 = vpop.f32.mrf.mxu0
    %v2482 = vadd.f32 %v1313, %v2481
    %v2483 = vpop.f32.mrf.mxu0
    %2484 = vdwg.mxu0
    %v2486 = vsel %vm259, %v2078, 0
    %2488 = vmatprep.subr.bf16.mxu0 0
    %2489 = vmatpush1.bf16.msra.mxu0 0
    %2490 = vmatprep.subr.bf16.mxu0 0
    %2491 = vmatpush1.bf16.msra.mxu0 0
    %2492 = vmatprep.subr.bf16.mxu0 0
    %2493 = vmatpush1.bf16.msra.mxu0 0
    %2494 = vmatprep.subr.bf16.mxu0 0
    %2495 = vmatpush1.bf16.msra.mxu0 0
    %2496 = vmatprep.subr.bf16.mxu0 0
    %2497 = vmatpush1.bf16.msra.mxu0 0
    %2498 = vmatprep.subr.bf16.mxu0 0
    %2499 = vmatpush1.bf16.msra.mxu0 0
    %2500 = vmatprep.subr.bf16.mxu0 0
    %2501 = vmatpush1.bf16.msra.mxu0 0
    %2502 = vmatprep.subr.bf16.mxu0 0
    %2503 = vmatpush1.bf16.msra.mxu0 %v2088
    %2504 = vmatprep.subr.bf16.mxu0 0
    %2505 = vmatpush2.bf16.msra.mxu0 0
    %2506 = vmatprep.subr.bf16.mxu0 0
    %2507 = vmatpush2.bf16.msra.mxu0 0
    %2508 = vmatprep.subr.bf16.mxu0 0
    %2509 = vmatpush2.bf16.msra.mxu0 0
    %2510 = vmatprep.subr.bf16.mxu0 0
    %2511 = vmatpush2.bf16.msra.mxu0 0
    %2512 = vmatprep.subr.bf16.mxu0 0
    %2513 = vmatpush2.bf16.msra.mxu0 0
    %2514 = vmatprep.subr.bf16.mxu0 0
    %2515 = vmatpush2.bf16.msra.mxu0 0
    %2516 = vmatprep.subr.bf16.mxu0 0
    %2517 = vmatpush2.bf16.msra.mxu0 0
    %2518 = vmatprep.subr.bf16.mxu0 0
    %2519 = vmatpush2.bf16.msra.mxu0 0
    %2520 = vmatprep.mubr.bf16.mxu0 0
    %2521 = vmatmul.mubr.bf16.gmra.mxu0 %v2486
    %v2522 = vpop.f32.mrf.mxu0
    %v2523 = vadd.f32 %v1312, %v2522
    %v2524 = vpop.f32.mrf.mxu0
    %v2525 = vpop.f32.mrf.mxu0
    %v2526 = vadd.f32 %v1314, %v2525
    %v2527 = vpop.f32.mrf.mxu0
    %2528 = vdwg.mxu0
    %v2529 = vpack.c.bf16 %v2130, %v2127
    %v2530 = vpack.c.bf16 %v2174, %v2171
    %v2531 = vpack.c.bf16 %v2218, %v2215
    %v2532 = vpack.c.bf16 %v2262, %v2259
    %v2533 = vpack.c.bf16 %v2306, %v2303
    %v2534 = vpack.c.bf16 %v2350, %v2347
    %v2535 = vpack.c.bf16 %v2394, %v2391
    %v2536 = vpack.c.bf16 %v2438, %v2435
    %v2537 = vpack.c.bf16 %v2482, %v2479
    %v2538 = vpack.c.bf16 %v2526, %v2523
    %v2539 = vld [vmem:[%s16] sm:$0xf]
    %v2540 = vld [vmem:[%s16 + $0x4] sm:$0xf]
    %v2541 = vld [vmem:[%s16 + $0x8] sm:$0xf]
    %v2542 = vld [vmem:[%s16 + $0xc] sm:$0xf]
    %v2543 = vld [vmem:[%s17] sm:$0x1]
    %v2545 = vlaneseq
    %v2546 = vshrl.u32 %v2545, 7
    %v2547 = vsub.s32 0, %v2546
    %v2548 = vrot.slane %v2543, %v2547
    %v2554 = vunpack.c.l.b16 %v2539
    %v2555 = vunpack.c.l.b16 %v2540
    %v2556 = vunpack.c.l.b16 %v2541
    %v2557 = vunpack.c.l.b16 %v2542
    %v2558 = vpack.c.b16 %v2555, %v2554
    %v2559 = vpack.c.b16 %v2557, %v2556
    %v2563 = vsel %vm1129, %v2529, 0
    %v2566 = vsel %vm1129, %v2530, 0
    %v2569 = vsel %vm1129, %v2531, 0
    %v2572 = vsel %vm1129, %v2532, 0
    %v2575 = vsel %vm1129, %v2533, 0
    %v2578 = vsel %vm1129, %v2534, 0
    %v2581 = vsel %vm1129, %v2535, 0
    %v2584 = vsel %vm1129, %v2536, 0
    %v2587 = vsel %vm1129, %v2537, 0
    %v2590 = vsel %vm1129, %v2538, 0
    %2592 = vmatprep.subr.bf16.mxu0 0
    %2593 = vmatpush1.bf16.msra.mxu0 0
    %2594 = vmatprep.subr.bf16.mxu0 0
    %2595 = vmatpush1.bf16.msra.mxu0 0
    %2596 = vmatprep.subr.bf16.mxu0 0
    %2597 = vmatpush1.bf16.msra.mxu0 0
    %2598 = vmatprep.subr.bf16.mxu0 0
    %2599 = vmatpush1.bf16.msra.mxu0 0
    %2600 = vmatprep.subr.bf16.mxu0 0
    %2601 = vmatpush1.bf16.msra.mxu0 0
    %2602 = vmatprep.subr.bf16.mxu0 0
    %2603 = vmatpush1.bf16.msra.mxu0 0
    %2604 = vmatprep.subr.bf16.mxu0 0
    %2605 = vmatpush1.bf16.msra.mxu0 %v2559
    %2606 = vmatprep.subr.bf16.mxu0 0
    %2607 = vmatpush1.bf16.msra.mxu0 %v2558
    %2608 = vmatprep.subr.bf16.mxu0 0
    %2609 = vmatpush2.bf16.msra.mxu0 0
    %2610 = vmatprep.subr.bf16.mxu0 0
    %2611 = vmatpush2.bf16.msra.mxu0 0
    %2612 = vmatprep.subr.bf16.mxu0 0
    %2613 = vmatpush2.bf16.msra.mxu0 0
    %2614 = vmatprep.subr.bf16.mxu0 0
    %2615 = vmatpush2.bf16.msra.mxu0 0
    %2616 = vmatprep.subr.bf16.mxu0 0
    %2617 = vmatpush2.bf16.msra.mxu0 0
    %2618 = vmatprep.subr.bf16.mxu0 0
    %2619 = vmatpush2.bf16.msra.mxu0 0
    %2620 = vmatprep.subr.bf16.mxu0 0
    %2621 = vmatpush2.bf16.msra.mxu0 0
    %2622 = vmatprep.subr.bf16.mxu0 0
    %2623 = vmatpush2.bf16.msra.mxu0 0
    %2624 = vmatprep.mubr.bf16.mxu0 0
    %2625 = vmatmul.mubr.bf16.gmra.mxu0 %v2563
    %v2626 = vpop.f32.mrf.mxu0
    %v2627 = vadd.f32 %v2548, %v2626
    %v2628 = vpop.f32.mrf.mxu0
    %v2629 = vpop.f32.mrf.mxu0
    %v2630 = vadd.f32 %v2548, %v2629
    %v2631 = vpop.f32.mrf.mxu0
    %2632 = vmatprep.mubr.bf16.mxu0 0
    %2633 = vmatmul.mubr.bf16.gmra.mxu0 %v2566
    %v2634 = vpop.f32.mrf.mxu0
    %v2635 = vadd.f32 %v2548, %v2634
    %v2636 = vpop.f32.mrf.mxu0
    %v2637 = vpop.f32.mrf.mxu0
    %v2638 = vadd.f32 %v2548, %v2637
    %v2639 = vpop.f32.mrf.mxu0
    %2640 = vmatprep.mubr.bf16.mxu0 0
    %2641 = vmatmul.mubr.bf16.gmra.mxu0 %v2569
    %v2642 = vpop.f32.mrf.mxu0
    %v2643 = vadd.f32 %v2548, %v2642
    %v2644 = vpop.f32.mrf.mxu0
    %v2645 = vpop.f32.mrf.mxu0
    %v2646 = vadd.f32 %v2548, %v2645
    %v2647 = vpop.f32.mrf.mxu0
    %2648 = vmatprep.mubr.bf16.mxu0 0
    %2649 = vmatmul.mubr.bf16.gmra.mxu0 %v2572
    %v2650 = vpop.f32.mrf.mxu0
    %v2651 = vadd.f32 %v2548, %v2650
    %v2652 = vpop.f32.mrf.mxu0
    %v2653 = vpop.f32.mrf.mxu0
    %v2654 = vadd.f32 %v2548, %v2653
    %v2655 = vpop.f32.mrf.mxu0
    %2656 = vmatprep.mubr.bf16.mxu0 0
    %2657 = vmatmul.mubr.bf16.gmra.mxu0 %v2575
    %v2658 = vpop.f32.mrf.mxu0
    %v2659 = vadd.f32 %v2548, %v2658
    %v2660 = vpop.f32.mrf.mxu0
    %v2661 = vpop.f32.mrf.mxu0
    %v2662 = vadd.f32 %v2548, %v2661
    %v2663 = vpop.f32.mrf.mxu0
    %2664 = vmatprep.mubr.bf16.mxu0 0
    %2665 = vmatmul.mubr.bf16.gmra.mxu0 %v2578
    %v2666 = vpop.f32.mrf.mxu0
    %v2667 = vadd.f32 %v2548, %v2666
    %v2668 = vpop.f32.mrf.mxu0
    %v2669 = vpop.f32.mrf.mxu0
    %v2670 = vadd.f32 %v2548, %v2669
    %v2671 = vpop.f32.mrf.mxu0
    %2672 = vmatprep.mubr.bf16.mxu0 0
    %2673 = vmatmul.mubr.bf16.gmra.mxu0 %v2581
    %v2674 = vpop.f32.mrf.mxu0
    %v2675 = vadd.f32 %v2548, %v2674
    %v2676 = vpop.f32.mrf.mxu0
    %v2677 = vpop.f32.mrf.mxu0
    %v2678 = vadd.f32 %v2548, %v2677
    %v2679 = vpop.f32.mrf.mxu0
    %2680 = vmatprep.mubr.bf16.mxu0 0
    %2681 = vmatmul.mubr.bf16.gmra.mxu0 %v2584
    %v2682 = vpop.f32.mrf.mxu0
    %v2683 = vadd.f32 %v2548, %v2682
    %v2684 = vpop.f32.mrf.mxu0
    %v2685 = vpop.f32.mrf.mxu0
    %v2686 = vadd.f32 %v2548, %v2685
    %v2687 = vpop.f32.mrf.mxu0
    %2688 = vmatprep.mubr.bf16.mxu0 0
    %2689 = vmatmul.mubr.bf16.gmra.mxu0 %v2587
    %v2690 = vpop.f32.mrf.mxu0
    %v2691 = vadd.f32 %v2548, %v2690
    %v2692 = vpop.f32.mrf.mxu0
    %v2693 = vpop.f32.mrf.mxu0
    %v2694 = vadd.f32 %v2548, %v2693
    %v2695 = vpop.f32.mrf.mxu0
    %2696 = vmatprep.mubr.bf16.mxu0 0
    %2697 = vmatmul.mubr.bf16.gmra.mxu0 %v2590
    %v2698 = vpop.f32.mrf.mxu0
    %v2699 = vadd.f32 %v2548, %v2698
    %v2700 = vpop.f32.mrf.mxu0
    %v2701 = vpop.f32.mrf.mxu0
    %v2702 = vadd.f32 %v2548, %v2701
    %v2703 = vpop.f32.mrf.mxu0
    %2704 = vdwg.mxu0
    %vm2705 = vcmp.gt.f32.partialorder %v2627, 0.0
    %vm2706 = vcmp.gt.f32.partialorder %v2630, 0.0
    %vm2707 = vcmp.gt.f32.partialorder %v2635, 0.0
    %vm2708 = vcmp.gt.f32.partialorder %v2638, 0.0
    %vm2709 = vcmp.gt.f32.partialorder %v2643, 0.0
    %vm2710 = vcmp.gt.f32.partialorder %v2646, 0.0
    %vm2711 = vcmp.gt.f32.partialorder %v2651, 0.0
    %vm2712 = vcmp.gt.f32.partialorder %v2654, 0.0
    %vm2713 = vcmp.gt.f32.partialorder %v2659, 0.0
    %vm2714 = vcmp.gt.f32.partialorder %v2662, 0.0
    %vm2715 = vcmp.gt.f32.partialorder %v2667, 0.0
    %vm2716 = vcmp.gt.f32.partialorder %v2670, 0.0
    %vm2717 = vcmp.gt.f32.partialorder %v2675, 0.0
    %vm2718 = vcmp.gt.f32.partialorder %v2678, 0.0
    %vm2719 = vcmp.gt.f32.partialorder %v2683, 0.0
    %vm2720 = vcmp.gt.f32.partialorder %v2686, 0.0
    %vm2721 = vcmp.gt.f32.partialorder %v2691, 0.0
    %vm2722 = vcmp.gt.f32.partialorder %v2694, 0.0
    %vm2723 = vcmp.gt.f32.partialorder %v2699, 0.0
    %vm2724 = vcmp.gt.f32.partialorder %v2702, 0.0
    %v2725 = vmul.f32 %v2627, 0.01
    %v2726 = vmul.f32 %v2630, 0.01
    %v2727 = vmul.f32 %v2635, 0.01
    %v2728 = vmul.f32 %v2638, 0.01
    %v2729 = vmul.f32 %v2643, 0.01
    %v2730 = vmul.f32 %v2646, 0.01
    %v2731 = vmul.f32 %v2651, 0.01
    %v2732 = vmul.f32 %v2654, 0.01
    %v2733 = vmul.f32 %v2659, 0.01
    %v2734 = vmul.f32 %v2662, 0.01
    %v2735 = vmul.f32 %v2667, 0.01
    %v2736 = vmul.f32 %v2670, 0.01
    %v2737 = vmul.f32 %v2675, 0.01
    %v2738 = vmul.f32 %v2678, 0.01
    %v2739 = vmul.f32 %v2683, 0.01
    %v2740 = vmul.f32 %v2686, 0.01
    %v2741 = vmul.f32 %v2691, 0.01
    %v2742 = vmul.f32 %v2694, 0.01
    %v2743 = vmul.f32 %v2699, 0.01
    %v2744 = vmul.f32 %v2702, 0.01
    %v2745 = vsel %vm2705, %v2627, %v2725
    %v2746 = vsel %vm2706, %v2630, %v2726
    %v2747 = vsel %vm2707, %v2635, %v2727
    %v2748 = vsel %vm2708, %v2638, %v2728
    %v2749 = vsel %vm2709, %v2643, %v2729
    %v2750 = vsel %vm2710, %v2646, %v2730
    %v2751 = vsel %vm2711, %v2651, %v2731
    %v2752 = vsel %vm2712, %v2654, %v2732
    %v2753 = vsel %vm2713, %v2659, %v2733
    %v2754 = vsel %vm2714, %v2662, %v2734
    %v2755 = vsel %vm2715, %v2667, %v2735
    %v2756 = vsel %vm2716, %v2670, %v2736
    %v2757 = vsel %vm2717, %v2675, %v2737
    %v2758 = vsel %vm2718, %v2678, %v2738
    %v2759 = vsel %vm2719, %v2683, %v2739
    %v2760 = vsel %vm2720, %v2686, %v2740
    %v2761 = vsel %vm2721, %v2691, %v2741
    %v2762 = vsel %vm2722, %v2694, %v2742
    %v2763 = vsel %vm2723, %v2699, %v2743
    %v2764 = vsel %vm2724, %v2702, %v2744
    %v2775 = vrot.slane %v2745, 4
    %v2776 = vrot.slane %v2747, 4
    %v2777 = vrot.slane %v2749, 4
    %v2778 = vrot.slane %v2751, 4
    %v2779 = vrot.slane %v2753, 4
    %v2780 = vrot.slane %v2755, 4
    %v2781 = vrot.slane %v2757, 4
    %v2782 = vrot.slane %v2759, 4
    %v2783 = vrot.slane %v2761, 4
    %v2784 = vrot.slane %v2763, 4
    %v2795 = vadd.f32 %v2745, %v2775
    %v2796 = vadd.f32 %v2747, %v2776
    %v2797 = vadd.f32 %v2749, %v2777
    %v2798 = vadd.f32 %v2751, %v2778
    %v2799 = vadd.f32 %v2753, %v2779
    %v2800 = vadd.f32 %v2755, %v2780
    %v2801 = vadd.f32 %v2757, %v2781
    %v2802 = vadd.f32 %v2759, %v2782
    %v2803 = vadd.f32 %v2761, %v2783
    %v2804 = vadd.f32 %v2763, %v2784
    %v2805 = vadd.f32 %v2795, %v2746
    %v2806 = vadd.f32 %v2796, %v2748
    %v2807 = vadd.f32 %v2797, %v2750
    %v2808 = vadd.f32 %v2798, %v2752
    %v2809 = vadd.f32 %v2799, %v2754
    %v2810 = vadd.f32 %v2800, %v2756
    %v2811 = vadd.f32 %v2801, %v2758
    %v2812 = vadd.f32 %v2802, %v2760
    %v2813 = vadd.f32 %v2803, %v2762
    %v2814 = vadd.f32 %v2804, %v2764
    %v2825 = vrot.slane %v2746, 4
    %v2826 = vrot.slane %v2748, 4
    %v2827 = vrot.slane %v2750, 4
    %v2828 = vrot.slane %v2752, 4
    %v2829 = vrot.slane %v2754, 4
    %v2830 = vrot.slane %v2756, 4
    %v2831 = vrot.slane %v2758, 4
    %v2832 = vrot.slane %v2760, 4
    %v2833 = vrot.slane %v2762, 4
    %v2834 = vrot.slane %v2764, 4
    %v2845 = vadd.f32 %v2805, %v2825
    %v2846 = vadd.f32 %v2806, %v2826
    %v2847 = vadd.f32 %v2807, %v2827
    %v2848 = vadd.f32 %v2808, %v2828
    %v2849 = vadd.f32 %v2809, %v2829
    %v2850 = vadd.f32 %v2810, %v2830
    %v2851 = vadd.f32 %v2811, %v2831
    %v2852 = vadd.f32 %v2812, %v2832
    %v2853 = vadd.f32 %v2813, %v2833
    %v2854 = vadd.f32 %v2814, %v2834
    %v2855 = vmul.f32 %v2845, 0.25
    %v2856 = vmul.f32 %v2846, 0.25
    %v2857 = vmul.f32 %v2847, 0.25
    %v2858 = vmul.f32 %v2848, 0.25
    %v2859 = vmul.f32 %v2849, 0.25
    %v2860 = vmul.f32 %v2850, 0.25
    %v2861 = vmul.f32 %v2851, 0.25
    %v2862 = vmul.f32 %v2852, 0.25
    %v2863 = vmul.f32 %v2853, 0.25
    %v2864 = vmul.f32 %v2854, 0.25
    %2866 = vrot.lane.b32.xlu0 %v2856, 16
    %v2867 = vpop.permute.xlu0 %2866
    %2870 = vrot.lane.b32.xlu0 %v2857, 32
    %v2871 = vpop.permute.xlu0 %2870
    %2874 = vrot.lane.b32.xlu0 %v2858, 48
    %v2875 = vpop.permute.xlu0 %2874
    %2878 = vrot.lane.b32.xlu0 %v2859, 64
    %v2879 = vpop.permute.xlu0 %2878
    %v2881 = vsel %vm259, %v2855, %v2867
    %v2882 = vsel %vm1129, %v2881, %v2871
    %vm2883 = vcmask 392192
    %v2884 = vsel %vm2883, %v2882, %v2875
    %vm2885 = vcmask 523264
    %v2886 = vsel %vm2885, %v2884, %v2879
    %2888 = vrot.lane.b32.xlu0 %v2861, 16
    %v2889 = vpop.permute.xlu0 %2888
    %2892 = vrot.lane.b32.xlu0 %v2862, 32
    %v2893 = vpop.permute.xlu0 %2892
    %2896 = vrot.lane.b32.xlu0 %v2863, 48
    %v2897 = vpop.permute.xlu0 %2896
    %2900 = vrot.lane.b32.xlu0 %v2864, 64
    %v2901 = vpop.permute.xlu0 %2900
    %v2903 = vsel %vm259, %v2860, %v2889
    %v2904 = vsel %vm1129, %v2903, %v2893
    %v2905 = vsel %vm2883, %v2904, %v2897
    %v2906 = vsel %vm2885, %v2905, %v2901
    %v2908 = vrot.slane %v2906, 4
    %v2910 = vsel %vm1070, %v2886, %v2908
    %v2911 = vpack.c.bf16 %v2910, %v2910
    %v2912 = vld [vmem:[#allocation20] sm:$0xf]
    %v2913 = vld [vmem:[#allocation20 + $0x4] sm:$0xf]
    %v2914 = vld [vmem:[#allocation20 + $0x8] sm:$0xf]
    %v2915 = vld [vmem:[#allocation20 + $0xc] sm:$0xf]
    %v2916 = vld [vmem:[#allocation20 + $0x10] sm:$0xf]
    %v2917 = vld [vmem:[#allocation20 + $0x14] sm:$0xf]
    %v2918 = vld [vmem:[#allocation20 + $0x18] sm:$0xf]
    %v2919 = vld [vmem:[#allocation20 + $0x1c] sm:$0xf]
    %v2920 = vld [vmem:[#allocation20 + $0x20] sm:$0xf]
    %v2921 = vld [vmem:[#allocation20 + $0x24] sm:$0xf]
    %v2922 = vld [vmem:[%s19] sm:$0x1]
    %v2924 = vlaneseq
    %v2925 = vshrl.u32 %v2924, 7
    %v2926 = vsub.s32 0, %v2925
    %v2927 = vrot.slane %v2922, %v2926
    %v2939 = vunpack.c.l.b16 %v2912
    %v2940 = vunpack.c.l.b16 %v2913
    %v2941 = vunpack.c.l.b16 %v2914
    %v2942 = vunpack.c.l.b16 %v2915
    %v2943 = vunpack.c.l.b16 %v2916
    %v2944 = vunpack.c.l.b16 %v2917
    %v2945 = vunpack.c.l.b16 %v2918
    %v2946 = vunpack.c.l.b16 %v2919
    %v2947 = vunpack.c.l.b16 %v2920
    %v2948 = vunpack.c.l.b16 %v2921
    %v2949 = vpack.c.b16 %v2940, %v2939
    %v2950 = vpack.c.b16 %v2942, %v2941
    %v2951 = vpack.c.b16 %v2944, %v2943
    %v2952 = vpack.c.b16 %v2946, %v2945
    %v2953 = vpack.c.b16 %v2948, %v2947
    %vm2959 = vcmask 654336
    %v2961 = vsel %vm2959, %v2911, 0
    %2963 = vmatprep.subr.bf16.mxu0 0
    %2964 = vmatpush1.bf16.msra.mxu0 0
    %2965 = vmatprep.subr.bf16.mxu0 0
    %2966 = vmatpush1.bf16.msra.mxu0 0
    %2967 = vmatprep.subr.bf16.mxu0 0
    %2968 = vmatpush1.bf16.msra.mxu0 0
    %2969 = vmatprep.subr.bf16.mxu0 0
    %2970 = vmatpush1.bf16.msra.mxu0 %v2953
    %2971 = vmatprep.subr.bf16.mxu0 0
    %2972 = vmatpush1.bf16.msra.mxu0 %v2952
    %2973 = vmatprep.subr.bf16.mxu0 0
    %2974 = vmatpush1.bf16.msra.mxu0 %v2951
    %2975 = vmatprep.subr.bf16.mxu0 0
    %2976 = vmatpush1.bf16.msra.mxu0 %v2950
    %2977 = vmatprep.subr.bf16.mxu0 0
    %2978 = vmatpush1.bf16.msra.mxu0 %v2949
    %2979 = vmatprep.subr.bf16.mxu0 0
    %2980 = vmatpush2.bf16.msra.mxu0 0
    %2981 = vmatprep.subr.bf16.mxu0 0
    %2982 = vmatpush2.bf16.msra.mxu0 0
    %2983 = vmatprep.subr.bf16.mxu0 0
    %2984 = vmatpush2.bf16.msra.mxu0 0
    %2985 = vmatprep.subr.bf16.mxu0 0
    %2986 = vmatpush2.bf16.msra.mxu0 0
    %2987 = vmatprep.subr.bf16.mxu0 0
    %2988 = vmatpush2.bf16.msra.mxu0 0
    %2989 = vmatprep.subr.bf16.mxu0 0
    %2990 = vmatpush2.bf16.msra.mxu0 0
    %2991 = vmatprep.subr.bf16.mxu0 0
    %2992 = vmatpush2.bf16.msra.mxu0 0
    %2993 = vmatprep.subr.bf16.mxu0 0
    %2994 = vmatpush2.bf16.msra.mxu0 0
    %2995 = vmatprep.mubr.bf16.mxu0 0
    %2996 = vmatmul.mubr.bf16.gmra.mxu0 %v2961
    %v2997 = vpop.f32.mrf.mxu0
    %v2998 = vadd.f32 %v2927, %v2997
    %v2999 = vpop.f32.mrf.mxu0
    %v3000 = vpop.f32.mrf.mxu0
    %v3001 = vpop.f32.mrf.mxu0
    %3002 = vdwg.mxu0
    %v3003 = vmax.f32 %v2998, 0.0
    %v3004 = vpack.c.bf16 %v3003, %v3003
    %v3005 = vld [vmem:[%s20] sm:$0x3]
    %v3006 = vld [vmem:[%s21] sm:$0xf]
    %3008 = vset.pattern.permute.xlu0 0
    %3009 = vperm.xlu0 %3008, %v3006
    %v3010 = vpop.permute.xlu0 %3009
    %3012 = vmatprep.subr.bf16.mxu0 0
    %3013 = vmatpush1.bf16.xpose.msra.mxu0 0
    %3014 = vmatprep.subr.bf16.mxu0 0
    %3015 = vmatpush1.bf16.xpose.msra.mxu0 0
    %3016 = vmatprep.subr.bf16.mxu0 0
    %3017 = vmatpush1.bf16.xpose.msra.mxu0 0
    %3018 = vmatprep.subr.bf16.mxu0 0
    %3019 = vmatpush1.bf16.xpose.msra.mxu0 0
    %3020 = vmatprep.subr.bf16.mxu0 0
    %3021 = vmatpush1.bf16.xpose.msra.mxu0 0
    %3022 = vmatprep.subr.bf16.mxu0 0
    %3023 = vmatpush1.bf16.xpose.msra.mxu0 0
    %3024 = vmatprep.subr.bf16.mxu0 0
    %3025 = vmatpush1.bf16.xpose.msra.mxu0 0
    %3026 = vmatprep.subr.bf16.mxu0 0
    %3027 = vmatpush1.bf16.xpose.msra.mxu0 %v3004
    %3028 = vmatprep.subr.bf16.mxu0 0
    %3029 = vmatpush2.bf16.xpose.msra.mxu0 0
    %3030 = vmatprep.subr.bf16.mxu0 0
    %3031 = vmatpush2.bf16.xpose.msra.mxu0 0
    %3032 = vmatprep.subr.bf16.mxu0 0
    %3033 = vmatpush2.bf16.xpose.msra.mxu0 0
    %3034 = vmatprep.subr.bf16.mxu0 0
    %3035 = vmatpush2.bf16.xpose.msra.mxu0 0
    %3036 = vmatprep.subr.bf16.mxu0 0
    %3037 = vmatpush2.bf16.xpose.msra.mxu0 0
    %3038 = vmatprep.subr.bf16.mxu0 0
    %3039 = vmatpush2.bf16.xpose.msra.mxu0 0
    %3040 = vmatprep.subr.bf16.mxu0 0
    %3041 = vmatpush2.bf16.xpose.msra.mxu0 0
    %3042 = vmatprep.subr.bf16.mxu0 0
    %3043 = vmatpush2.bf16.xpose.msra.mxu0 0
    %3044 = vmatprep.mubr.bf16.mxu0 0
    %3045 = vmatmul.mubr.bf16.gmra.mxu0 %v3005
    %v3046 = vpop.f32.mrf.mxu0
    %v3047 = vadd.f32 %v3010, %v3046
    %v3048 = vpop.f32.mrf.mxu0
    %v3049 = vpop.f32.mrf.mxu0
    %v3050 = vpop.f32.mrf.mxu0
    %3051 = vdwg.mxu0
    %vm3052 = vcmask 27648
    %3053 = vst.msk [vmem:[#allocation22] sm:$0xf] %vm3052, %v3047
    %v3054 = vld [vmem:[%s20] sm:$0x3]
    %v3055 = vld [vmem:[%s21] sm:$0xf]
    %3057 = vset.pattern.permute.xlu0 0
    %3058 = vperm.xlu0 %3057, %v3055
    %v3059 = vpop.permute.xlu0 %3058
    %v3062 = vrot.slane %v3004, 2
    %3064 = vmatprep.subr.bf16.mxu0 0
    %3065 = vmatpush1.bf16.xpose.msra.mxu0 0
    %3066 = vmatprep.subr.bf16.mxu0 0
    %3067 = vmatpush1.bf16.xpose.msra.mxu0 0
    %3068 = vmatprep.subr.bf16.mxu0 0
    %3069 = vmatpush1.bf16.xpose.msra.mxu0 0
    %3070 = vmatprep.subr.bf16.mxu0 0
    %3071 = vmatpush1.bf16.xpose.msra.mxu0 0
    %3072 = vmatprep.subr.bf16.mxu0 0
    %3073 = vmatpush1.bf16.xpose.msra.mxu0 0
    %3074 = vmatprep.subr.bf16.mxu0 0
    %3075 = vmatpush1.bf16.xpose.msra.mxu0 0
    %3076 = vmatprep.subr.bf16.mxu0 0
    %3077 = vmatpush1.bf16.xpose.msra.mxu0 0
    %3078 = vmatprep.subr.bf16.mxu0 0
    %3079 = vmatpush1.bf16.xpose.msra.mxu0 %v3062
    %3080 = vmatprep.subr.bf16.mxu0 0
    %3081 = vmatpush2.bf16.xpose.msra.mxu0 0
    %3082 = vmatprep.subr.bf16.mxu0 0
    %3083 = vmatpush2.bf16.xpose.msra.mxu0 0
    %3084 = vmatprep.subr.bf16.mxu0 0
    %3085 = vmatpush2.bf16.xpose.msra.mxu0 0
    %3086 = vmatprep.subr.bf16.mxu0 0
    %3087 = vmatpush2.bf16.xpose.msra.mxu0 0
    %3088 = vmatprep.subr.bf16.mxu0 0
    %3089 = vmatpush2.bf16.xpose.msra.mxu0 0
    %3090 = vmatprep.subr.bf16.mxu0 0
    %3091 = vmatpush2.bf16.xpose.msra.mxu0 0
    %3092 = vmatprep.subr.bf16.mxu0 0
    %3093 = vmatpush2.bf16.xpose.msra.mxu0 0
    %3094 = vmatprep.subr.bf16.mxu0 0
    %3095 = vmatpush2.bf16.xpose.msra.mxu0 0
    %3096 = vmatprep.mubr.bf16.mxu0 0
    %3097 = vmatmul.mubr.bf16.gmra.mxu0 %v3054
    %v3098 = vpop.f32.mrf.mxu0
    %v3099 = vadd.f32 %v3059, %v3098
    %v3100 = vpop.f32.mrf.mxu0
    %v3101 = vpop.f32.mrf.mxu0
    %v3102 = vpop.f32.mrf.mxu0
    %3103 = vdwg.mxu0
    %s3104 = scalar_lea.vmem [#allocation22], 4
    %3105 = vst.msk [vmem:[%s3104] sm:$0xf] %vm3052, %v3099
    // Predicated region
    $region138: #{forward.1} parent=1 // pred_check
      _
    $region139: #{forward.1} parent=1 // pred_check_branch
      %3107 = sbr.rel (0) target = $region141
    $region140: #{forward.1} parent=1 // pred_region
      %s3109 = ssub.s32 128, 128
      %3110 = vsyncadd [#allocation4], %s3109
      %s3111 = sshll.u32 [#allocation22], 4
      %s3112 = int_to_ptr.vmem [resolvable:$true] %s3111
      %3117 = dma.vmem_to_hbm [thread:$0]  %s3112, 128, %s22, [#allocation4], 64, 64, 4
    $region141: #{forward.1} parent=1 // pred_fallthru
      _
    // Predicated region
    $region142: #{forward.1} parent=1 // pred_check
      _
    $region143: #{forward.1} parent=1 // pred_check_branch
      %3119 = sbr.rel (0) target = $region145
    $region144: #{forward.1} parent=1 // pred_region
      %3120 = dma.done [#allocation4], 128
    $region145: #{forward.1} parent=1 // pred_fallthru
      _
    %3121 = vsyncpa [#allocation3], 1
    %3122 = vsyncpa [#allocation6], 1
    %3123 = vsyncpa [#allocation9], 1
    %3124 = vsyncpa [#allocation12], 1
    %3125 = vsyncpa [#allocation15], 1
    %3126 = vsyncpa [#allocation18], 1
    %3127 = vsyncpa [#allocation21], 1
    %3128 = vsyncpa [#allocation4], 1

</llo_original>
